<compile_context>
chip_gen: v7x
topology: tpu7x:2x2x1
jax: 0.10.0
libtpu: 0.0.40
codegen_flags: <defaults>
</compile_context>

<pallas_src>
import functools

import jax
import jax.numpy as jnp
from jax.experimental import pallas as pl
from jax.experimental.pallas import tpu as pltpu

KH, KW = 3, 3
CIN, COUT = 3, 6


def _conv3x3_kernel(x_ref, w_ref, b_ref, o_ref, *, width):
    # x_ref: (N, CIN, HWP) f32 VMEM  - each channel's rows flattened into the
    #                                  lane dim (row stride = width), zero-
    #                                  padded to HWP (multiple of 128 lanes).
    # w_ref: (COUT*CIN*KH*KW,) f32 SMEM (row-major OIHW flatten)
    # b_ref: (COUT,)           f32 SMEM
    # o_ref: (N, COUT, HW)     VMEM  - conv output for (y, x) lives at y*width+x
    n, cin, _ = x_ref.shape
    _, cout, hw = o_ref.shape

    accs = [jnp.zeros((n, hw), jnp.float32) for _ in range(cout)]

    for ci in range(cin):
        xs = x_ref[:, ci, :].astype(jnp.float32)          # (N, HWP), lane-dense
        for i in range(KH):
            for j in range(KW):
                d = i * width + j                         # flat tap shift
                tap = xs[:, d:d + hw]                     # static lane shift
                for co in range(cout):
                    wv = w_ref[((co * cin + ci) * KH + i) * KW + j]
                    accs[co] = accs[co] + wv * tap

    for co in range(cout):
        o_ref[:, co, :] = (accs[co] + b_ref[co]).astype(o_ref.dtype)


@jax.jit
def conv2d_pallas(x_nchw, weight_oihw, bias):
    """Equivalent of nn.Conv2d(3, 6, kernel_size=3, stride=1, padding=0)(x)."""
    n, cin, h, w = x_nchw.shape
    assert cin == CIN
    assert weight_oihw.shape == (COUT, CIN, KH, KW)
    cout = weight_oihw.shape[0]
    oh, ow = h - KH + 1, w - KW + 1          # stride=1, padding=0 (VALID)
    hw = h * w

    # Flatten each channel's rows into the lane dim; pad so every tap shift
    # (max (KH-1)*w + (KW-1)) stays in bounds and the DMA is 128-lane aligned.
    max_shift = (KH - 1) * w + (KW - 1)
    hwp = ((hw + max_shift + 127) // 128) * 128
    x_flat = jnp.pad(x_nchw.reshape(n, cin, hw),
                     ((0, 0), (0, 0), (0, hwp - hw)))
    w_flat = weight_oihw.reshape(-1)         # contiguous OIHW flatten (free)

    out_flat = pl.pallas_call(
        functools.partial(_conv3x3_kernel, width=w),
        out_shape=jax.ShapeDtypeStruct((n, cout, hw), x_nchw.dtype),
        in_specs=[
            pl.BlockSpec(memory_space=pltpu.MemorySpace.VMEM),   # x (full batch)
            pl.BlockSpec(memory_space=pltpu.MemorySpace.SMEM),   # weights
            pl.BlockSpec(memory_space=pltpu.MemorySpace.SMEM),   # bias
        ],
        out_specs=pl.BlockSpec(memory_space=pltpu.MemorySpace.VMEM),
    )(x_flat, w_flat, bias)

    # Free metadata reshape + tiny border crop back to NCHW (n, cout, oh, ow).
    return out_flat.reshape(n, cout, h, w)[:, :, :oh, :ow]


def _reference_conv(x_nchw, weight_oihw, bias):
    out = jax.lax.conv_general_dilated(
        x_nchw, weight_oihw,
        window_strides=(1, 1), padding="VALID",
        dimension_numbers=("NCHW", "OIHW", "NCHW"))
    return out + bias.reshape(1, -1, 1, 1)


if __name__ == "__main__":
    key = jax.random.PRNGKey(0)
    kx, kw_, kb = jax.random.split(key, 3)

    # deterministic synthetic parameters (PyTorch-like fan-in scaling)
    fan_in = CIN * KH * KW
    bound = 1.0 / (fan_in ** 0.5)
    weight = jax.random.uniform(kw_, (COUT, CIN, KH, KW), jnp.float32,
                                minval=-bound, maxval=bound)
    bias = jax.random.uniform(kb, (COUT,), jnp.float32,
                              minval=-bound, maxval=bound)

    # small NCHW input consistent with Conv2d(in_channels=3, ...)
    x = jax.random.normal(kx, (2, 3, 16, 16), jnp.float32)

    out = jax.block_until_ready(conv2d_pallas(x, weight, bias))
    ref = _reference_conv(x, weight, bias)

    assert out.shape == (2, 6, 14, 14), out.shape
    assert jnp.allclose(out, ref, atol=1e-5, rtol=1e-5), "mismatch vs reference"

    print("KERNEL_OK")
</pallas_src>

<mosaic_0001>
module attributes {stable_mosaic.version = 11 : i64} {
  func.func @_conv3x3_kernel(%arg0: memref<2x3x384xf32, #tpu.memory_space<vmem>>, %arg1: memref<162xf32, #tpu.memory_space<smem>>, %arg2: memref<6xf32, #tpu.memory_space<smem>>, %arg3: memref<2x6x256xf32, #tpu.memory_space<vmem>>) attributes {dimension_semantics = [], scalar_prefetch = 0 : i64, scratch_operands = 0 : i64, tpu.core_type = #tpu.core_type<tc>} {
    %cst = arith.constant 0.000000e+00 : f32
    %0 = vector.broadcast %cst : f32 to vector<2x256xf32>
    %cst_0 = arith.constant 0.000000e+00 : f32
    %1 = vector.broadcast %cst_0 : f32 to vector<2x256xf32>
    %cst_1 = arith.constant 0.000000e+00 : f32
    %2 = vector.broadcast %cst_1 : f32 to vector<2x256xf32>
    %cst_2 = arith.constant 0.000000e+00 : f32
    %3 = vector.broadcast %cst_2 : f32 to vector<2x256xf32>
    %cst_3 = arith.constant 0.000000e+00 : f32
    %4 = vector.broadcast %cst_3 : f32 to vector<2x256xf32>
    %cst_4 = arith.constant 0.000000e+00 : f32
    %5 = vector.broadcast %cst_4 : f32 to vector<2x256xf32>
    %c0 = arith.constant 0 : index
    %c0_5 = arith.constant 0 : index
    %c0_6 = arith.constant 0 : index
    %6 = vector.load %arg0[%c0, %c0_5, %c0_6] : memref<2x3x384xf32, #tpu.memory_space<vmem>>, vector<2x1x384xf32>
    %7 = vector.shape_cast %6 : vector<2x1x384xf32> to vector<2x384xf32>
    %8 = vector.extract_strided_slice %7 {offsets = [0, 0], sizes = [2, 256], strides = [1, 1]} : vector<2x384xf32> to vector<2x256xf32>
    %c0_7 = arith.constant 0 : index
    %9 = memref.load %arg1[%c0_7] : memref<162xf32, #tpu.memory_space<smem>>
    %10 = vector.broadcast %9 : f32 to vector<2x256xf32>
    %11 = arith.mulf %10, %8 : vector<2x256xf32>
    %12 = arith.addf %0, %11 : vector<2x256xf32>
    %c27 = arith.constant 27 : index
    %13 = memref.load %arg1[%c27] : memref<162xf32, #tpu.memory_space<smem>>
    %14 = vector.broadcast %13 : f32 to vector<2x256xf32>
    %15 = arith.mulf %14, %8 : vector<2x256xf32>
    %16 = arith.addf %1, %15 : vector<2x256xf32>
    %c54 = arith.constant 54 : index
    %17 = memref.load %arg1[%c54] : memref<162xf32, #tpu.memory_space<smem>>
    %18 = vector.broadcast %17 : f32 to vector<2x256xf32>
    %19 = arith.mulf %18, %8 : vector<2x256xf32>
    %20 = arith.addf %2, %19 : vector<2x256xf32>
    %c81 = arith.constant 81 : index
    %21 = memref.load %arg1[%c81] : memref<162xf32, #tpu.memory_space<smem>>
    %22 = vector.broadcast %21 : f32 to vector<2x256xf32>
    %23 = arith.mulf %22, %8 : vector<2x256xf32>
    %24 = arith.addf %3, %23 : vector<2x256xf32>
    %c108 = arith.constant 108 : index
    %25 = memref.load %arg1[%c108] : memref<162xf32, #tpu.memory_space<smem>>
    %26 = vector.broadcast %25 : f32 to vector<2x256xf32>
    %27 = arith.mulf %26, %8 : vector<2x256xf32>
    %28 = arith.addf %4, %27 : vector<2x256xf32>
    %c135 = arith.constant 135 : index
    %29 = memref.load %arg1[%c135] : memref<162xf32, #tpu.memory_space<smem>>
    %30 = vector.broadcast %29 : f32 to vector<2x256xf32>
    %31 = arith.mulf %30, %8 : vector<2x256xf32>
    %32 = arith.addf %5, %31 : vector<2x256xf32>
    %33 = vector.extract_strided_slice %7 {offsets = [0, 1], sizes = [2, 256], strides = [1, 1]} : vector<2x384xf32> to vector<2x256xf32>
    %c1 = arith.constant 1 : index
    %34 = memref.load %arg1[%c1] : memref<162xf32, #tpu.memory_space<smem>>
    %35 = vector.broadcast %34 : f32 to vector<2x256xf32>
    %36 = arith.mulf %35, %33 : vector<2x256xf32>
    %37 = arith.addf %12, %36 : vector<2x256xf32>
    %c28 = arith.constant 28 : index
    %38 = memref.load %arg1[%c28] : memref<162xf32, #tpu.memory_space<smem>>
    %39 = vector.broadcast %38 : f32 to vector<2x256xf32>
    %40 = arith.mulf %39, %33 : vector<2x256xf32>
    %41 = arith.addf %16, %40 : vector<2x256xf32>
    %c55 = arith.constant 55 : index
    %42 = memref.load %arg1[%c55] : memref<162xf32, #tpu.memory_space<smem>>
    %43 = vector.broadcast %42 : f32 to vector<2x256xf32>
    %44 = arith.mulf %43, %33 : vector<2x256xf32>
    %45 = arith.addf %20, %44 : vector<2x256xf32>
    %c82 = arith.constant 82 : index
    %46 = memref.load %arg1[%c82] : memref<162xf32, #tpu.memory_space<smem>>
    %47 = vector.broadcast %46 : f32 to vector<2x256xf32>
    %48 = arith.mulf %47, %33 : vector<2x256xf32>
    %49 = arith.addf %24, %48 : vector<2x256xf32>
    %c109 = arith.constant 109 : index
    %50 = memref.load %arg1[%c109] : memref<162xf32, #tpu.memory_space<smem>>
    %51 = vector.broadcast %50 : f32 to vector<2x256xf32>
    %52 = arith.mulf %51, %33 : vector<2x256xf32>
    %53 = arith.addf %28, %52 : vector<2x256xf32>
    %c136 = arith.constant 136 : index
    %54 = memref.load %arg1[%c136] : memref<162xf32, #tpu.memory_space<smem>>
    %55 = vector.broadcast %54 : f32 to vector<2x256xf32>
    %56 = arith.mulf %55, %33 : vector<2x256xf32>
    %57 = arith.addf %32, %56 : vector<2x256xf32>
    %58 = vector.extract_strided_slice %7 {offsets = [0, 2], sizes = [2, 256], strides = [1, 1]} : vector<2x384xf32> to vector<2x256xf32>
    %c2 = arith.constant 2 : index
    %59 = memref.load %arg1[%c2] : memref<162xf32, #tpu.memory_space<smem>>
    %60 = vector.broadcast %59 : f32 to vector<2x256xf32>
    %61 = arith.mulf %60, %58 : vector<2x256xf32>
    %62 = arith.addf %37, %61 : vector<2x256xf32>
    %c29 = arith.constant 29 : index
    %63 = memref.load %arg1[%c29] : memref<162xf32, #tpu.memory_space<smem>>
    %64 = vector.broadcast %63 : f32 to vector<2x256xf32>
    %65 = arith.mulf %64, %58 : vector<2x256xf32>
    %66 = arith.addf %41, %65 : vector<2x256xf32>
    %c56 = arith.constant 56 : index
    %67 = memref.load %arg1[%c56] : memref<162xf32, #tpu.memory_space<smem>>
    %68 = vector.broadcast %67 : f32 to vector<2x256xf32>
    %69 = arith.mulf %68, %58 : vector<2x256xf32>
    %70 = arith.addf %45, %69 : vector<2x256xf32>
    %c83 = arith.constant 83 : index
    %71 = memref.load %arg1[%c83] : memref<162xf32, #tpu.memory_space<smem>>
    %72 = vector.broadcast %71 : f32 to vector<2x256xf32>
    %73 = arith.mulf %72, %58 : vector<2x256xf32>
    %74 = arith.addf %49, %73 : vector<2x256xf32>
    %c110 = arith.constant 110 : index
    %75 = memref.load %arg1[%c110] : memref<162xf32, #tpu.memory_space<smem>>
    %76 = vector.broadcast %75 : f32 to vector<2x256xf32>
    %77 = arith.mulf %76, %58 : vector<2x256xf32>
    %78 = arith.addf %53, %77 : vector<2x256xf32>
    %c137 = arith.constant 137 : index
    %79 = memref.load %arg1[%c137] : memref<162xf32, #tpu.memory_space<smem>>
    %80 = vector.broadcast %79 : f32 to vector<2x256xf32>
    %81 = arith.mulf %80, %58 : vector<2x256xf32>
    %82 = arith.addf %57, %81 : vector<2x256xf32>
    %83 = vector.extract_strided_slice %7 {offsets = [0, 16], sizes = [2, 256], strides = [1, 1]} : vector<2x384xf32> to vector<2x256xf32>
    %c3 = arith.constant 3 : index
    %84 = memref.load %arg1[%c3] : memref<162xf32, #tpu.memory_space<smem>>
    %85 = vector.broadcast %84 : f32 to vector<2x256xf32>
    %86 = arith.mulf %85, %83 : vector<2x256xf32>
    %87 = arith.addf %62, %86 : vector<2x256xf32>
    %c30 = arith.constant 30 : index
    %88 = memref.load %arg1[%c30] : memref<162xf32, #tpu.memory_space<smem>>
    %89 = vector.broadcast %88 : f32 to vector<2x256xf32>
    %90 = arith.mulf %89, %83 : vector<2x256xf32>
    %91 = arith.addf %66, %90 : vector<2x256xf32>
    %c57 = arith.constant 57 : index
    %92 = memref.load %arg1[%c57] : memref<162xf32, #tpu.memory_space<smem>>
    %93 = vector.broadcast %92 : f32 to vector<2x256xf32>
    %94 = arith.mulf %93, %83 : vector<2x256xf32>
    %95 = arith.addf %70, %94 : vector<2x256xf32>
    %c84 = arith.constant 84 : index
    %96 = memref.load %arg1[%c84] : memref<162xf32, #tpu.memory_space<smem>>
    %97 = vector.broadcast %96 : f32 to vector<2x256xf32>
    %98 = arith.mulf %97, %83 : vector<2x256xf32>
    %99 = arith.addf %74, %98 : vector<2x256xf32>
    %c111 = arith.constant 111 : index
    %100 = memref.load %arg1[%c111] : memref<162xf32, #tpu.memory_space<smem>>
    %101 = vector.broadcast %100 : f32 to vector<2x256xf32>
    %102 = arith.mulf %101, %83 : vector<2x256xf32>
    %103 = arith.addf %78, %102 : vector<2x256xf32>
    %c138 = arith.constant 138 : index
    %104 = memref.load %arg1[%c138] : memref<162xf32, #tpu.memory_space<smem>>
    %105 = vector.broadcast %104 : f32 to vector<2x256xf32>
    %106 = arith.mulf %105, %83 : vector<2x256xf32>
    %107 = arith.addf %82, %106 : vector<2x256xf32>
    %108 = vector.extract_strided_slice %7 {offsets = [0, 17], sizes = [2, 256], strides = [1, 1]} : vector<2x384xf32> to vector<2x256xf32>
    %c4 = arith.constant 4 : index
    %109 = memref.load %arg1[%c4] : memref<162xf32, #tpu.memory_space<smem>>
    %110 = vector.broadcast %109 : f32 to vector<2x256xf32>
    %111 = arith.mulf %110, %108 : vector<2x256xf32>
    %112 = arith.addf %87, %111 : vector<2x256xf32>
    %c31 = arith.constant 31 : index
    %113 = memref.load %arg1[%c31] : memref<162xf32, #tpu.memory_space<smem>>
    %114 = vector.broadcast %113 : f32 to vector<2x256xf32>
    %115 = arith.mulf %114, %108 : vector<2x256xf32>
    %116 = arith.addf %91, %115 : vector<2x256xf32>
    %c58 = arith.constant 58 : index
    %117 = memref.load %arg1[%c58] : memref<162xf32, #tpu.memory_space<smem>>
    %118 = vector.broadcast %117 : f32 to vector<2x256xf32>
    %119 = arith.mulf %118, %108 : vector<2x256xf32>
    %120 = arith.addf %95, %119 : vector<2x256xf32>
    %c85 = arith.constant 85 : index
    %121 = memref.load %arg1[%c85] : memref<162xf32, #tpu.memory_space<smem>>
    %122 = vector.broadcast %121 : f32 to vector<2x256xf32>
    %123 = arith.mulf %122, %108 : vector<2x256xf32>
    %124 = arith.addf %99, %123 : vector<2x256xf32>
    %c112 = arith.constant 112 : index
    %125 = memref.load %arg1[%c112] : memref<162xf32, #tpu.memory_space<smem>>
    %126 = vector.broadcast %125 : f32 to vector<2x256xf32>
    %127 = arith.mulf %126, %108 : vector<2x256xf32>
    %128 = arith.addf %103, %127 : vector<2x256xf32>
    %c139 = arith.constant 139 : index
    %129 = memref.load %arg1[%c139] : memref<162xf32, #tpu.memory_space<smem>>
    %130 = vector.broadcast %129 : f32 to vector<2x256xf32>
    %131 = arith.mulf %130, %108 : vector<2x256xf32>
    %132 = arith.addf %107, %131 : vector<2x256xf32>
    %133 = vector.extract_strided_slice %7 {offsets = [0, 18], sizes = [2, 256], strides = [1, 1]} : vector<2x384xf32> to vector<2x256xf32>
    %c5 = arith.constant 5 : index
    %134 = memref.load %arg1[%c5] : memref<162xf32, #tpu.memory_space<smem>>
    %135 = vector.broadcast %134 : f32 to vector<2x256xf32>
    %136 = arith.mulf %135, %133 : vector<2x256xf32>
    %137 = arith.addf %112, %136 : vector<2x256xf32>
    %c32 = arith.constant 32 : index
    %138 = memref.load %arg1[%c32] : memref<162xf32, #tpu.memory_space<smem>>
    %139 = vector.broadcast %138 : f32 to vector<2x256xf32>
    %140 = arith.mulf %139, %133 : vector<2x256xf32>
    %141 = arith.addf %116, %140 : vector<2x256xf32>
    %c59 = arith.constant 59 : index
    %142 = memref.load %arg1[%c59] : memref<162xf32, #tpu.memory_space<smem>>
    %143 = vector.broadcast %142 : f32 to vector<2x256xf32>
    %144 = arith.mulf %143, %133 : vector<2x256xf32>
    %145 = arith.addf %120, %144 : vector<2x256xf32>
    %c86 = arith.constant 86 : index
    %146 = memref.load %arg1[%c86] : memref<162xf32, #tpu.memory_space<smem>>
    %147 = vector.broadcast %146 : f32 to vector<2x256xf32>
    %148 = arith.mulf %147, %133 : vector<2x256xf32>
    %149 = arith.addf %124, %148 : vector<2x256xf32>
    %c113 = arith.constant 113 : index
    %150 = memref.load %arg1[%c113] : memref<162xf32, #tpu.memory_space<smem>>
    %151 = vector.broadcast %150 : f32 to vector<2x256xf32>
    %152 = arith.mulf %151, %133 : vector<2x256xf32>
    %153 = arith.addf %128, %152 : vector<2x256xf32>
    %c140 = arith.constant 140 : index
    %154 = memref.load %arg1[%c140] : memref<162xf32, #tpu.memory_space<smem>>
    %155 = vector.broadcast %154 : f32 to vector<2x256xf32>
    %156 = arith.mulf %155, %133 : vector<2x256xf32>
    %157 = arith.addf %132, %156 : vector<2x256xf32>
    %158 = vector.extract_strided_slice %7 {offsets = [0, 32], sizes = [2, 256], strides = [1, 1]} : vector<2x384xf32> to vector<2x256xf32>
    %c6 = arith.constant 6 : index
    %159 = memref.load %arg1[%c6] : memref<162xf32, #tpu.memory_space<smem>>
    %160 = vector.broadcast %159 : f32 to vector<2x256xf32>
    %161 = arith.mulf %160, %158 : vector<2x256xf32>
    %162 = arith.addf %137, %161 : vector<2x256xf32>
    %c33 = arith.constant 33 : index
    %163 = memref.load %arg1[%c33] : memref<162xf32, #tpu.memory_space<smem>>
    %164 = vector.broadcast %163 : f32 to vector<2x256xf32>
    %165 = arith.mulf %164, %158 : vector<2x256xf32>
    %166 = arith.addf %141, %165 : vector<2x256xf32>
    %c60 = arith.constant 60 : index
    %167 = memref.load %arg1[%c60] : memref<162xf32, #tpu.memory_space<smem>>
    %168 = vector.broadcast %167 : f32 to vector<2x256xf32>
    %169 = arith.mulf %168, %158 : vector<2x256xf32>
    %170 = arith.addf %145, %169 : vector<2x256xf32>
    %c87 = arith.constant 87 : index
    %171 = memref.load %arg1[%c87] : memref<162xf32, #tpu.memory_space<smem>>
    %172 = vector.broadcast %171 : f32 to vector<2x256xf32>
    %173 = arith.mulf %172, %158 : vector<2x256xf32>
    %174 = arith.addf %149, %173 : vector<2x256xf32>
    %c114 = arith.constant 114 : index
    %175 = memref.load %arg1[%c114] : memref<162xf32, #tpu.memory_space<smem>>
    %176 = vector.broadcast %175 : f32 to vector<2x256xf32>
    %177 = arith.mulf %176, %158 : vector<2x256xf32>
    %178 = arith.addf %153, %177 : vector<2x256xf32>
    %c141 = arith.constant 141 : index
    %179 = memref.load %arg1[%c141] : memref<162xf32, #tpu.memory_space<smem>>
    %180 = vector.broadcast %179 : f32 to vector<2x256xf32>
    %181 = arith.mulf %180, %158 : vector<2x256xf32>
    %182 = arith.addf %157, %181 : vector<2x256xf32>
    %183 = vector.extract_strided_slice %7 {offsets = [0, 33], sizes = [2, 256], strides = [1, 1]} : vector<2x384xf32> to vector<2x256xf32>
    %c7 = arith.constant 7 : index
    %184 = memref.load %arg1[%c7] : memref<162xf32, #tpu.memory_space<smem>>
    %185 = vector.broadcast %184 : f32 to vector<2x256xf32>
    %186 = arith.mulf %185, %183 : vector<2x256xf32>
    %187 = arith.addf %162, %186 : vector<2x256xf32>
    %c34 = arith.constant 34 : index
    %188 = memref.load %arg1[%c34] : memref<162xf32, #tpu.memory_space<smem>>
    %189 = vector.broadcast %188 : f32 to vector<2x256xf32>
    %190 = arith.mulf %189, %183 : vector<2x256xf32>
    %191 = arith.addf %166, %190 : vector<2x256xf32>
    %c61 = arith.constant 61 : index
    %192 = memref.load %arg1[%c61] : memref<162xf32, #tpu.memory_space<smem>>
    %193 = vector.broadcast %192 : f32 to vector<2x256xf32>
    %194 = arith.mulf %193, %183 : vector<2x256xf32>
    %195 = arith.addf %170, %194 : vector<2x256xf32>
    %c88 = arith.constant 88 : index
    %196 = memref.load %arg1[%c88] : memref<162xf32, #tpu.memory_space<smem>>
    %197 = vector.broadcast %196 : f32 to vector<2x256xf32>
    %198 = arith.mulf %197, %183 : vector<2x256xf32>
    %199 = arith.addf %174, %198 : vector<2x256xf32>
    %c115 = arith.constant 115 : index
    %200 = memref.load %arg1[%c115] : memref<162xf32, #tpu.memory_space<smem>>
    %201 = vector.broadcast %200 : f32 to vector<2x256xf32>
    %202 = arith.mulf %201, %183 : vector<2x256xf32>
    %203 = arith.addf %178, %202 : vector<2x256xf32>
    %c142 = arith.constant 142 : index
    %204 = memref.load %arg1[%c142] : memref<162xf32, #tpu.memory_space<smem>>
    %205 = vector.broadcast %204 : f32 to vector<2x256xf32>
    %206 = arith.mulf %205, %183 : vector<2x256xf32>
    %207 = arith.addf %182, %206 : vector<2x256xf32>
    %208 = vector.extract_strided_slice %7 {offsets = [0, 34], sizes = [2, 256], strides = [1, 1]} : vector<2x384xf32> to vector<2x256xf32>
    %c8 = arith.constant 8 : index
    %209 = memref.load %arg1[%c8] : memref<162xf32, #tpu.memory_space<smem>>
    %210 = vector.broadcast %209 : f32 to vector<2x256xf32>
    %211 = arith.mulf %210, %208 : vector<2x256xf32>
    %212 = arith.addf %187, %211 : vector<2x256xf32>
    %c35 = arith.constant 35 : index
    %213 = memref.load %arg1[%c35] : memref<162xf32, #tpu.memory_space<smem>>
    %214 = vector.broadcast %213 : f32 to vector<2x256xf32>
    %215 = arith.mulf %214, %208 : vector<2x256xf32>
    %216 = arith.addf %191, %215 : vector<2x256xf32>
    %c62 = arith.constant 62 : index
    %217 = memref.load %arg1[%c62] : memref<162xf32, #tpu.memory_space<smem>>
    %218 = vector.broadcast %217 : f32 to vector<2x256xf32>
    %219 = arith.mulf %218, %208 : vector<2x256xf32>
    %220 = arith.addf %195, %219 : vector<2x256xf32>
    %c89 = arith.constant 89 : index
    %221 = memref.load %arg1[%c89] : memref<162xf32, #tpu.memory_space<smem>>
    %222 = vector.broadcast %221 : f32 to vector<2x256xf32>
    %223 = arith.mulf %222, %208 : vector<2x256xf32>
    %224 = arith.addf %199, %223 : vector<2x256xf32>
    %c116 = arith.constant 116 : index
    %225 = memref.load %arg1[%c116] : memref<162xf32, #tpu.memory_space<smem>>
    %226 = vector.broadcast %225 : f32 to vector<2x256xf32>
    %227 = arith.mulf %226, %208 : vector<2x256xf32>
    %228 = arith.addf %203, %227 : vector<2x256xf32>
    %c143 = arith.constant 143 : index
    %229 = memref.load %arg1[%c143] : memref<162xf32, #tpu.memory_space<smem>>
    %230 = vector.broadcast %229 : f32 to vector<2x256xf32>
    %231 = arith.mulf %230, %208 : vector<2x256xf32>
    %232 = arith.addf %207, %231 : vector<2x256xf32>
    %c0_8 = arith.constant 0 : index
    %c1_9 = arith.constant 1 : index
    %c0_10 = arith.constant 0 : index
    %233 = vector.load %arg0[%c0_8, %c1_9, %c0_10] : memref<2x3x384xf32, #tpu.memory_space<vmem>>, vector<2x1x384xf32>
    %234 = vector.shape_cast %233 : vector<2x1x384xf32> to vector<2x384xf32>
    %235 = vector.extract_strided_slice %234 {offsets = [0, 0], sizes = [2, 256], strides = [1, 1]} : vector<2x384xf32> to vector<2x256xf32>
    %c9 = arith.constant 9 : index
    %236 = memref.load %arg1[%c9] : memref<162xf32, #tpu.memory_space<smem>>
    %237 = vector.broadcast %236 : f32 to vector<2x256xf32>
    %238 = arith.mulf %237, %235 : vector<2x256xf32>
    %239 = arith.addf %212, %238 : vector<2x256xf32>
    %c36 = arith.constant 36 : index
    %240 = memref.load %arg1[%c36] : memref<162xf32, #tpu.memory_space<smem>>
    %241 = vector.broadcast %240 : f32 to vector<2x256xf32>
    %242 = arith.mulf %241, %235 : vector<2x256xf32>
    %243 = arith.addf %216, %242 : vector<2x256xf32>
    %c63 = arith.constant 63 : index
    %244 = memref.load %arg1[%c63] : memref<162xf32, #tpu.memory_space<smem>>
    %245 = vector.broadcast %244 : f32 to vector<2x256xf32>
    %246 = arith.mulf %245, %235 : vector<2x256xf32>
    %247 = arith.addf %220, %246 : vector<2x256xf32>
    %c90 = arith.constant 90 : index
    %248 = memref.load %arg1[%c90] : memref<162xf32, #tpu.memory_space<smem>>
    %249 = vector.broadcast %248 : f32 to vector<2x256xf32>
    %250 = arith.mulf %249, %235 : vector<2x256xf32>
    %251 = arith.addf %224, %250 : vector<2x256xf32>
    %c117 = arith.constant 117 : index
    %252 = memref.load %arg1[%c117] : memref<162xf32, #tpu.memory_space<smem>>
    %253 = vector.broadcast %252 : f32 to vector<2x256xf32>
    %254 = arith.mulf %253, %235 : vector<2x256xf32>
    %255 = arith.addf %228, %254 : vector<2x256xf32>
    %c144 = arith.constant 144 : index
    %256 = memref.load %arg1[%c144] : memref<162xf32, #tpu.memory_space<smem>>
    %257 = vector.broadcast %256 : f32 to vector<2x256xf32>
    %258 = arith.mulf %257, %235 : vector<2x256xf32>
    %259 = arith.addf %232, %258 : vector<2x256xf32>
    %260 = vector.extract_strided_slice %234 {offsets = [0, 1], sizes = [2, 256], strides = [1, 1]} : vector<2x384xf32> to vector<2x256xf32>
    %c10 = arith.constant 10 : index
    %261 = memref.load %arg1[%c10] : memref<162xf32, #tpu.memory_space<smem>>
    %262 = vector.broadcast %261 : f32 to vector<2x256xf32>
    %263 = arith.mulf %262, %260 : vector<2x256xf32>
    %264 = arith.addf %239, %263 : vector<2x256xf32>
    %c37 = arith.constant 37 : index
    %265 = memref.load %arg1[%c37] : memref<162xf32, #tpu.memory_space<smem>>
    %266 = vector.broadcast %265 : f32 to vector<2x256xf32>
    %267 = arith.mulf %266, %260 : vector<2x256xf32>
    %268 = arith.addf %243, %267 : vector<2x256xf32>
    %c64 = arith.constant 64 : index
    %269 = memref.load %arg1[%c64] : memref<162xf32, #tpu.memory_space<smem>>
    %270 = vector.broadcast %269 : f32 to vector<2x256xf32>
    %271 = arith.mulf %270, %260 : vector<2x256xf32>
    %272 = arith.addf %247, %271 : vector<2x256xf32>
    %c91 = arith.constant 91 : index
    %273 = memref.load %arg1[%c91] : memref<162xf32, #tpu.memory_space<smem>>
    %274 = vector.broadcast %273 : f32 to vector<2x256xf32>
    %275 = arith.mulf %274, %260 : vector<2x256xf32>
    %276 = arith.addf %251, %275 : vector<2x256xf32>
    %c118 = arith.constant 118 : index
    %277 = memref.load %arg1[%c118] : memref<162xf32, #tpu.memory_space<smem>>
    %278 = vector.broadcast %277 : f32 to vector<2x256xf32>
    %279 = arith.mulf %278, %260 : vector<2x256xf32>
    %280 = arith.addf %255, %279 : vector<2x256xf32>
    %c145 = arith.constant 145 : index
    %281 = memref.load %arg1[%c145] : memref<162xf32, #tpu.memory_space<smem>>
    %282 = vector.broadcast %281 : f32 to vector<2x256xf32>
    %283 = arith.mulf %282, %260 : vector<2x256xf32>
    %284 = arith.addf %259, %283 : vector<2x256xf32>
    %285 = vector.extract_strided_slice %234 {offsets = [0, 2], sizes = [2, 256], strides = [1, 1]} : vector<2x384xf32> to vector<2x256xf32>
    %c11 = arith.constant 11 : index
    %286 = memref.load %arg1[%c11] : memref<162xf32, #tpu.memory_space<smem>>
    %287 = vector.broadcast %286 : f32 to vector<2x256xf32>
    %288 = arith.mulf %287, %285 : vector<2x256xf32>
    %289 = arith.addf %264, %288 : vector<2x256xf32>
    %c38 = arith.constant 38 : index
    %290 = memref.load %arg1[%c38] : memref<162xf32, #tpu.memory_space<smem>>
    %291 = vector.broadcast %290 : f32 to vector<2x256xf32>
    %292 = arith.mulf %291, %285 : vector<2x256xf32>
    %293 = arith.addf %268, %292 : vector<2x256xf32>
    %c65 = arith.constant 65 : index
    %294 = memref.load %arg1[%c65] : memref<162xf32, #tpu.memory_space<smem>>
    %295 = vector.broadcast %294 : f32 to vector<2x256xf32>
    %296 = arith.mulf %295, %285 : vector<2x256xf32>
    %297 = arith.addf %272, %296 : vector<2x256xf32>
    %c92 = arith.constant 92 : index
    %298 = memref.load %arg1[%c92] : memref<162xf32, #tpu.memory_space<smem>>
    %299 = vector.broadcast %298 : f32 to vector<2x256xf32>
    %300 = arith.mulf %299, %285 : vector<2x256xf32>
    %301 = arith.addf %276, %300 : vector<2x256xf32>
    %c119 = arith.constant 119 : index
    %302 = memref.load %arg1[%c119] : memref<162xf32, #tpu.memory_space<smem>>
    %303 = vector.broadcast %302 : f32 to vector<2x256xf32>
    %304 = arith.mulf %303, %285 : vector<2x256xf32>
    %305 = arith.addf %280, %304 : vector<2x256xf32>
    %c146 = arith.constant 146 : index
    %306 = memref.load %arg1[%c146] : memref<162xf32, #tpu.memory_space<smem>>
    %307 = vector.broadcast %306 : f32 to vector<2x256xf32>
    %308 = arith.mulf %307, %285 : vector<2x256xf32>
    %309 = arith.addf %284, %308 : vector<2x256xf32>
    %310 = vector.extract_strided_slice %234 {offsets = [0, 16], sizes = [2, 256], strides = [1, 1]} : vector<2x384xf32> to vector<2x256xf32>
    %c12 = arith.constant 12 : index
    %311 = memref.load %arg1[%c12] : memref<162xf32, #tpu.memory_space<smem>>
    %312 = vector.broadcast %311 : f32 to vector<2x256xf32>
    %313 = arith.mulf %312, %310 : vector<2x256xf32>
    %314 = arith.addf %289, %313 : vector<2x256xf32>
    %c39 = arith.constant 39 : index
    %315 = memref.load %arg1[%c39] : memref<162xf32, #tpu.memory_space<smem>>
    %316 = vector.broadcast %315 : f32 to vector<2x256xf32>
    %317 = arith.mulf %316, %310 : vector<2x256xf32>
    %318 = arith.addf %293, %317 : vector<2x256xf32>
    %c66 = arith.constant 66 : index
    %319 = memref.load %arg1[%c66] : memref<162xf32, #tpu.memory_space<smem>>
    %320 = vector.broadcast %319 : f32 to vector<2x256xf32>
    %321 = arith.mulf %320, %310 : vector<2x256xf32>
    %322 = arith.addf %297, %321 : vector<2x256xf32>
    %c93 = arith.constant 93 : index
    %323 = memref.load %arg1[%c93] : memref<162xf32, #tpu.memory_space<smem>>
    %324 = vector.broadcast %323 : f32 to vector<2x256xf32>
    %325 = arith.mulf %324, %310 : vector<2x256xf32>
    %326 = arith.addf %301, %325 : vector<2x256xf32>
    %c120 = arith.constant 120 : index
    %327 = memref.load %arg1[%c120] : memref<162xf32, #tpu.memory_space<smem>>
    %328 = vector.broadcast %327 : f32 to vector<2x256xf32>
    %329 = arith.mulf %328, %310 : vector<2x256xf32>
    %330 = arith.addf %305, %329 : vector<2x256xf32>
    %c147 = arith.constant 147 : index
    %331 = memref.load %arg1[%c147] : memref<162xf32, #tpu.memory_space<smem>>
    %332 = vector.broadcast %331 : f32 to vector<2x256xf32>
    %333 = arith.mulf %332, %310 : vector<2x256xf32>
    %334 = arith.addf %309, %333 : vector<2x256xf32>
    %335 = vector.extract_strided_slice %234 {offsets = [0, 17], sizes = [2, 256], strides = [1, 1]} : vector<2x384xf32> to vector<2x256xf32>
    %c13 = arith.constant 13 : index
    %336 = memref.load %arg1[%c13] : memref<162xf32, #tpu.memory_space<smem>>
    %337 = vector.broadcast %336 : f32 to vector<2x256xf32>
    %338 = arith.mulf %337, %335 : vector<2x256xf32>
    %339 = arith.addf %314, %338 : vector<2x256xf32>
    %c40 = arith.constant 40 : index
    %340 = memref.load %arg1[%c40] : memref<162xf32, #tpu.memory_space<smem>>
    %341 = vector.broadcast %340 : f32 to vector<2x256xf32>
    %342 = arith.mulf %341, %335 : vector<2x256xf32>
    %343 = arith.addf %318, %342 : vector<2x256xf32>
    %c67 = arith.constant 67 : index
    %344 = memref.load %arg1[%c67] : memref<162xf32, #tpu.memory_space<smem>>
    %345 = vector.broadcast %344 : f32 to vector<2x256xf32>
    %346 = arith.mulf %345, %335 : vector<2x256xf32>
    %347 = arith.addf %322, %346 : vector<2x256xf32>
    %c94 = arith.constant 94 : index
    %348 = memref.load %arg1[%c94] : memref<162xf32, #tpu.memory_space<smem>>
    %349 = vector.broadcast %348 : f32 to vector<2x256xf32>
    %350 = arith.mulf %349, %335 : vector<2x256xf32>
    %351 = arith.addf %326, %350 : vector<2x256xf32>
    %c121 = arith.constant 121 : index
    %352 = memref.load %arg1[%c121] : memref<162xf32, #tpu.memory_space<smem>>
    %353 = vector.broadcast %352 : f32 to vector<2x256xf32>
    %354 = arith.mulf %353, %335 : vector<2x256xf32>
    %355 = arith.addf %330, %354 : vector<2x256xf32>
    %c148 = arith.constant 148 : index
    %356 = memref.load %arg1[%c148] : memref<162xf32, #tpu.memory_space<smem>>
    %357 = vector.broadcast %356 : f32 to vector<2x256xf32>
    %358 = arith.mulf %357, %335 : vector<2x256xf32>
    %359 = arith.addf %334, %358 : vector<2x256xf32>
    %360 = vector.extract_strided_slice %234 {offsets = [0, 18], sizes = [2, 256], strides = [1, 1]} : vector<2x384xf32> to vector<2x256xf32>
    %c14 = arith.constant 14 : index
    %361 = memref.load %arg1[%c14] : memref<162xf32, #tpu.memory_space<smem>>
    %362 = vector.broadcast %361 : f32 to vector<2x256xf32>
    %363 = arith.mulf %362, %360 : vector<2x256xf32>
    %364 = arith.addf %339, %363 : vector<2x256xf32>
    %c41 = arith.constant 41 : index
    %365 = memref.load %arg1[%c41] : memref<162xf32, #tpu.memory_space<smem>>
    %366 = vector.broadcast %365 : f32 to vector<2x256xf32>
    %367 = arith.mulf %366, %360 : vector<2x256xf32>
    %368 = arith.addf %343, %367 : vector<2x256xf32>
    %c68 = arith.constant 68 : index
    %369 = memref.load %arg1[%c68] : memref<162xf32, #tpu.memory_space<smem>>
    %370 = vector.broadcast %369 : f32 to vector<2x256xf32>
    %371 = arith.mulf %370, %360 : vector<2x256xf32>
    %372 = arith.addf %347, %371 : vector<2x256xf32>
    %c95 = arith.constant 95 : index
    %373 = memref.load %arg1[%c95] : memref<162xf32, #tpu.memory_space<smem>>
    %374 = vector.broadcast %373 : f32 to vector<2x256xf32>
    %375 = arith.mulf %374, %360 : vector<2x256xf32>
    %376 = arith.addf %351, %375 : vector<2x256xf32>
    %c122 = arith.constant 122 : index
    %377 = memref.load %arg1[%c122] : memref<162xf32, #tpu.memory_space<smem>>
    %378 = vector.broadcast %377 : f32 to vector<2x256xf32>
    %379 = arith.mulf %378, %360 : vector<2x256xf32>
    %380 = arith.addf %355, %379 : vector<2x256xf32>
    %c149 = arith.constant 149 : index
    %381 = memref.load %arg1[%c149] : memref<162xf32, #tpu.memory_space<smem>>
    %382 = vector.broadcast %381 : f32 to vector<2x256xf32>
    %383 = arith.mulf %382, %360 : vector<2x256xf32>
    %384 = arith.addf %359, %383 : vector<2x256xf32>
    %385 = vector.extract_strided_slice %234 {offsets = [0, 32], sizes = [2, 256], strides = [1, 1]} : vector<2x384xf32> to vector<2x256xf32>
    %c15 = arith.constant 15 : index
    %386 = memref.load %arg1[%c15] : memref<162xf32, #tpu.memory_space<smem>>
    %387 = vector.broadcast %386 : f32 to vector<2x256xf32>
    %388 = arith.mulf %387, %385 : vector<2x256xf32>
    %389 = arith.addf %364, %388 : vector<2x256xf32>
    %c42 = arith.constant 42 : index
    %390 = memref.load %arg1[%c42] : memref<162xf32, #tpu.memory_space<smem>>
    %391 = vector.broadcast %390 : f32 to vector<2x256xf32>
    %392 = arith.mulf %391, %385 : vector<2x256xf32>
    %393 = arith.addf %368, %392 : vector<2x256xf32>
    %c69 = arith.constant 69 : index
    %394 = memref.load %arg1[%c69] : memref<162xf32, #tpu.memory_space<smem>>
    %395 = vector.broadcast %394 : f32 to vector<2x256xf32>
    %396 = arith.mulf %395, %385 : vector<2x256xf32>
    %397 = arith.addf %372, %396 : vector<2x256xf32>
    %c96 = arith.constant 96 : index
    %398 = memref.load %arg1[%c96] : memref<162xf32, #tpu.memory_space<smem>>
    %399 = vector.broadcast %398 : f32 to vector<2x256xf32>
    %400 = arith.mulf %399, %385 : vector<2x256xf32>
    %401 = arith.addf %376, %400 : vector<2x256xf32>
    %c123 = arith.constant 123 : index
    %402 = memref.load %arg1[%c123] : memref<162xf32, #tpu.memory_space<smem>>
    %403 = vector.broadcast %402 : f32 to vector<2x256xf32>
    %404 = arith.mulf %403, %385 : vector<2x256xf32>
    %405 = arith.addf %380, %404 : vector<2x256xf32>
    %c150 = arith.constant 150 : index
    %406 = memref.load %arg1[%c150] : memref<162xf32, #tpu.memory_space<smem>>
    %407 = vector.broadcast %406 : f32 to vector<2x256xf32>
    %408 = arith.mulf %407, %385 : vector<2x256xf32>
    %409 = arith.addf %384, %408 : vector<2x256xf32>
    %410 = vector.extract_strided_slice %234 {offsets = [0, 33], sizes = [2, 256], strides = [1, 1]} : vector<2x384xf32> to vector<2x256xf32>
    %c16 = arith.constant 16 : index
    %411 = memref.load %arg1[%c16] : memref<162xf32, #tpu.memory_space<smem>>
    %412 = vector.broadcast %411 : f32 to vector<2x256xf32>
    %413 = arith.mulf %412, %410 : vector<2x256xf32>
    %414 = arith.addf %389, %413 : vector<2x256xf32>
    %c43 = arith.constant 43 : index
    %415 = memref.load %arg1[%c43] : memref<162xf32, #tpu.memory_space<smem>>
    %416 = vector.broadcast %415 : f32 to vector<2x256xf32>
    %417 = arith.mulf %416, %410 : vector<2x256xf32>
    %418 = arith.addf %393, %417 : vector<2x256xf32>
    %c70 = arith.constant 70 : index
    %419 = memref.load %arg1[%c70] : memref<162xf32, #tpu.memory_space<smem>>
    %420 = vector.broadcast %419 : f32 to vector<2x256xf32>
    %421 = arith.mulf %420, %410 : vector<2x256xf32>
    %422 = arith.addf %397, %421 : vector<2x256xf32>
    %c97 = arith.constant 97 : index
    %423 = memref.load %arg1[%c97] : memref<162xf32, #tpu.memory_space<smem>>
    %424 = vector.broadcast %423 : f32 to vector<2x256xf32>
    %425 = arith.mulf %424, %410 : vector<2x256xf32>
    %426 = arith.addf %401, %425 : vector<2x256xf32>
    %c124 = arith.constant 124 : index
    %427 = memref.load %arg1[%c124] : memref<162xf32, #tpu.memory_space<smem>>
    %428 = vector.broadcast %427 : f32 to vector<2x256xf32>
    %429 = arith.mulf %428, %410 : vector<2x256xf32>
    %430 = arith.addf %405, %429 : vector<2x256xf32>
    %c151 = arith.constant 151 : index
    %431 = memref.load %arg1[%c151] : memref<162xf32, #tpu.memory_space<smem>>
    %432 = vector.broadcast %431 : f32 to vector<2x256xf32>
    %433 = arith.mulf %432, %410 : vector<2x256xf32>
    %434 = arith.addf %409, %433 : vector<2x256xf32>
    %435 = vector.extract_strided_slice %234 {offsets = [0, 34], sizes = [2, 256], strides = [1, 1]} : vector<2x384xf32> to vector<2x256xf32>
    %c17 = arith.constant 17 : index
    %436 = memref.load %arg1[%c17] : memref<162xf32, #tpu.memory_space<smem>>
    %437 = vector.broadcast %436 : f32 to vector<2x256xf32>
    %438 = arith.mulf %437, %435 : vector<2x256xf32>
    %439 = arith.addf %414, %438 : vector<2x256xf32>
    %c44 = arith.constant 44 : index
    %440 = memref.load %arg1[%c44] : memref<162xf32, #tpu.memory_space<smem>>
    %441 = vector.broadcast %440 : f32 to vector<2x256xf32>
    %442 = arith.mulf %441, %435 : vector<2x256xf32>
    %443 = arith.addf %418, %442 : vector<2x256xf32>
    %c71 = arith.constant 71 : index
    %444 = memref.load %arg1[%c71] : memref<162xf32, #tpu.memory_space<smem>>
    %445 = vector.broadcast %444 : f32 to vector<2x256xf32>
    %446 = arith.mulf %445, %435 : vector<2x256xf32>
    %447 = arith.addf %422, %446 : vector<2x256xf32>
    %c98 = arith.constant 98 : index
    %448 = memref.load %arg1[%c98] : memref<162xf32, #tpu.memory_space<smem>>
    %449 = vector.broadcast %448 : f32 to vector<2x256xf32>
    %450 = arith.mulf %449, %435 : vector<2x256xf32>
    %451 = arith.addf %426, %450 : vector<2x256xf32>
    %c125 = arith.constant 125 : index
    %452 = memref.load %arg1[%c125] : memref<162xf32, #tpu.memory_space<smem>>
    %453 = vector.broadcast %452 : f32 to vector<2x256xf32>
    %454 = arith.mulf %453, %435 : vector<2x256xf32>
    %455 = arith.addf %430, %454 : vector<2x256xf32>
    %c152 = arith.constant 152 : index
    %456 = memref.load %arg1[%c152] : memref<162xf32, #tpu.memory_space<smem>>
    %457 = vector.broadcast %456 : f32 to vector<2x256xf32>
    %458 = arith.mulf %457, %435 : vector<2x256xf32>
    %459 = arith.addf %434, %458 : vector<2x256xf32>
    %c0_11 = arith.constant 0 : index
    %c2_12 = arith.constant 2 : index
    %c0_13 = arith.constant 0 : index
    %460 = vector.load %arg0[%c0_11, %c2_12, %c0_13] : memref<2x3x384xf32, #tpu.memory_space<vmem>>, vector<2x1x384xf32>
    %461 = vector.shape_cast %460 : vector<2x1x384xf32> to vector<2x384xf32>
    %462 = vector.extract_strided_slice %461 {offsets = [0, 0], sizes = [2, 256], strides = [1, 1]} : vector<2x384xf32> to vector<2x256xf32>
    %c18 = arith.constant 18 : index
    %463 = memref.load %arg1[%c18] : memref<162xf32, #tpu.memory_space<smem>>
    %464 = vector.broadcast %463 : f32 to vector<2x256xf32>
    %465 = arith.mulf %464, %462 : vector<2x256xf32>
    %466 = arith.addf %439, %465 : vector<2x256xf32>
    %c45 = arith.constant 45 : index
    %467 = memref.load %arg1[%c45] : memref<162xf32, #tpu.memory_space<smem>>
    %468 = vector.broadcast %467 : f32 to vector<2x256xf32>
    %469 = arith.mulf %468, %462 : vector<2x256xf32>
    %470 = arith.addf %443, %469 : vector<2x256xf32>
    %c72 = arith.constant 72 : index
    %471 = memref.load %arg1[%c72] : memref<162xf32, #tpu.memory_space<smem>>
    %472 = vector.broadcast %471 : f32 to vector<2x256xf32>
    %473 = arith.mulf %472, %462 : vector<2x256xf32>
    %474 = arith.addf %447, %473 : vector<2x256xf32>
    %c99 = arith.constant 99 : index
    %475 = memref.load %arg1[%c99] : memref<162xf32, #tpu.memory_space<smem>>
    %476 = vector.broadcast %475 : f32 to vector<2x256xf32>
    %477 = arith.mulf %476, %462 : vector<2x256xf32>
    %478 = arith.addf %451, %477 : vector<2x256xf32>
    %c126 = arith.constant 126 : index
    %479 = memref.load %arg1[%c126] : memref<162xf32, #tpu.memory_space<smem>>
    %480 = vector.broadcast %479 : f32 to vector<2x256xf32>
    %481 = arith.mulf %480, %462 : vector<2x256xf32>
    %482 = arith.addf %455, %481 : vector<2x256xf32>
    %c153 = arith.constant 153 : index
    %483 = memref.load %arg1[%c153] : memref<162xf32, #tpu.memory_space<smem>>
    %484 = vector.broadcast %483 : f32 to vector<2x256xf32>
    %485 = arith.mulf %484, %462 : vector<2x256xf32>
    %486 = arith.addf %459, %485 : vector<2x256xf32>
    %487 = vector.extract_strided_slice %461 {offsets = [0, 1], sizes = [2, 256], strides = [1, 1]} : vector<2x384xf32> to vector<2x256xf32>
    %c19 = arith.constant 19 : index
    %488 = memref.load %arg1[%c19] : memref<162xf32, #tpu.memory_space<smem>>
    %489 = vector.broadcast %488 : f32 to vector<2x256xf32>
    %490 = arith.mulf %489, %487 : vector<2x256xf32>
    %491 = arith.addf %466, %490 : vector<2x256xf32>
    %c46 = arith.constant 46 : index
    %492 = memref.load %arg1[%c46] : memref<162xf32, #tpu.memory_space<smem>>
    %493 = vector.broadcast %492 : f32 to vector<2x256xf32>
    %494 = arith.mulf %493, %487 : vector<2x256xf32>
    %495 = arith.addf %470, %494 : vector<2x256xf32>
    %c73 = arith.constant 73 : index
    %496 = memref.load %arg1[%c73] : memref<162xf32, #tpu.memory_space<smem>>
    %497 = vector.broadcast %496 : f32 to vector<2x256xf32>
    %498 = arith.mulf %497, %487 : vector<2x256xf32>
    %499 = arith.addf %474, %498 : vector<2x256xf32>
    %c100 = arith.constant 100 : index
    %500 = memref.load %arg1[%c100] : memref<162xf32, #tpu.memory_space<smem>>
    %501 = vector.broadcast %500 : f32 to vector<2x256xf32>
    %502 = arith.mulf %501, %487 : vector<2x256xf32>
    %503 = arith.addf %478, %502 : vector<2x256xf32>
    %c127 = arith.constant 127 : index
    %504 = memref.load %arg1[%c127] : memref<162xf32, #tpu.memory_space<smem>>
    %505 = vector.broadcast %504 : f32 to vector<2x256xf32>
    %506 = arith.mulf %505, %487 : vector<2x256xf32>
    %507 = arith.addf %482, %506 : vector<2x256xf32>
    %c154 = arith.constant 154 : index
    %508 = memref.load %arg1[%c154] : memref<162xf32, #tpu.memory_space<smem>>
    %509 = vector.broadcast %508 : f32 to vector<2x256xf32>
    %510 = arith.mulf %509, %487 : vector<2x256xf32>
    %511 = arith.addf %486, %510 : vector<2x256xf32>
    %512 = vector.extract_strided_slice %461 {offsets = [0, 2], sizes = [2, 256], strides = [1, 1]} : vector<2x384xf32> to vector<2x256xf32>
    %c20 = arith.constant 20 : index
    %513 = memref.load %arg1[%c20] : memref<162xf32, #tpu.memory_space<smem>>
    %514 = vector.broadcast %513 : f32 to vector<2x256xf32>
    %515 = arith.mulf %514, %512 : vector<2x256xf32>
    %516 = arith.addf %491, %515 : vector<2x256xf32>
    %c47 = arith.constant 47 : index
    %517 = memref.load %arg1[%c47] : memref<162xf32, #tpu.memory_space<smem>>
    %518 = vector.broadcast %517 : f32 to vector<2x256xf32>
    %519 = arith.mulf %518, %512 : vector<2x256xf32>
    %520 = arith.addf %495, %519 : vector<2x256xf32>
    %c74 = arith.constant 74 : index
    %521 = memref.load %arg1[%c74] : memref<162xf32, #tpu.memory_space<smem>>
    %522 = vector.broadcast %521 : f32 to vector<2x256xf32>
    %523 = arith.mulf %522, %512 : vector<2x256xf32>
    %524 = arith.addf %499, %523 : vector<2x256xf32>
    %c101 = arith.constant 101 : index
    %525 = memref.load %arg1[%c101] : memref<162xf32, #tpu.memory_space<smem>>
    %526 = vector.broadcast %525 : f32 to vector<2x256xf32>
    %527 = arith.mulf %526, %512 : vector<2x256xf32>
    %528 = arith.addf %503, %527 : vector<2x256xf32>
    %c128 = arith.constant 128 : index
    %529 = memref.load %arg1[%c128] : memref<162xf32, #tpu.memory_space<smem>>
    %530 = vector.broadcast %529 : f32 to vector<2x256xf32>
    %531 = arith.mulf %530, %512 : vector<2x256xf32>
    %532 = arith.addf %507, %531 : vector<2x256xf32>
    %c155 = arith.constant 155 : index
    %533 = memref.load %arg1[%c155] : memref<162xf32, #tpu.memory_space<smem>>
    %534 = vector.broadcast %533 : f32 to vector<2x256xf32>
    %535 = arith.mulf %534, %512 : vector<2x256xf32>
    %536 = arith.addf %511, %535 : vector<2x256xf32>
    %537 = vector.extract_strided_slice %461 {offsets = [0, 16], sizes = [2, 256], strides = [1, 1]} : vector<2x384xf32> to vector<2x256xf32>
    %c21 = arith.constant 21 : index
    %538 = memref.load %arg1[%c21] : memref<162xf32, #tpu.memory_space<smem>>
    %539 = vector.broadcast %538 : f32 to vector<2x256xf32>
    %540 = arith.mulf %539, %537 : vector<2x256xf32>
    %541 = arith.addf %516, %540 : vector<2x256xf32>
    %c48 = arith.constant 48 : index
    %542 = memref.load %arg1[%c48] : memref<162xf32, #tpu.memory_space<smem>>
    %543 = vector.broadcast %542 : f32 to vector<2x256xf32>
    %544 = arith.mulf %543, %537 : vector<2x256xf32>
    %545 = arith.addf %520, %544 : vector<2x256xf32>
    %c75 = arith.constant 75 : index
    %546 = memref.load %arg1[%c75] : memref<162xf32, #tpu.memory_space<smem>>
    %547 = vector.broadcast %546 : f32 to vector<2x256xf32>
    %548 = arith.mulf %547, %537 : vector<2x256xf32>
    %549 = arith.addf %524, %548 : vector<2x256xf32>
    %c102 = arith.constant 102 : index
    %550 = memref.load %arg1[%c102] : memref<162xf32, #tpu.memory_space<smem>>
    %551 = vector.broadcast %550 : f32 to vector<2x256xf32>
    %552 = arith.mulf %551, %537 : vector<2x256xf32>
    %553 = arith.addf %528, %552 : vector<2x256xf32>
    %c129 = arith.constant 129 : index
    %554 = memref.load %arg1[%c129] : memref<162xf32, #tpu.memory_space<smem>>
    %555 = vector.broadcast %554 : f32 to vector<2x256xf32>
    %556 = arith.mulf %555, %537 : vector<2x256xf32>
    %557 = arith.addf %532, %556 : vector<2x256xf32>
    %c156 = arith.constant 156 : index
    %558 = memref.load %arg1[%c156] : memref<162xf32, #tpu.memory_space<smem>>
    %559 = vector.broadcast %558 : f32 to vector<2x256xf32>
    %560 = arith.mulf %559, %537 : vector<2x256xf32>
    %561 = arith.addf %536, %560 : vector<2x256xf32>
    %562 = vector.extract_strided_slice %461 {offsets = [0, 17], sizes = [2, 256], strides = [1, 1]} : vector<2x384xf32> to vector<2x256xf32>
    %c22 = arith.constant 22 : index
    %563 = memref.load %arg1[%c22] : memref<162xf32, #tpu.memory_space<smem>>
    %564 = vector.broadcast %563 : f32 to vector<2x256xf32>
    %565 = arith.mulf %564, %562 : vector<2x256xf32>
    %566 = arith.addf %541, %565 : vector<2x256xf32>
    %c49 = arith.constant 49 : index
    %567 = memref.load %arg1[%c49] : memref<162xf32, #tpu.memory_space<smem>>
    %568 = vector.broadcast %567 : f32 to vector<2x256xf32>
    %569 = arith.mulf %568, %562 : vector<2x256xf32>
    %570 = arith.addf %545, %569 : vector<2x256xf32>
    %c76 = arith.constant 76 : index
    %571 = memref.load %arg1[%c76] : memref<162xf32, #tpu.memory_space<smem>>
    %572 = vector.broadcast %571 : f32 to vector<2x256xf32>
    %573 = arith.mulf %572, %562 : vector<2x256xf32>
    %574 = arith.addf %549, %573 : vector<2x256xf32>
    %c103 = arith.constant 103 : index
    %575 = memref.load %arg1[%c103] : memref<162xf32, #tpu.memory_space<smem>>
    %576 = vector.broadcast %575 : f32 to vector<2x256xf32>
    %577 = arith.mulf %576, %562 : vector<2x256xf32>
    %578 = arith.addf %553, %577 : vector<2x256xf32>
    %c130 = arith.constant 130 : index
    %579 = memref.load %arg1[%c130] : memref<162xf32, #tpu.memory_space<smem>>
    %580 = vector.broadcast %579 : f32 to vector<2x256xf32>
    %581 = arith.mulf %580, %562 : vector<2x256xf32>
    %582 = arith.addf %557, %581 : vector<2x256xf32>
    %c157 = arith.constant 157 : index
    %583 = memref.load %arg1[%c157] : memref<162xf32, #tpu.memory_space<smem>>
    %584 = vector.broadcast %583 : f32 to vector<2x256xf32>
    %585 = arith.mulf %584, %562 : vector<2x256xf32>
    %586 = arith.addf %561, %585 : vector<2x256xf32>
    %587 = vector.extract_strided_slice %461 {offsets = [0, 18], sizes = [2, 256], strides = [1, 1]} : vector<2x384xf32> to vector<2x256xf32>
    %c23 = arith.constant 23 : index
    %588 = memref.load %arg1[%c23] : memref<162xf32, #tpu.memory_space<smem>>
    %589 = vector.broadcast %588 : f32 to vector<2x256xf32>
    %590 = arith.mulf %589, %587 : vector<2x256xf32>
    %591 = arith.addf %566, %590 : vector<2x256xf32>
    %c50 = arith.constant 50 : index
    %592 = memref.load %arg1[%c50] : memref<162xf32, #tpu.memory_space<smem>>
    %593 = vector.broadcast %592 : f32 to vector<2x256xf32>
    %594 = arith.mulf %593, %587 : vector<2x256xf32>
    %595 = arith.addf %570, %594 : vector<2x256xf32>
    %c77 = arith.constant 77 : index
    %596 = memref.load %arg1[%c77] : memref<162xf32, #tpu.memory_space<smem>>
    %597 = vector.broadcast %596 : f32 to vector<2x256xf32>
    %598 = arith.mulf %597, %587 : vector<2x256xf32>
    %599 = arith.addf %574, %598 : vector<2x256xf32>
    %c104 = arith.constant 104 : index
    %600 = memref.load %arg1[%c104] : memref<162xf32, #tpu.memory_space<smem>>
    %601 = vector.broadcast %600 : f32 to vector<2x256xf32>
    %602 = arith.mulf %601, %587 : vector<2x256xf32>
    %603 = arith.addf %578, %602 : vector<2x256xf32>
    %c131 = arith.constant 131 : index
    %604 = memref.load %arg1[%c131] : memref<162xf32, #tpu.memory_space<smem>>
    %605 = vector.broadcast %604 : f32 to vector<2x256xf32>
    %606 = arith.mulf %605, %587 : vector<2x256xf32>
    %607 = arith.addf %582, %606 : vector<2x256xf32>
    %c158 = arith.constant 158 : index
    %608 = memref.load %arg1[%c158] : memref<162xf32, #tpu.memory_space<smem>>
    %609 = vector.broadcast %608 : f32 to vector<2x256xf32>
    %610 = arith.mulf %609, %587 : vector<2x256xf32>
    %611 = arith.addf %586, %610 : vector<2x256xf32>
    %612 = vector.extract_strided_slice %461 {offsets = [0, 32], sizes = [2, 256], strides = [1, 1]} : vector<2x384xf32> to vector<2x256xf32>
    %c24 = arith.constant 24 : index
    %613 = memref.load %arg1[%c24] : memref<162xf32, #tpu.memory_space<smem>>
    %614 = vector.broadcast %613 : f32 to vector<2x256xf32>
    %615 = arith.mulf %614, %612 : vector<2x256xf32>
    %616 = arith.addf %591, %615 : vector<2x256xf32>
    %c51 = arith.constant 51 : index
    %617 = memref.load %arg1[%c51] : memref<162xf32, #tpu.memory_space<smem>>
    %618 = vector.broadcast %617 : f32 to vector<2x256xf32>
    %619 = arith.mulf %618, %612 : vector<2x256xf32>
    %620 = arith.addf %595, %619 : vector<2x256xf32>
    %c78 = arith.constant 78 : index
    %621 = memref.load %arg1[%c78] : memref<162xf32, #tpu.memory_space<smem>>
    %622 = vector.broadcast %621 : f32 to vector<2x256xf32>
    %623 = arith.mulf %622, %612 : vector<2x256xf32>
    %624 = arith.addf %599, %623 : vector<2x256xf32>
    %c105 = arith.constant 105 : index
    %625 = memref.load %arg1[%c105] : memref<162xf32, #tpu.memory_space<smem>>
    %626 = vector.broadcast %625 : f32 to vector<2x256xf32>
    %627 = arith.mulf %626, %612 : vector<2x256xf32>
    %628 = arith.addf %603, %627 : vector<2x256xf32>
    %c132 = arith.constant 132 : index
    %629 = memref.load %arg1[%c132] : memref<162xf32, #tpu.memory_space<smem>>
    %630 = vector.broadcast %629 : f32 to vector<2x256xf32>
    %631 = arith.mulf %630, %612 : vector<2x256xf32>
    %632 = arith.addf %607, %631 : vector<2x256xf32>
    %c159 = arith.constant 159 : index
    %633 = memref.load %arg1[%c159] : memref<162xf32, #tpu.memory_space<smem>>
    %634 = vector.broadcast %633 : f32 to vector<2x256xf32>
    %635 = arith.mulf %634, %612 : vector<2x256xf32>
    %636 = arith.addf %611, %635 : vector<2x256xf32>
    %637 = vector.extract_strided_slice %461 {offsets = [0, 33], sizes = [2, 256], strides = [1, 1]} : vector<2x384xf32> to vector<2x256xf32>
    %c25 = arith.constant 25 : index
    %638 = memref.load %arg1[%c25] : memref<162xf32, #tpu.memory_space<smem>>
    %639 = vector.broadcast %638 : f32 to vector<2x256xf32>
    %640 = arith.mulf %639, %637 : vector<2x256xf32>
    %641 = arith.addf %616, %640 : vector<2x256xf32>
    %c52 = arith.constant 52 : index
    %642 = memref.load %arg1[%c52] : memref<162xf32, #tpu.memory_space<smem>>
    %643 = vector.broadcast %642 : f32 to vector<2x256xf32>
    %644 = arith.mulf %643, %637 : vector<2x256xf32>
    %645 = arith.addf %620, %644 : vector<2x256xf32>
    %c79 = arith.constant 79 : index
    %646 = memref.load %arg1[%c79] : memref<162xf32, #tpu.memory_space<smem>>
    %647 = vector.broadcast %646 : f32 to vector<2x256xf32>
    %648 = arith.mulf %647, %637 : vector<2x256xf32>
    %649 = arith.addf %624, %648 : vector<2x256xf32>
    %c106 = arith.constant 106 : index
    %650 = memref.load %arg1[%c106] : memref<162xf32, #tpu.memory_space<smem>>
    %651 = vector.broadcast %650 : f32 to vector<2x256xf32>
    %652 = arith.mulf %651, %637 : vector<2x256xf32>
    %653 = arith.addf %628, %652 : vector<2x256xf32>
    %c133 = arith.constant 133 : index
    %654 = memref.load %arg1[%c133] : memref<162xf32, #tpu.memory_space<smem>>
    %655 = vector.broadcast %654 : f32 to vector<2x256xf32>
    %656 = arith.mulf %655, %637 : vector<2x256xf32>
    %657 = arith.addf %632, %656 : vector<2x256xf32>
    %c160 = arith.constant 160 : index
    %658 = memref.load %arg1[%c160] : memref<162xf32, #tpu.memory_space<smem>>
    %659 = vector.broadcast %658 : f32 to vector<2x256xf32>
    %660 = arith.mulf %659, %637 : vector<2x256xf32>
    %661 = arith.addf %636, %660 : vector<2x256xf32>
    %662 = vector.extract_strided_slice %461 {offsets = [0, 34], sizes = [2, 256], strides = [1, 1]} : vector<2x384xf32> to vector<2x256xf32>
    %c26 = arith.constant 26 : index
    %663 = memref.load %arg1[%c26] : memref<162xf32, #tpu.memory_space<smem>>
    %664 = vector.broadcast %663 : f32 to vector<2x256xf32>
    %665 = arith.mulf %664, %662 : vector<2x256xf32>
    %666 = arith.addf %641, %665 : vector<2x256xf32>
    %c53 = arith.constant 53 : index
    %667 = memref.load %arg1[%c53] : memref<162xf32, #tpu.memory_space<smem>>
    %668 = vector.broadcast %667 : f32 to vector<2x256xf32>
    %669 = arith.mulf %668, %662 : vector<2x256xf32>
    %670 = arith.addf %645, %669 : vector<2x256xf32>
    %c80 = arith.constant 80 : index
    %671 = memref.load %arg1[%c80] : memref<162xf32, #tpu.memory_space<smem>>
    %672 = vector.broadcast %671 : f32 to vector<2x256xf32>
    %673 = arith.mulf %672, %662 : vector<2x256xf32>
    %674 = arith.addf %649, %673 : vector<2x256xf32>
    %c107 = arith.constant 107 : index
    %675 = memref.load %arg1[%c107] : memref<162xf32, #tpu.memory_space<smem>>
    %676 = vector.broadcast %675 : f32 to vector<2x256xf32>
    %677 = arith.mulf %676, %662 : vector<2x256xf32>
    %678 = arith.addf %653, %677 : vector<2x256xf32>
    %c134 = arith.constant 134 : index
    %679 = memref.load %arg1[%c134] : memref<162xf32, #tpu.memory_space<smem>>
    %680 = vector.broadcast %679 : f32 to vector<2x256xf32>
    %681 = arith.mulf %680, %662 : vector<2x256xf32>
    %682 = arith.addf %657, %681 : vector<2x256xf32>
    %c161 = arith.constant 161 : index
    %683 = memref.load %arg1[%c161] : memref<162xf32, #tpu.memory_space<smem>>
    %684 = vector.broadcast %683 : f32 to vector<2x256xf32>
    %685 = arith.mulf %684, %662 : vector<2x256xf32>
    %686 = arith.addf %661, %685 : vector<2x256xf32>
    %c0_14 = arith.constant 0 : index
    %687 = memref.load %arg2[%c0_14] : memref<6xf32, #tpu.memory_space<smem>>
    %688 = vector.broadcast %687 : f32 to vector<2x256xf32>
    %689 = arith.addf %666, %688 : vector<2x256xf32>
    %c0_15 = arith.constant 0 : index
    %c0_16 = arith.constant 0 : index
    %c0_17 = arith.constant 0 : index
    %690 = vector.load %arg3[%c0_15, %c0_16, %c0_17] : memref<2x6x256xf32, #tpu.memory_space<vmem>>, vector<2x1x256xf32>
    %691 = vector.shape_cast %690 : vector<2x1x256xf32> to vector<2x256xf32>
    %692 = vector.shape_cast %689 : vector<2x256xf32> to vector<2x1x256xf32>
    tpu.vector_store %arg3[%c0_15, %c0_16, %c0_17], %692 {strides = array<i32>} : memref<2x6x256xf32, #tpu.memory_space<vmem>>, vector<2x1x256xf32>,
    %c1_18 = arith.constant 1 : index
    %693 = memref.load %arg2[%c1_18] : memref<6xf32, #tpu.memory_space<smem>>
    %694 = vector.broadcast %693 : f32 to vector<2x256xf32>
    %695 = arith.addf %670, %694 : vector<2x256xf32>
    %c0_19 = arith.constant 0 : index
    %c1_20 = arith.constant 1 : index
    %c0_21 = arith.constant 0 : index
    %696 = vector.load %arg3[%c0_19, %c1_20, %c0_21] : memref<2x6x256xf32, #tpu.memory_space<vmem>>, vector<2x1x256xf32>
    %697 = vector.shape_cast %696 : vector<2x1x256xf32> to vector<2x256xf32>
    %698 = vector.shape_cast %695 : vector<2x256xf32> to vector<2x1x256xf32>
    tpu.vector_store %arg3[%c0_19, %c1_20, %c0_21], %698 {strides = array<i32>} : memref<2x6x256xf32, #tpu.memory_space<vmem>>, vector<2x1x256xf32>,
    %c2_22 = arith.constant 2 : index
    %699 = memref.load %arg2[%c2_22] : memref<6xf32, #tpu.memory_space<smem>>
    %700 = vector.broadcast %699 : f32 to vector<2x256xf32>
    %701 = arith.addf %674, %700 : vector<2x256xf32>
    %c0_23 = arith.constant 0 : index
    %c2_24 = arith.constant 2 : index
    %c0_25 = arith.constant 0 : index
    %702 = vector.load %arg3[%c0_23, %c2_24, %c0_25] : memref<2x6x256xf32, #tpu.memory_space<vmem>>, vector<2x1x256xf32>
    %703 = vector.shape_cast %702 : vector<2x1x256xf32> to vector<2x256xf32>
    %704 = vector.shape_cast %701 : vector<2x256xf32> to vector<2x1x256xf32>
    tpu.vector_store %arg3[%c0_23, %c2_24, %c0_25], %704 {strides = array<i32>} : memref<2x6x256xf32, #tpu.memory_space<vmem>>, vector<2x1x256xf32>,
    %c3_26 = arith.constant 3 : index
    %705 = memref.load %arg2[%c3_26] : memref<6xf32, #tpu.memory_space<smem>>
    %706 = vector.broadcast %705 : f32 to vector<2x256xf32>
    %707 = arith.addf %678, %706 : vector<2x256xf32>
    %c0_27 = arith.constant 0 : index
    %c3_28 = arith.constant 3 : index
    %c0_29 = arith.constant 0 : index
    %708 = vector.load %arg3[%c0_27, %c3_28, %c0_29] : memref<2x6x256xf32, #tpu.memory_space<vmem>>, vector<2x1x256xf32>
    %709 = vector.shape_cast %708 : vector<2x1x256xf32> to vector<2x256xf32>
    %710 = vector.shape_cast %707 : vector<2x256xf32> to vector<2x1x256xf32>
    tpu.vector_store %arg3[%c0_27, %c3_28, %c0_29], %710 {strides = array<i32>} : memref<2x6x256xf32, #tpu.memory_space<vmem>>, vector<2x1x256xf32>,
    %c4_30 = arith.constant 4 : index
    %711 = memref.load %arg2[%c4_30] : memref<6xf32, #tpu.memory_space<smem>>
    %712 = vector.broadcast %711 : f32 to vector<2x256xf32>
    %713 = arith.addf %682, %712 : vector<2x256xf32>
    %c0_31 = arith.constant 0 : index
    %c4_32 = arith.constant 4 : index
    %c0_33 = arith.constant 0 : index
    %714 = vector.load %arg3[%c0_31, %c4_32, %c0_33] : memref<2x6x256xf32, #tpu.memory_space<vmem>>, vector<2x1x256xf32>
    %715 = vector.shape_cast %714 : vector<2x1x256xf32> to vector<2x256xf32>
    %716 = vector.shape_cast %713 : vector<2x256xf32> to vector<2x1x256xf32>
    tpu.vector_store %arg3[%c0_31, %c4_32, %c0_33], %716 {strides = array<i32>} : memref<2x6x256xf32, #tpu.memory_space<vmem>>, vector<2x1x256xf32>,
    %c5_34 = arith.constant 5 : index
    %717 = memref.load %arg2[%c5_34] : memref<6xf32, #tpu.memory_space<smem>>
    %718 = vector.broadcast %717 : f32 to vector<2x256xf32>
    %719 = arith.addf %686, %718 : vector<2x256xf32>
    %c0_35 = arith.constant 0 : index
    %c5_36 = arith.constant 5 : index
    %c0_37 = arith.constant 0 : index
    %720 = vector.load %arg3[%c0_35, %c5_36, %c0_37] : memref<2x6x256xf32, #tpu.memory_space<vmem>>, vector<2x1x256xf32>
    %721 = vector.shape_cast %720 : vector<2x1x256xf32> to vector<2x256xf32>
    %722 = vector.shape_cast %719 : vector<2x256xf32> to vector<2x1x256xf32>
    tpu.vector_store %arg3[%c0_35, %c5_36, %c0_37], %722 {strides = array<i32>} : memref<2x6x256xf32, #tpu.memory_space<vmem>>, vector<2x1x256xf32>,
    return
  }
}

</mosaic_0001>

<llo_original>
// kernel: conv2d_pallas.1
$region0: #{conv2d_pallas.1}
  #allocation0 [shape = 'u32[]', space=smem, size = 0x4, offset = 0x4, fixed_abs, tag = 'smem constant byte address 0x4 - core index']
  #allocation1 [shape = 'u32[144,128]{1,0:T(1,128)}', space=vmem, size = 0x12000, scoped, tag = 'internal scratch']
  %s0 = inlined_call_operand.vmem [shape: f32[2,3,384], index: 0, kind: input, shape index: {}]
  %s1 = inlined_call_operand.vmem [shape: f32[162], index: 1, kind: input, shape index: {}]
  %s2 = inlined_call_operand.vmem [shape: f32[6], index: 2, kind: input, shape index: {}]
  %s3 = inlined_call_operand.vmem [shape: f32[2,6,256], index: 3, kind: output, shape index: {}]
  %s4 = sld [smem:[#allocation0]]
  $region30: #{conv2d_pallas.1} parent=0
    _
  %s6 = ssub.s32 1, %s4
  %s7 = scalar_select 0, %s6, %s4
  $region1: #{conv2d_pallas.1} parent=0
    #allocation2 [shape = 'u8[1024]{0}', space=smem, size = 0x400, scoped, tag = 'input window, operand 1, single buffered']
    #allocation3 [shape = 's32[1]{0}', space=sflag, size = 0x4, scoped, tag = 'scoped memory for conv2d_pallas.1']
    #allocation4 [shape = 'u8[512]{0}', space=smem, size = 0x200, scoped, tag = 'input window, operand 2, single buffered']
    #allocation5 [shape = 's32[1]{0}', space=sflag, size = 0x4, scoped, tag = 'scoped memory for conv2d_pallas.1']
    %8 = vsyncpa [#allocation3], 0
    %9 = vsyncpa [#allocation5], 0
    // Predicated region
    $region2: #{conv2d_pallas.1} parent=1 // pred_check
      _
    $region3: #{conv2d_pallas.1} parent=1 // pred_check_branch
      %11 = sbr.rel (0) target = $region5
    $region4: #{conv2d_pallas.1} parent=1 // pred_region
      _
    $region5: #{conv2d_pallas.1} parent=1 // pred_fallthru
      _
    // Predicated region
    $region6: #{conv2d_pallas.1} parent=1 // pred_check
      _
    $region7: #{conv2d_pallas.1} parent=1 // pred_check_branch
      %13 = sbr.rel (0) target = $region9
    $region8: #{conv2d_pallas.1} parent=1 // pred_region
      %s15 = ssub.s32 32, 32
      %16 = vsyncadd [#allocation3], %s15
      %s18 = sshll.u32 %s1, 4
      %s19 = int_to_ptr.vmem [resolvable:$true] %s18
      %21 = dma.vmem_to_smem %s19, 32, [#allocation2], [#allocation3]
    $region9: #{conv2d_pallas.1} parent=1 // pred_fallthru
      _
    // Predicated region
    $region10: #{conv2d_pallas.1} parent=1 // pred_check
      _
    $region11: #{conv2d_pallas.1} parent=1 // pred_check_branch
      %23 = sbr.rel (0) target = $region13
    $region12: #{conv2d_pallas.1} parent=1 // pred_region
      %s25 = ssub.s32 16, 16
      %26 = vsyncadd [#allocation5], %s25
      %s28 = sshll.u32 %s2, 4
      %s29 = int_to_ptr.vmem [resolvable:$true] %s28
      %31 = dma.vmem_to_smem %s29, 16, [#allocation4], [#allocation5]
    $region13: #{conv2d_pallas.1} parent=1 // pred_fallthru
      _
    // Predicated region
    $region14: #{conv2d_pallas.1} parent=1 // pred_check
      _
    $region15: #{conv2d_pallas.1} parent=1 // pred_check_branch
      %33 = sbr.rel (0) target = $region17
    $region16: #{conv2d_pallas.1} parent=1 // pred_region
      %34 = dma.done [#allocation3], 32
    $region17: #{conv2d_pallas.1} parent=1 // pred_fallthru
      _
    // Predicated region
    $region18: #{conv2d_pallas.1} parent=1 // pred_check
      _
    $region19: #{conv2d_pallas.1} parent=1 // pred_check_branch
      %36 = sbr.rel (0) target = $region21
    $region20: #{conv2d_pallas.1} parent=1 // pred_region
      %37 = dma.done [#allocation5], 16
    $region21: #{conv2d_pallas.1} parent=1 // pred_fallthru
      _
    %38 = sfence
    %v39 = vld [vmem:[%s0] ss:$4 sm:$0x7]
    %s40 = scalar_lea.vmem %s0, 12
    %v41 = vld [vmem:[%s40] ss:$4 sm:$0x7]
    %s42 = sld [smem:[#allocation2]]
    %v43 = vstv %s42
    %v44 = vmul.f32 %v43, %v39
    %v45 = vmul.f32 %v43, %v41
    %v46 = vadd.f32 %v44, 0.0
    %v47 = vadd.f32 %v45, 0.0
    %s48 = sld [smem:[#allocation2 + $0x1b]]
    %v49 = vstv %s48
    %v50 = vmul.f32 %v49, %v39
    %v51 = vmul.f32 %v49, %v41
    %v52 = vadd.f32 %v50, 0.0
    %v53 = vadd.f32 %v51, 0.0
    %s54 = sld [smem:[#allocation2 + $0x36]]
    %v55 = vstv %s54
    %v56 = vmul.f32 %v55, %v39
    %v57 = vmul.f32 %v55, %v41
    %v58 = vadd.f32 %v56, 0.0
    %v59 = vadd.f32 %v57, 0.0
    %s60 = sld [smem:[#allocation2 + $0x51]]
    %v61 = vstv %s60
    %v62 = vmul.f32 %v61, %v39
    %v63 = vmul.f32 %v61, %v41
    %v64 = vadd.f32 %v62, 0.0
    %v65 = vadd.f32 %v63, 0.0
    %s66 = sld [smem:[#allocation2 + $0x6c]]
    %v67 = vstv %s66
    %v68 = vmul.f32 %v67, %v39
    %v69 = vmul.f32 %v67, %v41
    %v70 = vadd.f32 %v68, 0.0
    %v71 = vadd.f32 %v69, 0.0
    %s72 = sld [smem:[#allocation2 + $0x87]]
    %v73 = vstv %s72
    %v74 = vmul.f32 %v73, %v39
    %v75 = vmul.f32 %v73, %v41
    %v76 = vadd.f32 %v74, 0.0
    %v77 = vadd.f32 %v75, 0.0
    %s78 = sld [smem:[#allocation2 + $0x1]]
    %v79 = vstv %s78
    %v80 = vmul.f32 %v79, %v39
    %v81 = vmul.f32 %v79, %v41
    %84 = vrot.lane.b32.xlu0 %v80, 127
    %v85 = vpop.permute.xlu0 %84
    %86 = vrot.lane.b32.xlu0 %v81, 127
    %v87 = vpop.permute.xlu0 %86
    %v88 = vrot.slane %v85, 1
    %v89 = vrot.slane %v87, 1
    %vm90 = vcmask 1039360
    %v91 = vsel %vm90, %v85, %v88
    %v92 = vsel %vm90, %v87, %v89
    %v95 = vadd.f32 %v46, %v91
    %v96 = vadd.f32 %v47, %v92
    %s97 = sld [smem:[#allocation2 + $0x1c]]
    %v98 = vstv %s97
    %v99 = vmul.f32 %v98, %v39
    %v100 = vmul.f32 %v98, %v41
    %103 = vrot.lane.b32.xlu0 %v99, 127
    %v104 = vpop.permute.xlu0 %103
    %105 = vrot.lane.b32.xlu0 %v100, 127
    %v106 = vpop.permute.xlu0 %105
    %v107 = vrot.slane %v104, 1
    %v108 = vrot.slane %v106, 1
    %v109 = vsel %vm90, %v104, %v107
    %v110 = vsel %vm90, %v106, %v108
    %v113 = vadd.f32 %v52, %v109
    %v114 = vadd.f32 %v53, %v110
    %s115 = sld [smem:[#allocation2 + $0x37]]
    %v116 = vstv %s115
    %v117 = vmul.f32 %v116, %v39
    %v118 = vmul.f32 %v116, %v41
    %121 = vrot.lane.b32.xlu0 %v117, 127
    %v122 = vpop.permute.xlu0 %121
    %123 = vrot.lane.b32.xlu0 %v118, 127
    %v124 = vpop.permute.xlu0 %123
    %v125 = vrot.slane %v122, 1
    %v126 = vrot.slane %v124, 1
    %v127 = vsel %vm90, %v122, %v125
    %v128 = vsel %vm90, %v124, %v126
    %v131 = vadd.f32 %v58, %v127
    %v132 = vadd.f32 %v59, %v128
    %s133 = sld [smem:[#allocation2 + $0x52]]
    %v134 = vstv %s133
    %v135 = vmul.f32 %v134, %v39
    %v136 = vmul.f32 %v134, %v41
    %139 = vrot.lane.b32.xlu0 %v135, 127
    %v140 = vpop.permute.xlu0 %139
    %141 = vrot.lane.b32.xlu0 %v136, 127
    %v142 = vpop.permute.xlu0 %141
    %v143 = vrot.slane %v140, 1
    %v144 = vrot.slane %v142, 1
    %v145 = vsel %vm90, %v140, %v143
    %v146 = vsel %vm90, %v142, %v144
    %v149 = vadd.f32 %v64, %v145
    %v150 = vadd.f32 %v65, %v146
    %s151 = sld [smem:[#allocation2 + $0x6d]]
    %v152 = vstv %s151
    %v153 = vmul.f32 %v152, %v39
    %v154 = vmul.f32 %v152, %v41
    %157 = vrot.lane.b32.xlu0 %v153, 127
    %v158 = vpop.permute.xlu0 %157
    %159 = vrot.lane.b32.xlu0 %v154, 127
    %v160 = vpop.permute.xlu0 %159
    %v161 = vrot.slane %v158, 1
    %v162 = vrot.slane %v160, 1
    %v163 = vsel %vm90, %v158, %v161
    %v164 = vsel %vm90, %v160, %v162
    %v167 = vadd.f32 %v70, %v163
    %v168 = vadd.f32 %v71, %v164
    %s169 = sld [smem:[#allocation2 + $0x88]]
    %v170 = vstv %s169
    %v171 = vmul.f32 %v170, %v39
    %v172 = vmul.f32 %v170, %v41
    %175 = vrot.lane.b32.xlu0 %v171, 127
    %v176 = vpop.permute.xlu0 %175
    %177 = vrot.lane.b32.xlu0 %v172, 127
    %v178 = vpop.permute.xlu0 %177
    %v179 = vrot.slane %v176, 1
    %v180 = vrot.slane %v178, 1
    %v181 = vsel %vm90, %v176, %v179
    %v182 = vsel %vm90, %v178, %v180
    %v185 = vadd.f32 %v76, %v181
    %v186 = vadd.f32 %v77, %v182
    %s187 = sld [smem:[#allocation2 + $0x2]]
    %v188 = vstv %s187
    %v189 = vmul.f32 %v188, %v39
    %v190 = vmul.f32 %v188, %v41
    %193 = vrot.lane.b32.xlu0 %v189, 126
    %v194 = vpop.permute.xlu0 %193
    %195 = vrot.lane.b32.xlu0 %v190, 126
    %v196 = vpop.permute.xlu0 %195
    %v197 = vrot.slane %v194, 1
    %v198 = vrot.slane %v196, 1
    %vm199 = vcmask 1031168
    %v200 = vsel %vm199, %v194, %v197
    %v201 = vsel %vm199, %v196, %v198
    %v204 = vadd.f32 %v95, %v200
    %v205 = vadd.f32 %v96, %v201
    %s206 = sld [smem:[#allocation2 + $0x1d]]
    %v207 = vstv %s206
    %v208 = vmul.f32 %v207, %v39
    %v209 = vmul.f32 %v207, %v41
    %212 = vrot.lane.b32.xlu0 %v208, 126
    %v213 = vpop.permute.xlu0 %212
    %214 = vrot.lane.b32.xlu0 %v209, 126
    %v215 = vpop.permute.xlu0 %214
    %v216 = vrot.slane %v213, 1
    %v217 = vrot.slane %v215, 1
    %v218 = vsel %vm199, %v213, %v216
    %v219 = vsel %vm199, %v215, %v217
    %v222 = vadd.f32 %v113, %v218
    %v223 = vadd.f32 %v114, %v219
    %s224 = sld [smem:[#allocation2 + $0x38]]
    %v225 = vstv %s224
    %v226 = vmul.f32 %v225, %v39
    %v227 = vmul.f32 %v225, %v41
    %230 = vrot.lane.b32.xlu0 %v226, 126
    %v231 = vpop.permute.xlu0 %230
    %232 = vrot.lane.b32.xlu0 %v227, 126
    %v233 = vpop.permute.xlu0 %232
    %v234 = vrot.slane %v231, 1
    %v235 = vrot.slane %v233, 1
    %v236 = vsel %vm199, %v231, %v234
    %v237 = vsel %vm199, %v233, %v235
    %v240 = vadd.f32 %v131, %v236
    %v241 = vadd.f32 %v132, %v237
    %s242 = sld [smem:[#allocation2 + $0x53]]
    %v243 = vstv %s242
    %v244 = vmul.f32 %v243, %v39
    %v245 = vmul.f32 %v243, %v41
    %248 = vrot.lane.b32.xlu0 %v244, 126
    %v249 = vpop.permute.xlu0 %248
    %250 = vrot.lane.b32.xlu0 %v245, 126
    %v251 = vpop.permute.xlu0 %250
    %v252 = vrot.slane %v249, 1
    %v253 = vrot.slane %v251, 1
    %v254 = vsel %vm199, %v249, %v252
    %v255 = vsel %vm199, %v251, %v253
    %v258 = vadd.f32 %v149, %v254
    %v259 = vadd.f32 %v150, %v255
    %s260 = sld [smem:[#allocation2 + $0x6e]]
    %v261 = vstv %s260
    %v262 = vmul.f32 %v261, %v39
    %v263 = vmul.f32 %v261, %v41
    %266 = vrot.lane.b32.xlu0 %v262, 126
    %v267 = vpop.permute.xlu0 %266
    %268 = vrot.lane.b32.xlu0 %v263, 126
    %v269 = vpop.permute.xlu0 %268
    %v270 = vrot.slane %v267, 1
    %v271 = vrot.slane %v269, 1
    %v272 = vsel %vm199, %v267, %v270
    %v273 = vsel %vm199, %v269, %v271
    %v276 = vadd.f32 %v167, %v272
    %v277 = vadd.f32 %v168, %v273
    %s278 = sld [smem:[#allocation2 + $0x89]]
    %v279 = vstv %s278
    %v280 = vmul.f32 %v279, %v39
    %v281 = vmul.f32 %v279, %v41
    %284 = vrot.lane.b32.xlu0 %v280, 126
    %v285 = vpop.permute.xlu0 %284
    %286 = vrot.lane.b32.xlu0 %v281, 126
    %v287 = vpop.permute.xlu0 %286
    %v288 = vrot.slane %v285, 1
    %v289 = vrot.slane %v287, 1
    %v290 = vsel %vm199, %v285, %v288
    %v291 = vsel %vm199, %v287, %v289
    %v294 = vadd.f32 %v185, %v290
    %v295 = vadd.f32 %v186, %v291
    %s296 = sld [smem:[#allocation2 + $0x3]]
    %v297 = vstv %s296
    %v298 = vmul.f32 %v297, %v39
    %v299 = vmul.f32 %v297, %v41
    %302 = vrot.lane.b32.xlu0 %v298, 112
    %v303 = vpop.permute.xlu0 %302
    %304 = vrot.lane.b32.xlu0 %v299, 112
    %v305 = vpop.permute.xlu0 %304
    %v306 = vrot.slane %v303, 1
    %v307 = vrot.slane %v305, 1
    %vm308 = vcmask 916480
    %v309 = vsel %vm308, %v303, %v306
    %v310 = vsel %vm308, %v305, %v307
    %v313 = vadd.f32 %v204, %v309
    %v314 = vadd.f32 %v205, %v310
    %s315 = sld [smem:[#allocation2 + $0x1e]]
    %v316 = vstv %s315
    %v317 = vmul.f32 %v316, %v39
    %v318 = vmul.f32 %v316, %v41
    %321 = vrot.lane.b32.xlu0 %v317, 112
    %v322 = vpop.permute.xlu0 %321
    %323 = vrot.lane.b32.xlu0 %v318, 112
    %v324 = vpop.permute.xlu0 %323
    %v325 = vrot.slane %v322, 1
    %v326 = vrot.slane %v324, 1
    %v327 = vsel %vm308, %v322, %v325
    %v328 = vsel %vm308, %v324, %v326
    %v331 = vadd.f32 %v222, %v327
    %v332 = vadd.f32 %v223, %v328
    %s333 = sld [smem:[#allocation2 + $0x39]]
    %v334 = vstv %s333
    %v335 = vmul.f32 %v334, %v39
    %v336 = vmul.f32 %v334, %v41
    %339 = vrot.lane.b32.xlu0 %v335, 112
    %v340 = vpop.permute.xlu0 %339
    %341 = vrot.lane.b32.xlu0 %v336, 112
    %v342 = vpop.permute.xlu0 %341
    %v343 = vrot.slane %v340, 1
    %v344 = vrot.slane %v342, 1
    %v345 = vsel %vm308, %v340, %v343
    %v346 = vsel %vm308, %v342, %v344
    %v349 = vadd.f32 %v240, %v345
    %v350 = vadd.f32 %v241, %v346
    %s351 = sld [smem:[#allocation2 + $0x54]]
    %v352 = vstv %s351
    %v353 = vmul.f32 %v352, %v39
    %v354 = vmul.f32 %v352, %v41
    %357 = vrot.lane.b32.xlu0 %v353, 112
    %v358 = vpop.permute.xlu0 %357
    %359 = vrot.lane.b32.xlu0 %v354, 112
    %v360 = vpop.permute.xlu0 %359
    %v361 = vrot.slane %v358, 1
    %v362 = vrot.slane %v360, 1
    %v363 = vsel %vm308, %v358, %v361
    %v364 = vsel %vm308, %v360, %v362
    %v367 = vadd.f32 %v258, %v363
    %v368 = vadd.f32 %v259, %v364
    %s369 = sld [smem:[#allocation2 + $0x6f]]
    %v370 = vstv %s369
    %v371 = vmul.f32 %v370, %v39
    %v372 = vmul.f32 %v370, %v41
    %375 = vrot.lane.b32.xlu0 %v371, 112
    %v376 = vpop.permute.xlu0 %375
    %377 = vrot.lane.b32.xlu0 %v372, 112
    %v378 = vpop.permute.xlu0 %377
    %v379 = vrot.slane %v376, 1
    %v380 = vrot.slane %v378, 1
    %v381 = vsel %vm308, %v376, %v379
    %v382 = vsel %vm308, %v378, %v380
    %v385 = vadd.f32 %v276, %v381
    %v386 = vadd.f32 %v277, %v382
    %s387 = sld [smem:[#allocation2 + $0x8a]]
    %v388 = vstv %s387
    %v389 = vmul.f32 %v388, %v39
    %v390 = vmul.f32 %v388, %v41
    %393 = vrot.lane.b32.xlu0 %v389, 112
    %v394 = vpop.permute.xlu0 %393
    %395 = vrot.lane.b32.xlu0 %v390, 112
    %v396 = vpop.permute.xlu0 %395
    %v397 = vrot.slane %v394, 1
    %v398 = vrot.slane %v396, 1
    %v399 = vsel %vm308, %v394, %v397
    %v400 = vsel %vm308, %v396, %v398
    %v403 = vadd.f32 %v294, %v399
    %v404 = vadd.f32 %v295, %v400
    %s405 = sld [smem:[#allocation2 + $0x4]]
    %v406 = vstv %s405
    %v407 = vmul.f32 %v406, %v39
    %v408 = vmul.f32 %v406, %v41
    %411 = vrot.lane.b32.xlu0 %v407, 111
    %v412 = vpop.permute.xlu0 %411
    %413 = vrot.lane.b32.xlu0 %v408, 111
    %v414 = vpop.permute.xlu0 %413
    %v415 = vrot.slane %v412, 1
    %v416 = vrot.slane %v414, 1
    %vm417 = vcmask 908288
    %v418 = vsel %vm417, %v412, %v415
    %v419 = vsel %vm417, %v414, %v416
    %v422 = vadd.f32 %v313, %v418
    %v423 = vadd.f32 %v314, %v419
    %s424 = sld [smem:[#allocation2 + $0x1f]]
    %v425 = vstv %s424
    %v426 = vmul.f32 %v425, %v39
    %v427 = vmul.f32 %v425, %v41
    %430 = vrot.lane.b32.xlu0 %v426, 111
    %v431 = vpop.permute.xlu0 %430
    %432 = vrot.lane.b32.xlu0 %v427, 111
    %v433 = vpop.permute.xlu0 %432
    %v434 = vrot.slane %v431, 1
    %v435 = vrot.slane %v433, 1
    %v436 = vsel %vm417, %v431, %v434
    %v437 = vsel %vm417, %v433, %v435
    %v440 = vadd.f32 %v331, %v436
    %v441 = vadd.f32 %v332, %v437
    %s442 = sld [smem:[#allocation2 + $0x3a]]
    %v443 = vstv %s442
    %v444 = vmul.f32 %v443, %v39
    %v445 = vmul.f32 %v443, %v41
    %448 = vrot.lane.b32.xlu0 %v444, 111
    %v449 = vpop.permute.xlu0 %448
    %450 = vrot.lane.b32.xlu0 %v445, 111
    %v451 = vpop.permute.xlu0 %450
    %v452 = vrot.slane %v449, 1
    %v453 = vrot.slane %v451, 1
    %v454 = vsel %vm417, %v449, %v452
    %v455 = vsel %vm417, %v451, %v453
    %v458 = vadd.f32 %v349, %v454
    %v459 = vadd.f32 %v350, %v455
    %s460 = sld [smem:[#allocation2 + $0x55]]
    %v461 = vstv %s460
    %v462 = vmul.f32 %v461, %v39
    %v463 = vmul.f32 %v461, %v41
    %466 = vrot.lane.b32.xlu0 %v462, 111
    %v467 = vpop.permute.xlu0 %466
    %468 = vrot.lane.b32.xlu0 %v463, 111
    %v469 = vpop.permute.xlu0 %468
    %v470 = vrot.slane %v467, 1
    %v471 = vrot.slane %v469, 1
    %v472 = vsel %vm417, %v467, %v470
    %v473 = vsel %vm417, %v469, %v471
    %v476 = vadd.f32 %v367, %v472
    %v477 = vadd.f32 %v368, %v473
    %s478 = sld [smem:[#allocation2 + $0x70]]
    %v479 = vstv %s478
    %v480 = vmul.f32 %v479, %v39
    %v481 = vmul.f32 %v479, %v41
    %484 = vrot.lane.b32.xlu0 %v480, 111
    %v485 = vpop.permute.xlu0 %484
    %486 = vrot.lane.b32.xlu0 %v481, 111
    %v487 = vpop.permute.xlu0 %486
    %v488 = vrot.slane %v485, 1
    %v489 = vrot.slane %v487, 1
    %v490 = vsel %vm417, %v485, %v488
    %v491 = vsel %vm417, %v487, %v489
    %v494 = vadd.f32 %v385, %v490
    %v495 = vadd.f32 %v386, %v491
    %s496 = sld [smem:[#allocation2 + $0x8b]]
    %v497 = vstv %s496
    %v498 = vmul.f32 %v497, %v39
    %v499 = vmul.f32 %v497, %v41
    %502 = vrot.lane.b32.xlu0 %v498, 111
    %v503 = vpop.permute.xlu0 %502
    %504 = vrot.lane.b32.xlu0 %v499, 111
    %v505 = vpop.permute.xlu0 %504
    %v506 = vrot.slane %v503, 1
    %v507 = vrot.slane %v505, 1
    %v508 = vsel %vm417, %v503, %v506
    %v509 = vsel %vm417, %v505, %v507
    %v512 = vadd.f32 %v403, %v508
    %v513 = vadd.f32 %v404, %v509
    %s514 = sld [smem:[#allocation2 + $0x5]]
    %v515 = vstv %s514
    %v516 = vmul.f32 %v515, %v39
    %v517 = vmul.f32 %v515, %v41
    %520 = vrot.lane.b32.xlu0 %v516, 110
    %v521 = vpop.permute.xlu0 %520
    %522 = vrot.lane.b32.xlu0 %v517, 110
    %v523 = vpop.permute.xlu0 %522
    %v524 = vrot.slane %v521, 1
    %v525 = vrot.slane %v523, 1
    %vm526 = vcmask 900096
    %v527 = vsel %vm526, %v521, %v524
    %v528 = vsel %vm526, %v523, %v525
    %v531 = vadd.f32 %v422, %v527
    %v532 = vadd.f32 %v423, %v528
    %s533 = sld [smem:[#allocation2 + $0x20]]
    %v534 = vstv %s533
    %v535 = vmul.f32 %v534, %v39
    %v536 = vmul.f32 %v534, %v41
    %539 = vrot.lane.b32.xlu0 %v535, 110
    %v540 = vpop.permute.xlu0 %539
    %541 = vrot.lane.b32.xlu0 %v536, 110
    %v542 = vpop.permute.xlu0 %541
    %v543 = vrot.slane %v540, 1
    %v544 = vrot.slane %v542, 1
    %v545 = vsel %vm526, %v540, %v543
    %v546 = vsel %vm526, %v542, %v544
    %v549 = vadd.f32 %v440, %v545
    %v550 = vadd.f32 %v441, %v546
    %s551 = sld [smem:[#allocation2 + $0x3b]]
    %v552 = vstv %s551
    %v553 = vmul.f32 %v552, %v39
    %v554 = vmul.f32 %v552, %v41
    %557 = vrot.lane.b32.xlu0 %v553, 110
    %v558 = vpop.permute.xlu0 %557
    %559 = vrot.lane.b32.xlu0 %v554, 110
    %v560 = vpop.permute.xlu0 %559
    %v561 = vrot.slane %v558, 1
    %v562 = vrot.slane %v560, 1
    %v563 = vsel %vm526, %v558, %v561
    %v564 = vsel %vm526, %v560, %v562
    %v567 = vadd.f32 %v458, %v563
    %v568 = vadd.f32 %v459, %v564
    %s569 = sld [smem:[#allocation2 + $0x56]]
    %v570 = vstv %s569
    %v571 = vmul.f32 %v570, %v39
    %v572 = vmul.f32 %v570, %v41
    %575 = vrot.lane.b32.xlu0 %v571, 110
    %v576 = vpop.permute.xlu0 %575
    %577 = vrot.lane.b32.xlu0 %v572, 110
    %v578 = vpop.permute.xlu0 %577
    %v579 = vrot.slane %v576, 1
    %v580 = vrot.slane %v578, 1
    %v581 = vsel %vm526, %v576, %v579
    %v582 = vsel %vm526, %v578, %v580
    %v585 = vadd.f32 %v476, %v581
    %v586 = vadd.f32 %v477, %v582
    %s587 = sld [smem:[#allocation2 + $0x71]]
    %v588 = vstv %s587
    %v589 = vmul.f32 %v588, %v39
    %v590 = vmul.f32 %v588, %v41
    %593 = vrot.lane.b32.xlu0 %v589, 110
    %v594 = vpop.permute.xlu0 %593
    %595 = vrot.lane.b32.xlu0 %v590, 110
    %v596 = vpop.permute.xlu0 %595
    %v597 = vrot.slane %v594, 1
    %v598 = vrot.slane %v596, 1
    %v599 = vsel %vm526, %v594, %v597
    %v600 = vsel %vm526, %v596, %v598
    %v603 = vadd.f32 %v494, %v599
    %v604 = vadd.f32 %v495, %v600
    %s605 = sld [smem:[#allocation2 + $0x8c]]
    %v606 = vstv %s605
    %v607 = vmul.f32 %v606, %v39
    %v608 = vmul.f32 %v606, %v41
    %611 = vrot.lane.b32.xlu0 %v607, 110
    %v612 = vpop.permute.xlu0 %611
    %613 = vrot.lane.b32.xlu0 %v608, 110
    %v614 = vpop.permute.xlu0 %613
    %v615 = vrot.slane %v612, 1
    %v616 = vrot.slane %v614, 1
    %v617 = vsel %vm526, %v612, %v615
    %v618 = vsel %vm526, %v614, %v616
    %v621 = vadd.f32 %v512, %v617
    %v622 = vadd.f32 %v513, %v618
    %s623 = sld [smem:[#allocation2 + $0x6]]
    %v624 = vstv %s623
    %v625 = vmul.f32 %v624, %v39
    %v626 = vmul.f32 %v624, %v41
    %629 = vrot.lane.b32.xlu0 %v625, 96
    %v630 = vpop.permute.xlu0 %629
    %631 = vrot.lane.b32.xlu0 %v626, 96
    %v632 = vpop.permute.xlu0 %631
    %v633 = vrot.slane %v630, 1
    %v634 = vrot.slane %v632, 1
    %vm635 = vcmask 785408
    %v636 = vsel %vm635, %v630, %v633
    %v637 = vsel %vm635, %v632, %v634
    %v640 = vadd.f32 %v531, %v636
    %v641 = vadd.f32 %v532, %v637
    %s642 = sld [smem:[#allocation2 + $0x21]]
    %v643 = vstv %s642
    %v644 = vmul.f32 %v643, %v39
    %v645 = vmul.f32 %v643, %v41
    %648 = vrot.lane.b32.xlu0 %v644, 96
    %v649 = vpop.permute.xlu0 %648
    %650 = vrot.lane.b32.xlu0 %v645, 96
    %v651 = vpop.permute.xlu0 %650
    %v652 = vrot.slane %v649, 1
    %v653 = vrot.slane %v651, 1
    %v654 = vsel %vm635, %v649, %v652
    %v655 = vsel %vm635, %v651, %v653
    %v658 = vadd.f32 %v549, %v654
    %v659 = vadd.f32 %v550, %v655
    %s660 = sld [smem:[#allocation2 + $0x3c]]
    %v661 = vstv %s660
    %v662 = vmul.f32 %v661, %v39
    %v663 = vmul.f32 %v661, %v41
    %666 = vrot.lane.b32.xlu0 %v662, 96
    %v667 = vpop.permute.xlu0 %666
    %668 = vrot.lane.b32.xlu0 %v663, 96
    %v669 = vpop.permute.xlu0 %668
    %v670 = vrot.slane %v667, 1
    %v671 = vrot.slane %v669, 1
    %v672 = vsel %vm635, %v667, %v670
    %v673 = vsel %vm635, %v669, %v671
    %v676 = vadd.f32 %v567, %v672
    %v677 = vadd.f32 %v568, %v673
    %s678 = sld [smem:[#allocation2 + $0x57]]
    %v679 = vstv %s678
    %v680 = vmul.f32 %v679, %v39
    %v681 = vmul.f32 %v679, %v41
    %684 = vrot.lane.b32.xlu0 %v680, 96
    %v685 = vpop.permute.xlu0 %684
    %686 = vrot.lane.b32.xlu0 %v681, 96
    %v687 = vpop.permute.xlu0 %686
    %v688 = vrot.slane %v685, 1
    %v689 = vrot.slane %v687, 1
    %v690 = vsel %vm635, %v685, %v688
    %v691 = vsel %vm635, %v687, %v689
    %v694 = vadd.f32 %v585, %v690
    %v695 = vadd.f32 %v586, %v691
    %s696 = sld [smem:[#allocation2 + $0x72]]
    %v697 = vstv %s696
    %v698 = vmul.f32 %v697, %v39
    %v699 = vmul.f32 %v697, %v41
    %702 = vrot.lane.b32.xlu0 %v698, 96
    %v703 = vpop.permute.xlu0 %702
    %704 = vrot.lane.b32.xlu0 %v699, 96
    %v705 = vpop.permute.xlu0 %704
    %v706 = vrot.slane %v703, 1
    %v707 = vrot.slane %v705, 1
    %v708 = vsel %vm635, %v703, %v706
    %v709 = vsel %vm635, %v705, %v707
    %v712 = vadd.f32 %v603, %v708
    %v713 = vadd.f32 %v604, %v709
    %s714 = sld [smem:[#allocation2 + $0x8d]]
    %v715 = vstv %s714
    %v716 = vmul.f32 %v715, %v39
    %v717 = vmul.f32 %v715, %v41
    %720 = vrot.lane.b32.xlu0 %v716, 96
    %v721 = vpop.permute.xlu0 %720
    %722 = vrot.lane.b32.xlu0 %v717, 96
    %v723 = vpop.permute.xlu0 %722
    %v724 = vrot.slane %v721, 1
    %v725 = vrot.slane %v723, 1
    %v726 = vsel %vm635, %v721, %v724
    %v727 = vsel %vm635, %v723, %v725
    %v730 = vadd.f32 %v621, %v726
    %v731 = vadd.f32 %v622, %v727
    %s732 = sld [smem:[#allocation2 + $0x7]]
    %v733 = vstv %s732
    %v734 = vmul.f32 %v733, %v39
    %v735 = vmul.f32 %v733, %v41
    %738 = vrot.lane.b32.xlu0 %v734, 95
    %v739 = vpop.permute.xlu0 %738
    %740 = vrot.lane.b32.xlu0 %v735, 95
    %v741 = vpop.permute.xlu0 %740
    %v742 = vrot.slane %v739, 1
    %v743 = vrot.slane %v741, 1
    %vm744 = vcmask 777216
    %v745 = vsel %vm744, %v739, %v742
    %v746 = vsel %vm744, %v741, %v743
    %v749 = vadd.f32 %v640, %v745
    %v750 = vadd.f32 %v641, %v746
    %s751 = sld [smem:[#allocation2 + $0x22]]
    %v752 = vstv %s751
    %v753 = vmul.f32 %v752, %v39
    %v754 = vmul.f32 %v752, %v41
    %757 = vrot.lane.b32.xlu0 %v753, 95
    %v758 = vpop.permute.xlu0 %757
    %759 = vrot.lane.b32.xlu0 %v754, 95
    %v760 = vpop.permute.xlu0 %759
    %v761 = vrot.slane %v758, 1
    %v762 = vrot.slane %v760, 1
    %v763 = vsel %vm744, %v758, %v761
    %v764 = vsel %vm744, %v760, %v762
    %v767 = vadd.f32 %v658, %v763
    %v768 = vadd.f32 %v659, %v764
    %s769 = sld [smem:[#allocation2 + $0x3d]]
    %v770 = vstv %s769
    %v771 = vmul.f32 %v770, %v39
    %v772 = vmul.f32 %v770, %v41
    %775 = vrot.lane.b32.xlu0 %v771, 95
    %v776 = vpop.permute.xlu0 %775
    %777 = vrot.lane.b32.xlu0 %v772, 95
    %v778 = vpop.permute.xlu0 %777
    %v779 = vrot.slane %v776, 1
    %v780 = vrot.slane %v778, 1
    %v781 = vsel %vm744, %v776, %v779
    %v782 = vsel %vm744, %v778, %v780
    %v785 = vadd.f32 %v676, %v781
    %v786 = vadd.f32 %v677, %v782
    %s787 = sld [smem:[#allocation2 + $0x58]]
    %v788 = vstv %s787
    %v789 = vmul.f32 %v788, %v39
    %v790 = vmul.f32 %v788, %v41
    %793 = vrot.lane.b32.xlu0 %v789, 95
    %v794 = vpop.permute.xlu0 %793
    %795 = vrot.lane.b32.xlu0 %v790, 95
    %v796 = vpop.permute.xlu0 %795
    %v797 = vrot.slane %v794, 1
    %v798 = vrot.slane %v796, 1
    %v799 = vsel %vm744, %v794, %v797
    %v800 = vsel %vm744, %v796, %v798
    %v803 = vadd.f32 %v694, %v799
    %v804 = vadd.f32 %v695, %v800
    %s805 = sld [smem:[#allocation2 + $0x73]]
    %v806 = vstv %s805
    %v807 = vmul.f32 %v806, %v39
    %v808 = vmul.f32 %v806, %v41
    %811 = vrot.lane.b32.xlu0 %v807, 95
    %v812 = vpop.permute.xlu0 %811
    %813 = vrot.lane.b32.xlu0 %v808, 95
    %v814 = vpop.permute.xlu0 %813
    %v815 = vrot.slane %v812, 1
    %v816 = vrot.slane %v814, 1
    %v817 = vsel %vm744, %v812, %v815
    %v818 = vsel %vm744, %v814, %v816
    %v821 = vadd.f32 %v712, %v817
    %v822 = vadd.f32 %v713, %v818
    %s823 = sld [smem:[#allocation2 + $0x8e]]
    %v824 = vstv %s823
    %v825 = vmul.f32 %v824, %v39
    %v826 = vmul.f32 %v824, %v41
    %829 = vrot.lane.b32.xlu0 %v825, 95
    %v830 = vpop.permute.xlu0 %829
    %831 = vrot.lane.b32.xlu0 %v826, 95
    %v832 = vpop.permute.xlu0 %831
    %v833 = vrot.slane %v830, 1
    %v834 = vrot.slane %v832, 1
    %v835 = vsel %vm744, %v830, %v833
    %v836 = vsel %vm744, %v832, %v834
    %v839 = vadd.f32 %v730, %v835
    %v840 = vadd.f32 %v731, %v836
    %s841 = sld [smem:[#allocation2 + $0x8]]
    %v842 = vstv %s841
    %v843 = vmul.f32 %v842, %v39
    %v844 = vmul.f32 %v842, %v41
    %847 = vrot.lane.b32.xlu0 %v843, 94
    %v848 = vpop.permute.xlu0 %847
    %849 = vrot.lane.b32.xlu0 %v844, 94
    %v850 = vpop.permute.xlu0 %849
    %v851 = vrot.slane %v848, 1
    %v852 = vrot.slane %v850, 1
    %vm853 = vcmask 769024
    %v854 = vsel %vm853, %v848, %v851
    %v855 = vsel %vm853, %v850, %v852
    %v858 = vadd.f32 %v749, %v854
    %v859 = vadd.f32 %v750, %v855
    %s860 = sld [smem:[#allocation2 + $0x23]]
    %v861 = vstv %s860
    %v862 = vmul.f32 %v861, %v39
    %v863 = vmul.f32 %v861, %v41
    %866 = vrot.lane.b32.xlu0 %v862, 94
    %v867 = vpop.permute.xlu0 %866
    %868 = vrot.lane.b32.xlu0 %v863, 94
    %v869 = vpop.permute.xlu0 %868
    %v870 = vrot.slane %v867, 1
    %v871 = vrot.slane %v869, 1
    %v872 = vsel %vm853, %v867, %v870
    %v873 = vsel %vm853, %v869, %v871
    %v876 = vadd.f32 %v767, %v872
    %v877 = vadd.f32 %v768, %v873
    %s878 = sld [smem:[#allocation2 + $0x3e]]
    %v879 = vstv %s878
    %v880 = vmul.f32 %v879, %v39
    %v881 = vmul.f32 %v879, %v41
    %884 = vrot.lane.b32.xlu0 %v880, 94
    %v885 = vpop.permute.xlu0 %884
    %886 = vrot.lane.b32.xlu0 %v881, 94
    %v887 = vpop.permute.xlu0 %886
    %v888 = vrot.slane %v885, 1
    %v889 = vrot.slane %v887, 1
    %v890 = vsel %vm853, %v885, %v888
    %v891 = vsel %vm853, %v887, %v889
    %v894 = vadd.f32 %v785, %v890
    %v895 = vadd.f32 %v786, %v891
    %s896 = sld [smem:[#allocation2 + $0x59]]
    %v897 = vstv %s896
    %v898 = vmul.f32 %v897, %v39
    %v899 = vmul.f32 %v897, %v41
    %902 = vrot.lane.b32.xlu0 %v898, 94
    %v903 = vpop.permute.xlu0 %902
    %904 = vrot.lane.b32.xlu0 %v899, 94
    %v905 = vpop.permute.xlu0 %904
    %v906 = vrot.slane %v903, 1
    %v907 = vrot.slane %v905, 1
    %v908 = vsel %vm853, %v903, %v906
    %v909 = vsel %vm853, %v905, %v907
    %v912 = vadd.f32 %v803, %v908
    %v913 = vadd.f32 %v804, %v909
    %s914 = sld [smem:[#allocation2 + $0x74]]
    %v915 = vstv %s914
    %v916 = vmul.f32 %v915, %v39
    %v917 = vmul.f32 %v915, %v41
    %920 = vrot.lane.b32.xlu0 %v916, 94
    %v921 = vpop.permute.xlu0 %920
    %922 = vrot.lane.b32.xlu0 %v917, 94
    %v923 = vpop.permute.xlu0 %922
    %v924 = vrot.slane %v921, 1
    %v925 = vrot.slane %v923, 1
    %v926 = vsel %vm853, %v921, %v924
    %v927 = vsel %vm853, %v923, %v925
    %v930 = vadd.f32 %v821, %v926
    %v931 = vadd.f32 %v822, %v927
    %s932 = sld [smem:[#allocation2 + $0x8f]]
    %v933 = vstv %s932
    %v934 = vmul.f32 %v933, %v39
    %v935 = vmul.f32 %v933, %v41
    %938 = vrot.lane.b32.xlu0 %v934, 94
    %v939 = vpop.permute.xlu0 %938
    %940 = vrot.lane.b32.xlu0 %v935, 94
    %v941 = vpop.permute.xlu0 %940
    %v942 = vrot.slane %v939, 1
    %v943 = vrot.slane %v941, 1
    %v944 = vsel %vm853, %v939, %v942
    %v945 = vsel %vm853, %v941, %v943
    %v948 = vadd.f32 %v839, %v944
    %v949 = vadd.f32 %v840, %v945
    %s950 = scalar_lea.vmem %s0, 1
    %v951 = vld [vmem:[%s950] ss:$4 sm:$0x7]
    %s952 = scalar_lea.vmem %s0, 13
    %v953 = vld [vmem:[%s952] ss:$4 sm:$0x7]
    %s954 = sld [smem:[#allocation2 + $0x9]]
    %v955 = vstv %s954
    %v956 = vmul.f32 %v955, %v951
    %v957 = vmul.f32 %v955, %v953
    %v958 = vadd.f32 %v858, %v956
    %v959 = vadd.f32 %v859, %v957
    %s960 = sld [smem:[#allocation2 + $0x24]]
    %v961 = vstv %s960
    %v962 = vmul.f32 %v961, %v951
    %v963 = vmul.f32 %v961, %v953
    %v964 = vadd.f32 %v876, %v962
    %v965 = vadd.f32 %v877, %v963
    %s966 = sld [smem:[#allocation2 + $0x3f]]
    %v967 = vstv %s966
    %v968 = vmul.f32 %v967, %v951
    %v969 = vmul.f32 %v967, %v953
    %v970 = vadd.f32 %v894, %v968
    %v971 = vadd.f32 %v895, %v969
    %s972 = sld [smem:[#allocation2 + $0x5a]]
    %v973 = vstv %s972
    %v974 = vmul.f32 %v973, %v951
    %v975 = vmul.f32 %v973, %v953
    %v976 = vadd.f32 %v912, %v974
    %v977 = vadd.f32 %v913, %v975
    %s978 = sld [smem:[#allocation2 + $0x75]]
    %v979 = vstv %s978
    %v980 = vmul.f32 %v979, %v951
    %v981 = vmul.f32 %v979, %v953
    %v982 = vadd.f32 %v930, %v980
    %v983 = vadd.f32 %v931, %v981
    %s984 = sld [smem:[#allocation2 + $0x90]]
    %v985 = vstv %s984
    %v986 = vmul.f32 %v985, %v951
    %v987 = vmul.f32 %v985, %v953
    %v988 = vadd.f32 %v948, %v986
    %v989 = vadd.f32 %v949, %v987
    %s990 = sld [smem:[#allocation2 + $0xa]]
    %v991 = vstv %s990
    %v992 = vmul.f32 %v991, %v951
    %v993 = vmul.f32 %v991, %v953
    %996 = vrot.lane.b32.xlu0 %v992, 127
    %v997 = vpop.permute.xlu0 %996
    %998 = vrot.lane.b32.xlu0 %v993, 127
    %v999 = vpop.permute.xlu0 %998
    %v1000 = vrot.slane %v997, 1
    %v1001 = vrot.slane %v999, 1
    %v1002 = vsel %vm90, %v997, %v1000
    %v1003 = vsel %vm90, %v999, %v1001
    %v1006 = vadd.f32 %v958, %v1002
    %v1007 = vadd.f32 %v959, %v1003
    %s1008 = sld [smem:[#allocation2 + $0x25]]
    %v1009 = vstv %s1008
    %v1010 = vmul.f32 %v1009, %v951
    %v1011 = vmul.f32 %v1009, %v953
    %1014 = vrot.lane.b32.xlu0 %v1010, 127
    %v1015 = vpop.permute.xlu0 %1014
    %1016 = vrot.lane.b32.xlu0 %v1011, 127
    %v1017 = vpop.permute.xlu0 %1016
    %v1018 = vrot.slane %v1015, 1
    %v1019 = vrot.slane %v1017, 1
    %v1020 = vsel %vm90, %v1015, %v1018
    %v1021 = vsel %vm90, %v1017, %v1019
    %v1024 = vadd.f32 %v964, %v1020
    %v1025 = vadd.f32 %v965, %v1021
    %s1026 = sld [smem:[#allocation2 + $0x40]]
    %v1027 = vstv %s1026
    %v1028 = vmul.f32 %v1027, %v951
    %v1029 = vmul.f32 %v1027, %v953
    %1032 = vrot.lane.b32.xlu0 %v1028, 127
    %v1033 = vpop.permute.xlu0 %1032
    %1034 = vrot.lane.b32.xlu0 %v1029, 127
    %v1035 = vpop.permute.xlu0 %1034
    %v1036 = vrot.slane %v1033, 1
    %v1037 = vrot.slane %v1035, 1
    %v1038 = vsel %vm90, %v1033, %v1036
    %v1039 = vsel %vm90, %v1035, %v1037
    %v1042 = vadd.f32 %v970, %v1038
    %v1043 = vadd.f32 %v971, %v1039
    %s1044 = sld [smem:[#allocation2 + $0x5b]]
    %v1045 = vstv %s1044
    %v1046 = vmul.f32 %v1045, %v951
    %v1047 = vmul.f32 %v1045, %v953
    %1050 = vrot.lane.b32.xlu0 %v1046, 127
    %v1051 = vpop.permute.xlu0 %1050
    %1052 = vrot.lane.b32.xlu0 %v1047, 127
    %v1053 = vpop.permute.xlu0 %1052
    %v1054 = vrot.slane %v1051, 1
    %v1055 = vrot.slane %v1053, 1
    %v1056 = vsel %vm90, %v1051, %v1054
    %v1057 = vsel %vm90, %v1053, %v1055
    %v1060 = vadd.f32 %v976, %v1056
    %v1061 = vadd.f32 %v977, %v1057
    %s1062 = sld [smem:[#allocation2 + $0x76]]
    %v1063 = vstv %s1062
    %v1064 = vmul.f32 %v1063, %v951
    %v1065 = vmul.f32 %v1063, %v953
    %1068 = vrot.lane.b32.xlu0 %v1064, 127
    %v1069 = vpop.permute.xlu0 %1068
    %1070 = vrot.lane.b32.xlu0 %v1065, 127
    %v1071 = vpop.permute.xlu0 %1070
    %v1072 = vrot.slane %v1069, 1
    %v1073 = vrot.slane %v1071, 1
    %v1074 = vsel %vm90, %v1069, %v1072
    %v1075 = vsel %vm90, %v1071, %v1073
    %v1078 = vadd.f32 %v982, %v1074
    %v1079 = vadd.f32 %v983, %v1075
    %s1080 = sld [smem:[#allocation2 + $0x91]]
    %v1081 = vstv %s1080
    %v1082 = vmul.f32 %v1081, %v951
    %v1083 = vmul.f32 %v1081, %v953
    %1086 = vrot.lane.b32.xlu0 %v1082, 127
    %v1087 = vpop.permute.xlu0 %1086
    %1088 = vrot.lane.b32.xlu0 %v1083, 127
    %v1089 = vpop.permute.xlu0 %1088
    %v1090 = vrot.slane %v1087, 1
    %v1091 = vrot.slane %v1089, 1
    %v1092 = vsel %vm90, %v1087, %v1090
    %v1093 = vsel %vm90, %v1089, %v1091
    %v1096 = vadd.f32 %v988, %v1092
    %v1097 = vadd.f32 %v989, %v1093
    %s1098 = sld [smem:[#allocation2 + $0xb]]
    %v1099 = vstv %s1098
    %v1100 = vmul.f32 %v1099, %v951
    %v1101 = vmul.f32 %v1099, %v953
    %1104 = vrot.lane.b32.xlu0 %v1100, 126
    %v1105 = vpop.permute.xlu0 %1104
    %1106 = vrot.lane.b32.xlu0 %v1101, 126
    %v1107 = vpop.permute.xlu0 %1106
    %v1108 = vrot.slane %v1105, 1
    %v1109 = vrot.slane %v1107, 1
    %v1110 = vsel %vm199, %v1105, %v1108
    %v1111 = vsel %vm199, %v1107, %v1109
    %v1114 = vadd.f32 %v1006, %v1110
    %v1115 = vadd.f32 %v1007, %v1111
    %s1116 = sld [smem:[#allocation2 + $0x26]]
    %v1117 = vstv %s1116
    %v1118 = vmul.f32 %v1117, %v951
    %v1119 = vmul.f32 %v1117, %v953
    %1122 = vrot.lane.b32.xlu0 %v1118, 126
    %v1123 = vpop.permute.xlu0 %1122
    %1124 = vrot.lane.b32.xlu0 %v1119, 126
    %v1125 = vpop.permute.xlu0 %1124
    %v1126 = vrot.slane %v1123, 1
    %v1127 = vrot.slane %v1125, 1
    %v1128 = vsel %vm199, %v1123, %v1126
    %v1129 = vsel %vm199, %v1125, %v1127
    %v1132 = vadd.f32 %v1024, %v1128
    %v1133 = vadd.f32 %v1025, %v1129
    %s1134 = sld [smem:[#allocation2 + $0x41]]
    %v1135 = vstv %s1134
    %v1136 = vmul.f32 %v1135, %v951
    %v1137 = vmul.f32 %v1135, %v953
    %1140 = vrot.lane.b32.xlu0 %v1136, 126
    %v1141 = vpop.permute.xlu0 %1140
    %1142 = vrot.lane.b32.xlu0 %v1137, 126
    %v1143 = vpop.permute.xlu0 %1142
    %v1144 = vrot.slane %v1141, 1
    %v1145 = vrot.slane %v1143, 1
    %v1146 = vsel %vm199, %v1141, %v1144
    %v1147 = vsel %vm199, %v1143, %v1145
    %v1150 = vadd.f32 %v1042, %v1146
    %v1151 = vadd.f32 %v1043, %v1147
    %s1152 = sld [smem:[#allocation2 + $0x5c]]
    %v1153 = vstv %s1152
    %v1154 = vmul.f32 %v1153, %v951
    %v1155 = vmul.f32 %v1153, %v953
    %1158 = vrot.lane.b32.xlu0 %v1154, 126
    %v1159 = vpop.permute.xlu0 %1158
    %1160 = vrot.lane.b32.xlu0 %v1155, 126
    %v1161 = vpop.permute.xlu0 %1160
    %v1162 = vrot.slane %v1159, 1
    %v1163 = vrot.slane %v1161, 1
    %v1164 = vsel %vm199, %v1159, %v1162
    %v1165 = vsel %vm199, %v1161, %v1163
    %v1168 = vadd.f32 %v1060, %v1164
    %v1169 = vadd.f32 %v1061, %v1165
    %s1170 = sld [smem:[#allocation2 + $0x77]]
    %v1171 = vstv %s1170
    %v1172 = vmul.f32 %v1171, %v951
    %v1173 = vmul.f32 %v1171, %v953
    %1176 = vrot.lane.b32.xlu0 %v1172, 126
    %v1177 = vpop.permute.xlu0 %1176
    %1178 = vrot.lane.b32.xlu0 %v1173, 126
    %v1179 = vpop.permute.xlu0 %1178
    %v1180 = vrot.slane %v1177, 1
    %v1181 = vrot.slane %v1179, 1
    %v1182 = vsel %vm199, %v1177, %v1180
    %v1183 = vsel %vm199, %v1179, %v1181
    %v1186 = vadd.f32 %v1078, %v1182
    %v1187 = vadd.f32 %v1079, %v1183
    %s1188 = sld [smem:[#allocation2 + $0x92]]
    %v1189 = vstv %s1188
    %v1190 = vmul.f32 %v1189, %v951
    %v1191 = vmul.f32 %v1189, %v953
    %1194 = vrot.lane.b32.xlu0 %v1190, 126
    %v1195 = vpop.permute.xlu0 %1194
    %1196 = vrot.lane.b32.xlu0 %v1191, 126
    %v1197 = vpop.permute.xlu0 %1196
    %v1198 = vrot.slane %v1195, 1
    %v1199 = vrot.slane %v1197, 1
    %v1200 = vsel %vm199, %v1195, %v1198
    %v1201 = vsel %vm199, %v1197, %v1199
    %v1204 = vadd.f32 %v1096, %v1200
    %v1205 = vadd.f32 %v1097, %v1201
    %s1206 = sld [smem:[#allocation2 + $0xc]]
    %v1207 = vstv %s1206
    %v1208 = vmul.f32 %v1207, %v951
    %v1209 = vmul.f32 %v1207, %v953
    %1212 = vrot.lane.b32.xlu0 %v1208, 112
    %v1213 = vpop.permute.xlu0 %1212
    %1214 = vrot.lane.b32.xlu0 %v1209, 112
    %v1215 = vpop.permute.xlu0 %1214
    %v1216 = vrot.slane %v1213, 1
    %v1217 = vrot.slane %v1215, 1
    %v1218 = vsel %vm308, %v1213, %v1216
    %v1219 = vsel %vm308, %v1215, %v1217
    %v1222 = vadd.f32 %v1114, %v1218
    %v1223 = vadd.f32 %v1115, %v1219
    %s1224 = sld [smem:[#allocation2 + $0x27]]
    %v1225 = vstv %s1224
    %v1226 = vmul.f32 %v1225, %v951
    %v1227 = vmul.f32 %v1225, %v953
    %1230 = vrot.lane.b32.xlu0 %v1226, 112
    %v1231 = vpop.permute.xlu0 %1230
    %1232 = vrot.lane.b32.xlu0 %v1227, 112
    %v1233 = vpop.permute.xlu0 %1232
    %v1234 = vrot.slane %v1231, 1
    %v1235 = vrot.slane %v1233, 1
    %v1236 = vsel %vm308, %v1231, %v1234
    %v1237 = vsel %vm308, %v1233, %v1235
    %v1240 = vadd.f32 %v1132, %v1236
    %v1241 = vadd.f32 %v1133, %v1237
    %s1242 = sld [smem:[#allocation2 + $0x42]]
    %v1243 = vstv %s1242
    %v1244 = vmul.f32 %v1243, %v951
    %v1245 = vmul.f32 %v1243, %v953
    %1248 = vrot.lane.b32.xlu0 %v1244, 112
    %v1249 = vpop.permute.xlu0 %1248
    %1250 = vrot.lane.b32.xlu0 %v1245, 112
    %v1251 = vpop.permute.xlu0 %1250
    %v1252 = vrot.slane %v1249, 1
    %v1253 = vrot.slane %v1251, 1
    %v1254 = vsel %vm308, %v1249, %v1252
    %v1255 = vsel %vm308, %v1251, %v1253
    %v1258 = vadd.f32 %v1150, %v1254
    %v1259 = vadd.f32 %v1151, %v1255
    %s1260 = sld [smem:[#allocation2 + $0x5d]]
    %v1261 = vstv %s1260
    %v1262 = vmul.f32 %v1261, %v951
    %v1263 = vmul.f32 %v1261, %v953
    %1266 = vrot.lane.b32.xlu0 %v1262, 112
    %v1267 = vpop.permute.xlu0 %1266
    %1268 = vrot.lane.b32.xlu0 %v1263, 112
    %v1269 = vpop.permute.xlu0 %1268
    %v1270 = vrot.slane %v1267, 1
    %v1271 = vrot.slane %v1269, 1
    %v1272 = vsel %vm308, %v1267, %v1270
    %v1273 = vsel %vm308, %v1269, %v1271
    %v1276 = vadd.f32 %v1168, %v1272
    %v1277 = vadd.f32 %v1169, %v1273
    %s1278 = sld [smem:[#allocation2 + $0x78]]
    %v1279 = vstv %s1278
    %v1280 = vmul.f32 %v1279, %v951
    %v1281 = vmul.f32 %v1279, %v953
    %1284 = vrot.lane.b32.xlu0 %v1280, 112
    %v1285 = vpop.permute.xlu0 %1284
    %1286 = vrot.lane.b32.xlu0 %v1281, 112
    %v1287 = vpop.permute.xlu0 %1286
    %v1288 = vrot.slane %v1285, 1
    %v1289 = vrot.slane %v1287, 1
    %v1290 = vsel %vm308, %v1285, %v1288
    %v1291 = vsel %vm308, %v1287, %v1289
    %v1294 = vadd.f32 %v1186, %v1290
    %v1295 = vadd.f32 %v1187, %v1291
    %s1296 = sld [smem:[#allocation2 + $0x93]]
    %v1297 = vstv %s1296
    %v1298 = vmul.f32 %v1297, %v951
    %v1299 = vmul.f32 %v1297, %v953
    %1302 = vrot.lane.b32.xlu0 %v1298, 112
    %v1303 = vpop.permute.xlu0 %1302
    %1304 = vrot.lane.b32.xlu0 %v1299, 112
    %v1305 = vpop.permute.xlu0 %1304
    %v1306 = vrot.slane %v1303, 1
    %v1307 = vrot.slane %v1305, 1
    %v1308 = vsel %vm308, %v1303, %v1306
    %v1309 = vsel %vm308, %v1305, %v1307
    %v1312 = vadd.f32 %v1204, %v1308
    %v1313 = vadd.f32 %v1205, %v1309
    %s1314 = sld [smem:[#allocation2 + $0xd]]
    %v1315 = vstv %s1314
    %v1316 = vmul.f32 %v1315, %v951
    %v1317 = vmul.f32 %v1315, %v953
    %1320 = vrot.lane.b32.xlu0 %v1316, 111
    %v1321 = vpop.permute.xlu0 %1320
    %1322 = vrot.lane.b32.xlu0 %v1317, 111
    %v1323 = vpop.permute.xlu0 %1322
    %v1324 = vrot.slane %v1321, 1
    %v1325 = vrot.slane %v1323, 1
    %v1326 = vsel %vm417, %v1321, %v1324
    %v1327 = vsel %vm417, %v1323, %v1325
    %v1330 = vadd.f32 %v1222, %v1326
    %v1331 = vadd.f32 %v1223, %v1327
    %s1332 = sld [smem:[#allocation2 + $0x28]]
    %v1333 = vstv %s1332
    %v1334 = vmul.f32 %v1333, %v951
    %v1335 = vmul.f32 %v1333, %v953
    %1338 = vrot.lane.b32.xlu0 %v1334, 111
    %v1339 = vpop.permute.xlu0 %1338
    %1340 = vrot.lane.b32.xlu0 %v1335, 111
    %v1341 = vpop.permute.xlu0 %1340
    %v1342 = vrot.slane %v1339, 1
    %v1343 = vrot.slane %v1341, 1
    %v1344 = vsel %vm417, %v1339, %v1342
    %v1345 = vsel %vm417, %v1341, %v1343
    %v1348 = vadd.f32 %v1240, %v1344
    %v1349 = vadd.f32 %v1241, %v1345
    %s1350 = sld [smem:[#allocation2 + $0x43]]
    %v1351 = vstv %s1350
    %v1352 = vmul.f32 %v1351, %v951
    %v1353 = vmul.f32 %v1351, %v953
    %1356 = vrot.lane.b32.xlu0 %v1352, 111
    %v1357 = vpop.permute.xlu0 %1356
    %1358 = vrot.lane.b32.xlu0 %v1353, 111
    %v1359 = vpop.permute.xlu0 %1358
    %v1360 = vrot.slane %v1357, 1
    %v1361 = vrot.slane %v1359, 1
    %v1362 = vsel %vm417, %v1357, %v1360
    %v1363 = vsel %vm417, %v1359, %v1361
    %v1366 = vadd.f32 %v1258, %v1362
    %v1367 = vadd.f32 %v1259, %v1363
    %s1368 = sld [smem:[#allocation2 + $0x5e]]
    %v1369 = vstv %s1368
    %v1370 = vmul.f32 %v1369, %v951
    %v1371 = vmul.f32 %v1369, %v953
    %1374 = vrot.lane.b32.xlu0 %v1370, 111
    %v1375 = vpop.permute.xlu0 %1374
    %1376 = vrot.lane.b32.xlu0 %v1371, 111
    %v1377 = vpop.permute.xlu0 %1376
    %v1378 = vrot.slane %v1375, 1
    %v1379 = vrot.slane %v1377, 1
    %v1380 = vsel %vm417, %v1375, %v1378
    %v1381 = vsel %vm417, %v1377, %v1379
    %v1384 = vadd.f32 %v1276, %v1380
    %v1385 = vadd.f32 %v1277, %v1381
    %s1386 = sld [smem:[#allocation2 + $0x79]]
    %v1387 = vstv %s1386
    %v1388 = vmul.f32 %v1387, %v951
    %v1389 = vmul.f32 %v1387, %v953
    %1392 = vrot.lane.b32.xlu0 %v1388, 111
    %v1393 = vpop.permute.xlu0 %1392
    %1394 = vrot.lane.b32.xlu0 %v1389, 111
    %v1395 = vpop.permute.xlu0 %1394
    %v1396 = vrot.slane %v1393, 1
    %v1397 = vrot.slane %v1395, 1
    %v1398 = vsel %vm417, %v1393, %v1396
    %v1399 = vsel %vm417, %v1395, %v1397
    %v1402 = vadd.f32 %v1294, %v1398
    %v1403 = vadd.f32 %v1295, %v1399
    %s1404 = sld [smem:[#allocation2 + $0x94]]
    %v1405 = vstv %s1404
    %v1406 = vmul.f32 %v1405, %v951
    %v1407 = vmul.f32 %v1405, %v953
    %1410 = vrot.lane.b32.xlu0 %v1406, 111
    %v1411 = vpop.permute.xlu0 %1410
    %1412 = vrot.lane.b32.xlu0 %v1407, 111
    %v1413 = vpop.permute.xlu0 %1412
    %v1414 = vrot.slane %v1411, 1
    %v1415 = vrot.slane %v1413, 1
    %v1416 = vsel %vm417, %v1411, %v1414
    %v1417 = vsel %vm417, %v1413, %v1415
    %v1420 = vadd.f32 %v1312, %v1416
    %v1421 = vadd.f32 %v1313, %v1417
    %s1422 = sld [smem:[#allocation2 + $0xe]]
    %v1423 = vstv %s1422
    %v1424 = vmul.f32 %v1423, %v951
    %v1425 = vmul.f32 %v1423, %v953
    %1428 = vrot.lane.b32.xlu0 %v1424, 110
    %v1429 = vpop.permute.xlu0 %1428
    %1430 = vrot.lane.b32.xlu0 %v1425, 110
    %v1431 = vpop.permute.xlu0 %1430
    %v1432 = vrot.slane %v1429, 1
    %v1433 = vrot.slane %v1431, 1
    %v1434 = vsel %vm526, %v1429, %v1432
    %v1435 = vsel %vm526, %v1431, %v1433
    %v1438 = vadd.f32 %v1330, %v1434
    %v1439 = vadd.f32 %v1331, %v1435
    %s1440 = sld [smem:[#allocation2 + $0x29]]
    %v1441 = vstv %s1440
    %v1442 = vmul.f32 %v1441, %v951
    %v1443 = vmul.f32 %v1441, %v953
    %1446 = vrot.lane.b32.xlu0 %v1442, 110
    %v1447 = vpop.permute.xlu0 %1446
    %1448 = vrot.lane.b32.xlu0 %v1443, 110
    %v1449 = vpop.permute.xlu0 %1448
    %v1450 = vrot.slane %v1447, 1
    %v1451 = vrot.slane %v1449, 1
    %v1452 = vsel %vm526, %v1447, %v1450
    %v1453 = vsel %vm526, %v1449, %v1451
    %v1456 = vadd.f32 %v1348, %v1452
    %v1457 = vadd.f32 %v1349, %v1453
    %s1458 = sld [smem:[#allocation2 + $0x44]]
    %v1459 = vstv %s1458
    %v1460 = vmul.f32 %v1459, %v951
    %v1461 = vmul.f32 %v1459, %v953
    %1464 = vrot.lane.b32.xlu0 %v1460, 110
    %v1465 = vpop.permute.xlu0 %1464
    %1466 = vrot.lane.b32.xlu0 %v1461, 110
    %v1467 = vpop.permute.xlu0 %1466
    %v1468 = vrot.slane %v1465, 1
    %v1469 = vrot.slane %v1467, 1
    %v1470 = vsel %vm526, %v1465, %v1468
    %v1471 = vsel %vm526, %v1467, %v1469
    %v1474 = vadd.f32 %v1366, %v1470
    %v1475 = vadd.f32 %v1367, %v1471
    %s1476 = sld [smem:[#allocation2 + $0x5f]]
    %v1477 = vstv %s1476
    %v1478 = vmul.f32 %v1477, %v951
    %v1479 = vmul.f32 %v1477, %v953
    %1482 = vrot.lane.b32.xlu0 %v1478, 110
    %v1483 = vpop.permute.xlu0 %1482
    %1484 = vrot.lane.b32.xlu0 %v1479, 110
    %v1485 = vpop.permute.xlu0 %1484
    %v1486 = vrot.slane %v1483, 1
    %v1487 = vrot.slane %v1485, 1
    %v1488 = vsel %vm526, %v1483, %v1486
    %v1489 = vsel %vm526, %v1485, %v1487
    %v1492 = vadd.f32 %v1384, %v1488
    %v1493 = vadd.f32 %v1385, %v1489
    %s1494 = sld [smem:[#allocation2 + $0x7a]]
    %v1495 = vstv %s1494
    %v1496 = vmul.f32 %v1495, %v951
    %v1497 = vmul.f32 %v1495, %v953
    %1500 = vrot.lane.b32.xlu0 %v1496, 110
    %v1501 = vpop.permute.xlu0 %1500
    %1502 = vrot.lane.b32.xlu0 %v1497, 110
    %v1503 = vpop.permute.xlu0 %1502
    %v1504 = vrot.slane %v1501, 1
    %v1505 = vrot.slane %v1503, 1
    %v1506 = vsel %vm526, %v1501, %v1504
    %v1507 = vsel %vm526, %v1503, %v1505
    %v1510 = vadd.f32 %v1402, %v1506
    %v1511 = vadd.f32 %v1403, %v1507
    %s1512 = sld [smem:[#allocation2 + $0x95]]
    %v1513 = vstv %s1512
    %v1514 = vmul.f32 %v1513, %v951
    %v1515 = vmul.f32 %v1513, %v953
    %1518 = vrot.lane.b32.xlu0 %v1514, 110
    %v1519 = vpop.permute.xlu0 %1518
    %1520 = vrot.lane.b32.xlu0 %v1515, 110
    %v1521 = vpop.permute.xlu0 %1520
    %v1522 = vrot.slane %v1519, 1
    %v1523 = vrot.slane %v1521, 1
    %v1524 = vsel %vm526, %v1519, %v1522
    %v1525 = vsel %vm526, %v1521, %v1523
    %v1528 = vadd.f32 %v1420, %v1524
    %v1529 = vadd.f32 %v1421, %v1525
    %s1530 = sld [smem:[#allocation2 + $0xf]]
    %v1531 = vstv %s1530
    %v1532 = vmul.f32 %v1531, %v951
    %v1533 = vmul.f32 %v1531, %v953
    %1536 = vrot.lane.b32.xlu0 %v1532, 96
    %v1537 = vpop.permute.xlu0 %1536
    %1538 = vrot.lane.b32.xlu0 %v1533, 96
    %v1539 = vpop.permute.xlu0 %1538
    %v1540 = vrot.slane %v1537, 1
    %v1541 = vrot.slane %v1539, 1
    %v1542 = vsel %vm635, %v1537, %v1540
    %v1543 = vsel %vm635, %v1539, %v1541
    %v1546 = vadd.f32 %v1438, %v1542
    %v1547 = vadd.f32 %v1439, %v1543
    %s1548 = sld [smem:[#allocation2 + $0x2a]]
    %v1549 = vstv %s1548
    %v1550 = vmul.f32 %v1549, %v951
    %v1551 = vmul.f32 %v1549, %v953
    %1554 = vrot.lane.b32.xlu0 %v1550, 96
    %v1555 = vpop.permute.xlu0 %1554
    %1556 = vrot.lane.b32.xlu0 %v1551, 96
    %v1557 = vpop.permute.xlu0 %1556
    %v1558 = vrot.slane %v1555, 1
    %v1559 = vrot.slane %v1557, 1
    %v1560 = vsel %vm635, %v1555, %v1558
    %v1561 = vsel %vm635, %v1557, %v1559
    %v1564 = vadd.f32 %v1456, %v1560
    %v1565 = vadd.f32 %v1457, %v1561
    %s1566 = sld [smem:[#allocation2 + $0x45]]
    %v1567 = vstv %s1566
    %v1568 = vmul.f32 %v1567, %v951
    %v1569 = vmul.f32 %v1567, %v953
    %1572 = vrot.lane.b32.xlu0 %v1568, 96
    %v1573 = vpop.permute.xlu0 %1572
    %1574 = vrot.lane.b32.xlu0 %v1569, 96
    %v1575 = vpop.permute.xlu0 %1574
    %v1576 = vrot.slane %v1573, 1
    %v1577 = vrot.slane %v1575, 1
    %v1578 = vsel %vm635, %v1573, %v1576
    %v1579 = vsel %vm635, %v1575, %v1577
    %v1582 = vadd.f32 %v1474, %v1578
    %v1583 = vadd.f32 %v1475, %v1579
    %s1584 = sld [smem:[#allocation2 + $0x60]]
    %v1585 = vstv %s1584
    %v1586 = vmul.f32 %v1585, %v951
    %v1587 = vmul.f32 %v1585, %v953
    %1590 = vrot.lane.b32.xlu0 %v1586, 96
    %v1591 = vpop.permute.xlu0 %1590
    %1592 = vrot.lane.b32.xlu0 %v1587, 96
    %v1593 = vpop.permute.xlu0 %1592
    %v1594 = vrot.slane %v1591, 1
    %v1595 = vrot.slane %v1593, 1
    %v1596 = vsel %vm635, %v1591, %v1594
    %v1597 = vsel %vm635, %v1593, %v1595
    %v1600 = vadd.f32 %v1492, %v1596
    %v1601 = vadd.f32 %v1493, %v1597
    %s1602 = sld [smem:[#allocation2 + $0x7b]]
    %v1603 = vstv %s1602
    %v1604 = vmul.f32 %v1603, %v951
    %v1605 = vmul.f32 %v1603, %v953
    %1608 = vrot.lane.b32.xlu0 %v1604, 96
    %v1609 = vpop.permute.xlu0 %1608
    %1610 = vrot.lane.b32.xlu0 %v1605, 96
    %v1611 = vpop.permute.xlu0 %1610
    %v1612 = vrot.slane %v1609, 1
    %v1613 = vrot.slane %v1611, 1
    %v1614 = vsel %vm635, %v1609, %v1612
    %v1615 = vsel %vm635, %v1611, %v1613
    %v1618 = vadd.f32 %v1510, %v1614
    %v1619 = vadd.f32 %v1511, %v1615
    %s1620 = sld [smem:[#allocation2 + $0x96]]
    %v1621 = vstv %s1620
    %v1622 = vmul.f32 %v1621, %v951
    %v1623 = vmul.f32 %v1621, %v953
    %1626 = vrot.lane.b32.xlu0 %v1622, 96
    %v1627 = vpop.permute.xlu0 %1626
    %1628 = vrot.lane.b32.xlu0 %v1623, 96
    %v1629 = vpop.permute.xlu0 %1628
    %v1630 = vrot.slane %v1627, 1
    %v1631 = vrot.slane %v1629, 1
    %v1632 = vsel %vm635, %v1627, %v1630
    %v1633 = vsel %vm635, %v1629, %v1631
    %v1636 = vadd.f32 %v1528, %v1632
    %v1637 = vadd.f32 %v1529, %v1633
    %s1638 = sld [smem:[#allocation2 + $0x10]]
    %v1639 = vstv %s1638
    %v1640 = vmul.f32 %v1639, %v951
    %v1641 = vmul.f32 %v1639, %v953
    %1644 = vrot.lane.b32.xlu0 %v1640, 95
    %v1645 = vpop.permute.xlu0 %1644
    %1646 = vrot.lane.b32.xlu0 %v1641, 95
    %v1647 = vpop.permute.xlu0 %1646
    %v1648 = vrot.slane %v1645, 1
    %v1649 = vrot.slane %v1647, 1
    %v1650 = vsel %vm744, %v1645, %v1648
    %v1651 = vsel %vm744, %v1647, %v1649
    %v1654 = vadd.f32 %v1546, %v1650
    %v1655 = vadd.f32 %v1547, %v1651
    %s1656 = sld [smem:[#allocation2 + $0x2b]]
    %v1657 = vstv %s1656
    %v1658 = vmul.f32 %v1657, %v951
    %v1659 = vmul.f32 %v1657, %v953
    %1662 = vrot.lane.b32.xlu0 %v1658, 95
    %v1663 = vpop.permute.xlu0 %1662
    %1664 = vrot.lane.b32.xlu0 %v1659, 95
    %v1665 = vpop.permute.xlu0 %1664
    %v1666 = vrot.slane %v1663, 1
    %v1667 = vrot.slane %v1665, 1
    %v1668 = vsel %vm744, %v1663, %v1666
    %v1669 = vsel %vm744, %v1665, %v1667
    %v1672 = vadd.f32 %v1564, %v1668
    %v1673 = vadd.f32 %v1565, %v1669
    %s1674 = sld [smem:[#allocation2 + $0x46]]
    %v1675 = vstv %s1674
    %v1676 = vmul.f32 %v1675, %v951
    %v1677 = vmul.f32 %v1675, %v953
    %1680 = vrot.lane.b32.xlu0 %v1676, 95
    %v1681 = vpop.permute.xlu0 %1680
    %1682 = vrot.lane.b32.xlu0 %v1677, 95
    %v1683 = vpop.permute.xlu0 %1682
    %v1684 = vrot.slane %v1681, 1
    %v1685 = vrot.slane %v1683, 1
    %v1686 = vsel %vm744, %v1681, %v1684
    %v1687 = vsel %vm744, %v1683, %v1685
    %v1690 = vadd.f32 %v1582, %v1686
    %v1691 = vadd.f32 %v1583, %v1687
    %s1692 = sld [smem:[#allocation2 + $0x61]]
    %v1693 = vstv %s1692
    %v1694 = vmul.f32 %v1693, %v951
    %v1695 = vmul.f32 %v1693, %v953
    %1698 = vrot.lane.b32.xlu0 %v1694, 95
    %v1699 = vpop.permute.xlu0 %1698
    %1700 = vrot.lane.b32.xlu0 %v1695, 95
    %v1701 = vpop.permute.xlu0 %1700
    %v1702 = vrot.slane %v1699, 1
    %v1703 = vrot.slane %v1701, 1
    %v1704 = vsel %vm744, %v1699, %v1702
    %v1705 = vsel %vm744, %v1701, %v1703
    %v1708 = vadd.f32 %v1600, %v1704
    %v1709 = vadd.f32 %v1601, %v1705
    %s1710 = sld [smem:[#allocation2 + $0x7c]]
    %v1711 = vstv %s1710
    %v1712 = vmul.f32 %v1711, %v951
    %v1713 = vmul.f32 %v1711, %v953
    %1716 = vrot.lane.b32.xlu0 %v1712, 95
    %v1717 = vpop.permute.xlu0 %1716
    %1718 = vrot.lane.b32.xlu0 %v1713, 95
    %v1719 = vpop.permute.xlu0 %1718
    %v1720 = vrot.slane %v1717, 1
    %v1721 = vrot.slane %v1719, 1
    %v1722 = vsel %vm744, %v1717, %v1720
    %v1723 = vsel %vm744, %v1719, %v1721
    %v1726 = vadd.f32 %v1618, %v1722
    %v1727 = vadd.f32 %v1619, %v1723
    %s1728 = sld [smem:[#allocation2 + $0x97]]
    %v1729 = vstv %s1728
    %v1730 = vmul.f32 %v1729, %v951
    %v1731 = vmul.f32 %v1729, %v953
    %1734 = vrot.lane.b32.xlu0 %v1730, 95
    %v1735 = vpop.permute.xlu0 %1734
    %1736 = vrot.lane.b32.xlu0 %v1731, 95
    %v1737 = vpop.permute.xlu0 %1736
    %v1738 = vrot.slane %v1735, 1
    %v1739 = vrot.slane %v1737, 1
    %v1740 = vsel %vm744, %v1735, %v1738
    %v1741 = vsel %vm744, %v1737, %v1739
    %v1744 = vadd.f32 %v1636, %v1740
    %v1745 = vadd.f32 %v1637, %v1741
    %s1746 = sld [smem:[#allocation2 + $0x11]]
    %v1747 = vstv %s1746
    %v1748 = vmul.f32 %v1747, %v951
    %v1749 = vmul.f32 %v1747, %v953
    %1752 = vrot.lane.b32.xlu0 %v1748, 94
    %v1753 = vpop.permute.xlu0 %1752
    %1754 = vrot.lane.b32.xlu0 %v1749, 94
    %v1755 = vpop.permute.xlu0 %1754
    %v1756 = vrot.slane %v1753, 1
    %v1757 = vrot.slane %v1755, 1
    %v1758 = vsel %vm853, %v1753, %v1756
    %v1759 = vsel %vm853, %v1755, %v1757
    %v1762 = vadd.f32 %v1654, %v1758
    %v1763 = vadd.f32 %v1655, %v1759
    %s1764 = sld [smem:[#allocation2 + $0x2c]]
    %v1765 = vstv %s1764
    %v1766 = vmul.f32 %v1765, %v951
    %v1767 = vmul.f32 %v1765, %v953
    %1770 = vrot.lane.b32.xlu0 %v1766, 94
    %v1771 = vpop.permute.xlu0 %1770
    %1772 = vrot.lane.b32.xlu0 %v1767, 94
    %v1773 = vpop.permute.xlu0 %1772
    %v1774 = vrot.slane %v1771, 1
    %v1775 = vrot.slane %v1773, 1
    %v1776 = vsel %vm853, %v1771, %v1774
    %v1777 = vsel %vm853, %v1773, %v1775
    %v1780 = vadd.f32 %v1672, %v1776
    %v1781 = vadd.f32 %v1673, %v1777
    %s1782 = sld [smem:[#allocation2 + $0x47]]
    %v1783 = vstv %s1782
    %v1784 = vmul.f32 %v1783, %v951
    %v1785 = vmul.f32 %v1783, %v953
    %1788 = vrot.lane.b32.xlu0 %v1784, 94
    %v1789 = vpop.permute.xlu0 %1788
    %1790 = vrot.lane.b32.xlu0 %v1785, 94
    %v1791 = vpop.permute.xlu0 %1790
    %v1792 = vrot.slane %v1789, 1
    %v1793 = vrot.slane %v1791, 1
    %v1794 = vsel %vm853, %v1789, %v1792
    %v1795 = vsel %vm853, %v1791, %v1793
    %v1798 = vadd.f32 %v1690, %v1794
    %v1799 = vadd.f32 %v1691, %v1795
    %s1800 = sld [smem:[#allocation2 + $0x62]]
    %v1801 = vstv %s1800
    %v1802 = vmul.f32 %v1801, %v951
    %v1803 = vmul.f32 %v1801, %v953
    %1806 = vrot.lane.b32.xlu0 %v1802, 94
    %v1807 = vpop.permute.xlu0 %1806
    %1808 = vrot.lane.b32.xlu0 %v1803, 94
    %v1809 = vpop.permute.xlu0 %1808
    %v1810 = vrot.slane %v1807, 1
    %v1811 = vrot.slane %v1809, 1
    %v1812 = vsel %vm853, %v1807, %v1810
    %v1813 = vsel %vm853, %v1809, %v1811
    %v1816 = vadd.f32 %v1708, %v1812
    %v1817 = vadd.f32 %v1709, %v1813
    %s1818 = sld [smem:[#allocation2 + $0x7d]]
    %v1819 = vstv %s1818
    %v1820 = vmul.f32 %v1819, %v951
    %v1821 = vmul.f32 %v1819, %v953
    %1824 = vrot.lane.b32.xlu0 %v1820, 94
    %v1825 = vpop.permute.xlu0 %1824
    %1826 = vrot.lane.b32.xlu0 %v1821, 94
    %v1827 = vpop.permute.xlu0 %1826
    %v1828 = vrot.slane %v1825, 1
    %v1829 = vrot.slane %v1827, 1
    %v1830 = vsel %vm853, %v1825, %v1828
    %v1831 = vsel %vm853, %v1827, %v1829
    %v1834 = vadd.f32 %v1726, %v1830
    %v1835 = vadd.f32 %v1727, %v1831
    %s1836 = sld [smem:[#allocation2 + $0x98]]
    %v1837 = vstv %s1836
    %v1838 = vmul.f32 %v1837, %v951
    %v1839 = vmul.f32 %v1837, %v953
    %1842 = vrot.lane.b32.xlu0 %v1838, 94
    %v1843 = vpop.permute.xlu0 %1842
    %1844 = vrot.lane.b32.xlu0 %v1839, 94
    %v1845 = vpop.permute.xlu0 %1844
    %v1846 = vrot.slane %v1843, 1
    %v1847 = vrot.slane %v1845, 1
    %v1848 = vsel %vm853, %v1843, %v1846
    %v1849 = vsel %vm853, %v1845, %v1847
    %v1852 = vadd.f32 %v1744, %v1848
    %v1853 = vadd.f32 %v1745, %v1849
    %s1854 = scalar_lea.vmem %s0, 2
    %v1855 = vld [vmem:[%s1854] ss:$4 sm:$0x7]
    %s1856 = scalar_lea.vmem %s0, 14
    %v1857 = vld [vmem:[%s1856] ss:$4 sm:$0x7]
    %s1858 = sld [smem:[#allocation2 + $0x12]]
    %v1859 = vstv %s1858
    %v1860 = vmul.f32 %v1859, %v1855
    %v1861 = vmul.f32 %v1859, %v1857
    %v1862 = vadd.f32 %v1762, %v1860
    %v1863 = vadd.f32 %v1763, %v1861
    %s1864 = sld [smem:[#allocation2 + $0x2d]]
    %v1865 = vstv %s1864
    %v1866 = vmul.f32 %v1865, %v1855
    %v1867 = vmul.f32 %v1865, %v1857
    %v1868 = vadd.f32 %v1780, %v1866
    %v1869 = vadd.f32 %v1781, %v1867
    %s1870 = sld [smem:[#allocation2 + $0x48]]
    %v1871 = vstv %s1870
    %v1872 = vmul.f32 %v1871, %v1855
    %v1873 = vmul.f32 %v1871, %v1857
    %v1874 = vadd.f32 %v1798, %v1872
    %v1875 = vadd.f32 %v1799, %v1873
    %s1876 = sld [smem:[#allocation2 + $0x63]]
    %v1877 = vstv %s1876
    %v1878 = vmul.f32 %v1877, %v1855
    %v1879 = vmul.f32 %v1877, %v1857
    %v1880 = vadd.f32 %v1816, %v1878
    %v1881 = vadd.f32 %v1817, %v1879
    %s1882 = sld [smem:[#allocation2 + $0x7e]]
    %v1883 = vstv %s1882
    %v1884 = vmul.f32 %v1883, %v1855
    %v1885 = vmul.f32 %v1883, %v1857
    %v1886 = vadd.f32 %v1834, %v1884
    %v1887 = vadd.f32 %v1835, %v1885
    %s1888 = sld [smem:[#allocation2 + $0x99]]
    %v1889 = vstv %s1888
    %v1890 = vmul.f32 %v1889, %v1855
    %v1891 = vmul.f32 %v1889, %v1857
    %v1892 = vadd.f32 %v1852, %v1890
    %v1893 = vadd.f32 %v1853, %v1891
    %s1894 = sld [smem:[#allocation2 + $0x13]]
    %v1895 = vstv %s1894
    %v1896 = vmul.f32 %v1895, %v1855
    %v1897 = vmul.f32 %v1895, %v1857
    %1900 = vrot.lane.b32.xlu0 %v1896, 127
    %v1901 = vpop.permute.xlu0 %1900
    %1902 = vrot.lane.b32.xlu0 %v1897, 127
    %v1903 = vpop.permute.xlu0 %1902
    %v1904 = vrot.slane %v1901, 1
    %v1905 = vrot.slane %v1903, 1
    %v1906 = vsel %vm90, %v1901, %v1904
    %v1907 = vsel %vm90, %v1903, %v1905
    %v1910 = vadd.f32 %v1862, %v1906
    %v1911 = vadd.f32 %v1863, %v1907
    %s1912 = sld [smem:[#allocation2 + $0x2e]]
    %v1913 = vstv %s1912
    %v1914 = vmul.f32 %v1913, %v1855
    %v1915 = vmul.f32 %v1913, %v1857
    %1918 = vrot.lane.b32.xlu0 %v1914, 127
    %v1919 = vpop.permute.xlu0 %1918
    %1920 = vrot.lane.b32.xlu0 %v1915, 127
    %v1921 = vpop.permute.xlu0 %1920
    %v1922 = vrot.slane %v1919, 1
    %v1923 = vrot.slane %v1921, 1
    %v1924 = vsel %vm90, %v1919, %v1922
    %v1925 = vsel %vm90, %v1921, %v1923
    %v1928 = vadd.f32 %v1868, %v1924
    %v1929 = vadd.f32 %v1869, %v1925
    %s1930 = sld [smem:[#allocation2 + $0x49]]
    %v1931 = vstv %s1930
    %v1932 = vmul.f32 %v1931, %v1855
    %v1933 = vmul.f32 %v1931, %v1857
    %1936 = vrot.lane.b32.xlu0 %v1932, 127
    %v1937 = vpop.permute.xlu0 %1936
    %1938 = vrot.lane.b32.xlu0 %v1933, 127
    %v1939 = vpop.permute.xlu0 %1938
    %v1940 = vrot.slane %v1937, 1
    %v1941 = vrot.slane %v1939, 1
    %v1942 = vsel %vm90, %v1937, %v1940
    %v1943 = vsel %vm90, %v1939, %v1941
    %v1946 = vadd.f32 %v1874, %v1942
    %v1947 = vadd.f32 %v1875, %v1943
    %s1948 = sld [smem:[#allocation2 + $0x64]]
    %v1949 = vstv %s1948
    %v1950 = vmul.f32 %v1949, %v1855
    %v1951 = vmul.f32 %v1949, %v1857
    %1954 = vrot.lane.b32.xlu0 %v1950, 127
    %v1955 = vpop.permute.xlu0 %1954
    %1956 = vrot.lane.b32.xlu0 %v1951, 127
    %v1957 = vpop.permute.xlu0 %1956
    %v1958 = vrot.slane %v1955, 1
    %v1959 = vrot.slane %v1957, 1
    %v1960 = vsel %vm90, %v1955, %v1958
    %v1961 = vsel %vm90, %v1957, %v1959
    %v1964 = vadd.f32 %v1880, %v1960
    %v1965 = vadd.f32 %v1881, %v1961
    %s1966 = sld [smem:[#allocation2 + $0x7f]]
    %v1967 = vstv %s1966
    %v1968 = vmul.f32 %v1967, %v1855
    %v1969 = vmul.f32 %v1967, %v1857
    %1972 = vrot.lane.b32.xlu0 %v1968, 127
    %v1973 = vpop.permute.xlu0 %1972
    %1974 = vrot.lane.b32.xlu0 %v1969, 127
    %v1975 = vpop.permute.xlu0 %1974
    %v1976 = vrot.slane %v1973, 1
    %v1977 = vrot.slane %v1975, 1
    %v1978 = vsel %vm90, %v1973, %v1976
    %v1979 = vsel %vm90, %v1975, %v1977
    %v1982 = vadd.f32 %v1886, %v1978
    %v1983 = vadd.f32 %v1887, %v1979
    %s1984 = sld [smem:[#allocation2 + $0x9a]]
    %v1985 = vstv %s1984
    %v1986 = vmul.f32 %v1985, %v1855
    %v1987 = vmul.f32 %v1985, %v1857
    %1990 = vrot.lane.b32.xlu0 %v1986, 127
    %v1991 = vpop.permute.xlu0 %1990
    %1992 = vrot.lane.b32.xlu0 %v1987, 127
    %v1993 = vpop.permute.xlu0 %1992
    %v1994 = vrot.slane %v1991, 1
    %v1995 = vrot.slane %v1993, 1
    %v1996 = vsel %vm90, %v1991, %v1994
    %v1997 = vsel %vm90, %v1993, %v1995
    %v2000 = vadd.f32 %v1892, %v1996
    %v2001 = vadd.f32 %v1893, %v1997
    %s2002 = sld [smem:[#allocation2 + $0x14]]
    %v2003 = vstv %s2002
    %v2004 = vmul.f32 %v2003, %v1855
    %v2005 = vmul.f32 %v2003, %v1857
    %2008 = vrot.lane.b32.xlu0 %v2004, 126
    %v2009 = vpop.permute.xlu0 %2008
    %2010 = vrot.lane.b32.xlu0 %v2005, 126
    %v2011 = vpop.permute.xlu0 %2010
    %v2012 = vrot.slane %v2009, 1
    %v2013 = vrot.slane %v2011, 1
    %v2014 = vsel %vm199, %v2009, %v2012
    %v2015 = vsel %vm199, %v2011, %v2013
    %v2018 = vadd.f32 %v1910, %v2014
    %v2019 = vadd.f32 %v1911, %v2015
    %s2020 = sld [smem:[#allocation2 + $0x2f]]
    %v2021 = vstv %s2020
    %v2022 = vmul.f32 %v2021, %v1855
    %v2023 = vmul.f32 %v2021, %v1857
    %2026 = vrot.lane.b32.xlu0 %v2022, 126
    %v2027 = vpop.permute.xlu0 %2026
    %2028 = vrot.lane.b32.xlu0 %v2023, 126
    %v2029 = vpop.permute.xlu0 %2028
    %v2030 = vrot.slane %v2027, 1
    %v2031 = vrot.slane %v2029, 1
    %v2032 = vsel %vm199, %v2027, %v2030
    %v2033 = vsel %vm199, %v2029, %v2031
    %v2036 = vadd.f32 %v1928, %v2032
    %v2037 = vadd.f32 %v1929, %v2033
    %s2038 = sld [smem:[#allocation2 + $0x4a]]
    %v2039 = vstv %s2038
    %v2040 = vmul.f32 %v2039, %v1855
    %v2041 = vmul.f32 %v2039, %v1857
    %2044 = vrot.lane.b32.xlu0 %v2040, 126
    %v2045 = vpop.permute.xlu0 %2044
    %2046 = vrot.lane.b32.xlu0 %v2041, 126
    %v2047 = vpop.permute.xlu0 %2046
    %v2048 = vrot.slane %v2045, 1
    %v2049 = vrot.slane %v2047, 1
    %v2050 = vsel %vm199, %v2045, %v2048
    %v2051 = vsel %vm199, %v2047, %v2049
    %v2054 = vadd.f32 %v1946, %v2050
    %v2055 = vadd.f32 %v1947, %v2051
    %s2056 = sld [smem:[#allocation2 + $0x65]]
    %v2057 = vstv %s2056
    %v2058 = vmul.f32 %v2057, %v1855
    %v2059 = vmul.f32 %v2057, %v1857
    %2062 = vrot.lane.b32.xlu0 %v2058, 126
    %v2063 = vpop.permute.xlu0 %2062
    %2064 = vrot.lane.b32.xlu0 %v2059, 126
    %v2065 = vpop.permute.xlu0 %2064
    %v2066 = vrot.slane %v2063, 1
    %v2067 = vrot.slane %v2065, 1
    %v2068 = vsel %vm199, %v2063, %v2066
    %v2069 = vsel %vm199, %v2065, %v2067
    %v2072 = vadd.f32 %v1964, %v2068
    %v2073 = vadd.f32 %v1965, %v2069
    %s2074 = sld [smem:[#allocation2 + $0x80]]
    %v2075 = vstv %s2074
    %v2076 = vmul.f32 %v2075, %v1855
    %v2077 = vmul.f32 %v2075, %v1857
    %2080 = vrot.lane.b32.xlu0 %v2076, 126
    %v2081 = vpop.permute.xlu0 %2080
    %2082 = vrot.lane.b32.xlu0 %v2077, 126
    %v2083 = vpop.permute.xlu0 %2082
    %v2084 = vrot.slane %v2081, 1
    %v2085 = vrot.slane %v2083, 1
    %v2086 = vsel %vm199, %v2081, %v2084
    %v2087 = vsel %vm199, %v2083, %v2085
    %v2090 = vadd.f32 %v1982, %v2086
    %v2091 = vadd.f32 %v1983, %v2087
    %s2092 = sld [smem:[#allocation2 + $0x9b]]
    %v2093 = vstv %s2092
    %v2094 = vmul.f32 %v2093, %v1855
    %v2095 = vmul.f32 %v2093, %v1857
    %2098 = vrot.lane.b32.xlu0 %v2094, 126
    %v2099 = vpop.permute.xlu0 %2098
    %2100 = vrot.lane.b32.xlu0 %v2095, 126
    %v2101 = vpop.permute.xlu0 %2100
    %v2102 = vrot.slane %v2099, 1
    %v2103 = vrot.slane %v2101, 1
    %v2104 = vsel %vm199, %v2099, %v2102
    %v2105 = vsel %vm199, %v2101, %v2103
    %v2108 = vadd.f32 %v2000, %v2104
    %v2109 = vadd.f32 %v2001, %v2105
    %s2110 = sld [smem:[#allocation2 + $0x15]]
    %v2111 = vstv %s2110
    %v2112 = vmul.f32 %v2111, %v1855
    %v2113 = vmul.f32 %v2111, %v1857
    %2116 = vrot.lane.b32.xlu0 %v2112, 112
    %v2117 = vpop.permute.xlu0 %2116
    %2118 = vrot.lane.b32.xlu0 %v2113, 112
    %v2119 = vpop.permute.xlu0 %2118
    %v2120 = vrot.slane %v2117, 1
    %v2121 = vrot.slane %v2119, 1
    %v2122 = vsel %vm308, %v2117, %v2120
    %v2123 = vsel %vm308, %v2119, %v2121
    %v2126 = vadd.f32 %v2018, %v2122
    %v2127 = vadd.f32 %v2019, %v2123
    %s2128 = sld [smem:[#allocation2 + $0x30]]
    %v2129 = vstv %s2128
    %v2130 = vmul.f32 %v2129, %v1855
    %v2131 = vmul.f32 %v2129, %v1857
    %2134 = vrot.lane.b32.xlu0 %v2130, 112
    %v2135 = vpop.permute.xlu0 %2134
    %2136 = vrot.lane.b32.xlu0 %v2131, 112
    %v2137 = vpop.permute.xlu0 %2136
    %v2138 = vrot.slane %v2135, 1
    %v2139 = vrot.slane %v2137, 1
    %v2140 = vsel %vm308, %v2135, %v2138
    %v2141 = vsel %vm308, %v2137, %v2139
    %v2144 = vadd.f32 %v2036, %v2140
    %v2145 = vadd.f32 %v2037, %v2141
    %s2146 = sld [smem:[#allocation2 + $0x4b]]
    %v2147 = vstv %s2146
    %v2148 = vmul.f32 %v2147, %v1855
    %v2149 = vmul.f32 %v2147, %v1857
    %2152 = vrot.lane.b32.xlu0 %v2148, 112
    %v2153 = vpop.permute.xlu0 %2152
    %2154 = vrot.lane.b32.xlu0 %v2149, 112
    %v2155 = vpop.permute.xlu0 %2154
    %v2156 = vrot.slane %v2153, 1
    %v2157 = vrot.slane %v2155, 1
    %v2158 = vsel %vm308, %v2153, %v2156
    %v2159 = vsel %vm308, %v2155, %v2157
    %v2162 = vadd.f32 %v2054, %v2158
    %v2163 = vadd.f32 %v2055, %v2159
    %s2164 = sld [smem:[#allocation2 + $0x66]]
    %v2165 = vstv %s2164
    %v2166 = vmul.f32 %v2165, %v1855
    %v2167 = vmul.f32 %v2165, %v1857
    %2170 = vrot.lane.b32.xlu0 %v2166, 112
    %v2171 = vpop.permute.xlu0 %2170
    %2172 = vrot.lane.b32.xlu0 %v2167, 112
    %v2173 = vpop.permute.xlu0 %2172
    %v2174 = vrot.slane %v2171, 1
    %v2175 = vrot.slane %v2173, 1
    %v2176 = vsel %vm308, %v2171, %v2174
    %v2177 = vsel %vm308, %v2173, %v2175
    %v2180 = vadd.f32 %v2072, %v2176
    %v2181 = vadd.f32 %v2073, %v2177
    %s2182 = sld [smem:[#allocation2 + $0x81]]
    %v2183 = vstv %s2182
    %v2184 = vmul.f32 %v2183, %v1855
    %v2185 = vmul.f32 %v2183, %v1857
    %2188 = vrot.lane.b32.xlu0 %v2184, 112
    %v2189 = vpop.permute.xlu0 %2188
    %2190 = vrot.lane.b32.xlu0 %v2185, 112
    %v2191 = vpop.permute.xlu0 %2190
    %v2192 = vrot.slane %v2189, 1
    %v2193 = vrot.slane %v2191, 1
    %v2194 = vsel %vm308, %v2189, %v2192
    %v2195 = vsel %vm308, %v2191, %v2193
    %v2198 = vadd.f32 %v2090, %v2194
    %v2199 = vadd.f32 %v2091, %v2195
    %s2200 = sld [smem:[#allocation2 + $0x9c]]
    %v2201 = vstv %s2200
    %v2202 = vmul.f32 %v2201, %v1855
    %v2203 = vmul.f32 %v2201, %v1857
    %2206 = vrot.lane.b32.xlu0 %v2202, 112
    %v2207 = vpop.permute.xlu0 %2206
    %2208 = vrot.lane.b32.xlu0 %v2203, 112
    %v2209 = vpop.permute.xlu0 %2208
    %v2210 = vrot.slane %v2207, 1
    %v2211 = vrot.slane %v2209, 1
    %v2212 = vsel %vm308, %v2207, %v2210
    %v2213 = vsel %vm308, %v2209, %v2211
    %v2216 = vadd.f32 %v2108, %v2212
    %v2217 = vadd.f32 %v2109, %v2213
    %s2218 = sld [smem:[#allocation2 + $0x16]]
    %v2219 = vstv %s2218
    %v2220 = vmul.f32 %v2219, %v1855
    %v2221 = vmul.f32 %v2219, %v1857
    %2224 = vrot.lane.b32.xlu0 %v2220, 111
    %v2225 = vpop.permute.xlu0 %2224
    %2226 = vrot.lane.b32.xlu0 %v2221, 111
    %v2227 = vpop.permute.xlu0 %2226
    %v2228 = vrot.slane %v2225, 1
    %v2229 = vrot.slane %v2227, 1
    %v2230 = vsel %vm417, %v2225, %v2228
    %v2231 = vsel %vm417, %v2227, %v2229
    %v2234 = vadd.f32 %v2126, %v2230
    %v2235 = vadd.f32 %v2127, %v2231
    %s2236 = sld [smem:[#allocation2 + $0x31]]
    %v2237 = vstv %s2236
    %v2238 = vmul.f32 %v2237, %v1855
    %v2239 = vmul.f32 %v2237, %v1857
    %2242 = vrot.lane.b32.xlu0 %v2238, 111
    %v2243 = vpop.permute.xlu0 %2242
    %2244 = vrot.lane.b32.xlu0 %v2239, 111
    %v2245 = vpop.permute.xlu0 %2244
    %v2246 = vrot.slane %v2243, 1
    %v2247 = vrot.slane %v2245, 1
    %v2248 = vsel %vm417, %v2243, %v2246
    %v2249 = vsel %vm417, %v2245, %v2247
    %v2252 = vadd.f32 %v2144, %v2248
    %v2253 = vadd.f32 %v2145, %v2249
    %s2254 = sld [smem:[#allocation2 + $0x4c]]
    %v2255 = vstv %s2254
    %v2256 = vmul.f32 %v2255, %v1855
    %v2257 = vmul.f32 %v2255, %v1857
    %2260 = vrot.lane.b32.xlu0 %v2256, 111
    %v2261 = vpop.permute.xlu0 %2260
    %2262 = vrot.lane.b32.xlu0 %v2257, 111
    %v2263 = vpop.permute.xlu0 %2262
    %v2264 = vrot.slane %v2261, 1
    %v2265 = vrot.slane %v2263, 1
    %v2266 = vsel %vm417, %v2261, %v2264
    %v2267 = vsel %vm417, %v2263, %v2265
    %v2270 = vadd.f32 %v2162, %v2266
    %v2271 = vadd.f32 %v2163, %v2267
    %s2272 = sld [smem:[#allocation2 + $0x67]]
    %v2273 = vstv %s2272
    %v2274 = vmul.f32 %v2273, %v1855
    %v2275 = vmul.f32 %v2273, %v1857
    %2278 = vrot.lane.b32.xlu0 %v2274, 111
    %v2279 = vpop.permute.xlu0 %2278
    %2280 = vrot.lane.b32.xlu0 %v2275, 111
    %v2281 = vpop.permute.xlu0 %2280
    %v2282 = vrot.slane %v2279, 1
    %v2283 = vrot.slane %v2281, 1
    %v2284 = vsel %vm417, %v2279, %v2282
    %v2285 = vsel %vm417, %v2281, %v2283
    %v2288 = vadd.f32 %v2180, %v2284
    %v2289 = vadd.f32 %v2181, %v2285
    %s2290 = sld [smem:[#allocation2 + $0x82]]
    %v2291 = vstv %s2290
    %v2292 = vmul.f32 %v2291, %v1855
    %v2293 = vmul.f32 %v2291, %v1857
    %2296 = vrot.lane.b32.xlu0 %v2292, 111
    %v2297 = vpop.permute.xlu0 %2296
    %2298 = vrot.lane.b32.xlu0 %v2293, 111
    %v2299 = vpop.permute.xlu0 %2298
    %v2300 = vrot.slane %v2297, 1
    %v2301 = vrot.slane %v2299, 1
    %v2302 = vsel %vm417, %v2297, %v2300
    %v2303 = vsel %vm417, %v2299, %v2301
    %v2306 = vadd.f32 %v2198, %v2302
    %v2307 = vadd.f32 %v2199, %v2303
    %s2308 = sld [smem:[#allocation2 + $0x9d]]
    %v2309 = vstv %s2308
    %v2310 = vmul.f32 %v2309, %v1855
    %v2311 = vmul.f32 %v2309, %v1857
    %2314 = vrot.lane.b32.xlu0 %v2310, 111
    %v2315 = vpop.permute.xlu0 %2314
    %2316 = vrot.lane.b32.xlu0 %v2311, 111
    %v2317 = vpop.permute.xlu0 %2316
    %v2318 = vrot.slane %v2315, 1
    %v2319 = vrot.slane %v2317, 1
    %v2320 = vsel %vm417, %v2315, %v2318
    %v2321 = vsel %vm417, %v2317, %v2319
    %v2324 = vadd.f32 %v2216, %v2320
    %v2325 = vadd.f32 %v2217, %v2321
    %s2326 = sld [smem:[#allocation2 + $0x17]]
    %v2327 = vstv %s2326
    %v2328 = vmul.f32 %v2327, %v1855
    %v2329 = vmul.f32 %v2327, %v1857
    %2332 = vrot.lane.b32.xlu0 %v2328, 110
    %v2333 = vpop.permute.xlu0 %2332
    %2334 = vrot.lane.b32.xlu0 %v2329, 110
    %v2335 = vpop.permute.xlu0 %2334
    %v2336 = vrot.slane %v2333, 1
    %v2337 = vrot.slane %v2335, 1
    %v2338 = vsel %vm526, %v2333, %v2336
    %v2339 = vsel %vm526, %v2335, %v2337
    %v2342 = vadd.f32 %v2234, %v2338
    %v2343 = vadd.f32 %v2235, %v2339
    %s2344 = sld [smem:[#allocation2 + $0x32]]
    %v2345 = vstv %s2344
    %v2346 = vmul.f32 %v2345, %v1855
    %v2347 = vmul.f32 %v2345, %v1857
    %2350 = vrot.lane.b32.xlu0 %v2346, 110
    %v2351 = vpop.permute.xlu0 %2350
    %2352 = vrot.lane.b32.xlu0 %v2347, 110
    %v2353 = vpop.permute.xlu0 %2352
    %v2354 = vrot.slane %v2351, 1
    %v2355 = vrot.slane %v2353, 1
    %v2356 = vsel %vm526, %v2351, %v2354
    %v2357 = vsel %vm526, %v2353, %v2355
    %v2360 = vadd.f32 %v2252, %v2356
    %v2361 = vadd.f32 %v2253, %v2357
    %s2362 = sld [smem:[#allocation2 + $0x4d]]
    %v2363 = vstv %s2362
    %v2364 = vmul.f32 %v2363, %v1855
    %v2365 = vmul.f32 %v2363, %v1857
    %2368 = vrot.lane.b32.xlu0 %v2364, 110
    %v2369 = vpop.permute.xlu0 %2368
    %2370 = vrot.lane.b32.xlu0 %v2365, 110
    %v2371 = vpop.permute.xlu0 %2370
    %v2372 = vrot.slane %v2369, 1
    %v2373 = vrot.slane %v2371, 1
    %v2374 = vsel %vm526, %v2369, %v2372
    %v2375 = vsel %vm526, %v2371, %v2373
    %v2378 = vadd.f32 %v2270, %v2374
    %v2379 = vadd.f32 %v2271, %v2375
    %s2380 = sld [smem:[#allocation2 + $0x68]]
    %v2381 = vstv %s2380
    %v2382 = vmul.f32 %v2381, %v1855
    %v2383 = vmul.f32 %v2381, %v1857
    %2386 = vrot.lane.b32.xlu0 %v2382, 110
    %v2387 = vpop.permute.xlu0 %2386
    %2388 = vrot.lane.b32.xlu0 %v2383, 110
    %v2389 = vpop.permute.xlu0 %2388
    %v2390 = vrot.slane %v2387, 1
    %v2391 = vrot.slane %v2389, 1
    %v2392 = vsel %vm526, %v2387, %v2390
    %v2393 = vsel %vm526, %v2389, %v2391
    %v2396 = vadd.f32 %v2288, %v2392
    %v2397 = vadd.f32 %v2289, %v2393
    %s2398 = sld [smem:[#allocation2 + $0x83]]
    %v2399 = vstv %s2398
    %v2400 = vmul.f32 %v2399, %v1855
    %v2401 = vmul.f32 %v2399, %v1857
    %2404 = vrot.lane.b32.xlu0 %v2400, 110
    %v2405 = vpop.permute.xlu0 %2404
    %2406 = vrot.lane.b32.xlu0 %v2401, 110
    %v2407 = vpop.permute.xlu0 %2406
    %v2408 = vrot.slane %v2405, 1
    %v2409 = vrot.slane %v2407, 1
    %v2410 = vsel %vm526, %v2405, %v2408
    %v2411 = vsel %vm526, %v2407, %v2409
    %v2414 = vadd.f32 %v2306, %v2410
    %v2415 = vadd.f32 %v2307, %v2411
    %s2416 = sld [smem:[#allocation2 + $0x9e]]
    %v2417 = vstv %s2416
    %v2418 = vmul.f32 %v2417, %v1855
    %v2419 = vmul.f32 %v2417, %v1857
    %2422 = vrot.lane.b32.xlu0 %v2418, 110
    %v2423 = vpop.permute.xlu0 %2422
    %2424 = vrot.lane.b32.xlu0 %v2419, 110
    %v2425 = vpop.permute.xlu0 %2424
    %v2426 = vrot.slane %v2423, 1
    %v2427 = vrot.slane %v2425, 1
    %v2428 = vsel %vm526, %v2423, %v2426
    %v2429 = vsel %vm526, %v2425, %v2427
    %v2432 = vadd.f32 %v2324, %v2428
    %v2433 = vadd.f32 %v2325, %v2429
    %s2434 = sld [smem:[#allocation2 + $0x18]]
    %v2435 = vstv %s2434
    %v2436 = vmul.f32 %v2435, %v1855
    %v2437 = vmul.f32 %v2435, %v1857
    %2440 = vrot.lane.b32.xlu0 %v2436, 96
    %v2441 = vpop.permute.xlu0 %2440
    %2442 = vrot.lane.b32.xlu0 %v2437, 96
    %v2443 = vpop.permute.xlu0 %2442
    %v2444 = vrot.slane %v2441, 1
    %v2445 = vrot.slane %v2443, 1
    %v2446 = vsel %vm635, %v2441, %v2444
    %v2447 = vsel %vm635, %v2443, %v2445
    %v2450 = vadd.f32 %v2342, %v2446
    %v2451 = vadd.f32 %v2343, %v2447
    %s2452 = sld [smem:[#allocation2 + $0x33]]
    %v2453 = vstv %s2452
    %v2454 = vmul.f32 %v2453, %v1855
    %v2455 = vmul.f32 %v2453, %v1857
    %2458 = vrot.lane.b32.xlu0 %v2454, 96
    %v2459 = vpop.permute.xlu0 %2458
    %2460 = vrot.lane.b32.xlu0 %v2455, 96
    %v2461 = vpop.permute.xlu0 %2460
    %v2462 = vrot.slane %v2459, 1
    %v2463 = vrot.slane %v2461, 1
    %v2464 = vsel %vm635, %v2459, %v2462
    %v2465 = vsel %vm635, %v2461, %v2463
    %v2468 = vadd.f32 %v2360, %v2464
    %v2469 = vadd.f32 %v2361, %v2465
    %s2470 = sld [smem:[#allocation2 + $0x4e]]
    %v2471 = vstv %s2470
    %v2472 = vmul.f32 %v2471, %v1855
    %v2473 = vmul.f32 %v2471, %v1857
    %2476 = vrot.lane.b32.xlu0 %v2472, 96
    %v2477 = vpop.permute.xlu0 %2476
    %2478 = vrot.lane.b32.xlu0 %v2473, 96
    %v2479 = vpop.permute.xlu0 %2478
    %v2480 = vrot.slane %v2477, 1
    %v2481 = vrot.slane %v2479, 1
    %v2482 = vsel %vm635, %v2477, %v2480
    %v2483 = vsel %vm635, %v2479, %v2481
    %v2486 = vadd.f32 %v2378, %v2482
    %v2487 = vadd.f32 %v2379, %v2483
    %s2488 = sld [smem:[#allocation2 + $0x69]]
    %v2489 = vstv %s2488
    %v2490 = vmul.f32 %v2489, %v1855
    %v2491 = vmul.f32 %v2489, %v1857
    %2494 = vrot.lane.b32.xlu0 %v2490, 96
    %v2495 = vpop.permute.xlu0 %2494
    %2496 = vrot.lane.b32.xlu0 %v2491, 96
    %v2497 = vpop.permute.xlu0 %2496
    %v2498 = vrot.slane %v2495, 1
    %v2499 = vrot.slane %v2497, 1
    %v2500 = vsel %vm635, %v2495, %v2498
    %v2501 = vsel %vm635, %v2497, %v2499
    %v2504 = vadd.f32 %v2396, %v2500
    %v2505 = vadd.f32 %v2397, %v2501
    %s2506 = sld [smem:[#allocation2 + $0x84]]
    %v2507 = vstv %s2506
    %v2508 = vmul.f32 %v2507, %v1855
    %v2509 = vmul.f32 %v2507, %v1857
    %2512 = vrot.lane.b32.xlu0 %v2508, 96
    %v2513 = vpop.permute.xlu0 %2512
    %2514 = vrot.lane.b32.xlu0 %v2509, 96
    %v2515 = vpop.permute.xlu0 %2514
    %v2516 = vrot.slane %v2513, 1
    %v2517 = vrot.slane %v2515, 1
    %v2518 = vsel %vm635, %v2513, %v2516
    %v2519 = vsel %vm635, %v2515, %v2517
    %v2522 = vadd.f32 %v2414, %v2518
    %v2523 = vadd.f32 %v2415, %v2519
    %s2524 = sld [smem:[#allocation2 + $0x9f]]
    %v2525 = vstv %s2524
    %v2526 = vmul.f32 %v2525, %v1855
    %v2527 = vmul.f32 %v2525, %v1857
    %2530 = vrot.lane.b32.xlu0 %v2526, 96
    %v2531 = vpop.permute.xlu0 %2530
    %2532 = vrot.lane.b32.xlu0 %v2527, 96
    %v2533 = vpop.permute.xlu0 %2532
    %v2534 = vrot.slane %v2531, 1
    %v2535 = vrot.slane %v2533, 1
    %v2536 = vsel %vm635, %v2531, %v2534
    %v2537 = vsel %vm635, %v2533, %v2535
    %v2540 = vadd.f32 %v2432, %v2536
    %v2541 = vadd.f32 %v2433, %v2537
    %s2542 = sld [smem:[#allocation2 + $0x19]]
    %v2543 = vstv %s2542
    %v2544 = vmul.f32 %v2543, %v1855
    %v2545 = vmul.f32 %v2543, %v1857
    %2548 = vrot.lane.b32.xlu0 %v2544, 95
    %v2549 = vpop.permute.xlu0 %2548
    %2550 = vrot.lane.b32.xlu0 %v2545, 95
    %v2551 = vpop.permute.xlu0 %2550
    %v2552 = vrot.slane %v2549, 1
    %v2553 = vrot.slane %v2551, 1
    %v2554 = vsel %vm744, %v2549, %v2552
    %v2555 = vsel %vm744, %v2551, %v2553
    %v2558 = vadd.f32 %v2450, %v2554
    %v2559 = vadd.f32 %v2451, %v2555
    %s2560 = sld [smem:[#allocation2 + $0x34]]
    %v2561 = vstv %s2560
    %v2562 = vmul.f32 %v2561, %v1855
    %v2563 = vmul.f32 %v2561, %v1857
    %2566 = vrot.lane.b32.xlu0 %v2562, 95
    %v2567 = vpop.permute.xlu0 %2566
    %2568 = vrot.lane.b32.xlu0 %v2563, 95
    %v2569 = vpop.permute.xlu0 %2568
    %v2570 = vrot.slane %v2567, 1
    %v2571 = vrot.slane %v2569, 1
    %v2572 = vsel %vm744, %v2567, %v2570
    %v2573 = vsel %vm744, %v2569, %v2571
    %v2576 = vadd.f32 %v2468, %v2572
    %v2577 = vadd.f32 %v2469, %v2573
    %s2578 = sld [smem:[#allocation2 + $0x4f]]
    %v2579 = vstv %s2578
    %v2580 = vmul.f32 %v2579, %v1855
    %v2581 = vmul.f32 %v2579, %v1857
    %2584 = vrot.lane.b32.xlu0 %v2580, 95
    %v2585 = vpop.permute.xlu0 %2584
    %2586 = vrot.lane.b32.xlu0 %v2581, 95
    %v2587 = vpop.permute.xlu0 %2586
    %v2588 = vrot.slane %v2585, 1
    %v2589 = vrot.slane %v2587, 1
    %v2590 = vsel %vm744, %v2585, %v2588
    %v2591 = vsel %vm744, %v2587, %v2589
    %v2594 = vadd.f32 %v2486, %v2590
    %v2595 = vadd.f32 %v2487, %v2591
    %s2596 = sld [smem:[#allocation2 + $0x6a]]
    %v2597 = vstv %s2596
    %v2598 = vmul.f32 %v2597, %v1855
    %v2599 = vmul.f32 %v2597, %v1857
    %2602 = vrot.lane.b32.xlu0 %v2598, 95
    %v2603 = vpop.permute.xlu0 %2602
    %2604 = vrot.lane.b32.xlu0 %v2599, 95
    %v2605 = vpop.permute.xlu0 %2604
    %v2606 = vrot.slane %v2603, 1
    %v2607 = vrot.slane %v2605, 1
    %v2608 = vsel %vm744, %v2603, %v2606
    %v2609 = vsel %vm744, %v2605, %v2607
    %v2612 = vadd.f32 %v2504, %v2608
    %v2613 = vadd.f32 %v2505, %v2609
    %s2614 = sld [smem:[#allocation2 + $0x85]]
    %v2615 = vstv %s2614
    %v2616 = vmul.f32 %v2615, %v1855
    %v2617 = vmul.f32 %v2615, %v1857
    %2620 = vrot.lane.b32.xlu0 %v2616, 95
    %v2621 = vpop.permute.xlu0 %2620
    %2622 = vrot.lane.b32.xlu0 %v2617, 95
    %v2623 = vpop.permute.xlu0 %2622
    %v2624 = vrot.slane %v2621, 1
    %v2625 = vrot.slane %v2623, 1
    %v2626 = vsel %vm744, %v2621, %v2624
    %v2627 = vsel %vm744, %v2623, %v2625
    %v2630 = vadd.f32 %v2522, %v2626
    %v2631 = vadd.f32 %v2523, %v2627
    %s2632 = sld [smem:[#allocation2 + $0xa0]]
    %v2633 = vstv %s2632
    %v2634 = vmul.f32 %v2633, %v1855
    %v2635 = vmul.f32 %v2633, %v1857
    %2638 = vrot.lane.b32.xlu0 %v2634, 95
    %v2639 = vpop.permute.xlu0 %2638
    %2640 = vrot.lane.b32.xlu0 %v2635, 95
    %v2641 = vpop.permute.xlu0 %2640
    %v2642 = vrot.slane %v2639, 1
    %v2643 = vrot.slane %v2641, 1
    %v2644 = vsel %vm744, %v2639, %v2642
    %v2645 = vsel %vm744, %v2641, %v2643
    %v2648 = vadd.f32 %v2540, %v2644
    %v2649 = vadd.f32 %v2541, %v2645
    %s2650 = sld [smem:[#allocation2 + $0x1a]]
    %v2651 = vstv %s2650
    %v2652 = vmul.f32 %v2651, %v1855
    %v2653 = vmul.f32 %v2651, %v1857
    %2656 = vrot.lane.b32.xlu0 %v2652, 94
    %v2657 = vpop.permute.xlu0 %2656
    %2658 = vrot.lane.b32.xlu0 %v2653, 94
    %v2659 = vpop.permute.xlu0 %2658
    %v2660 = vrot.slane %v2657, 1
    %v2661 = vrot.slane %v2659, 1
    %v2662 = vsel %vm853, %v2657, %v2660
    %v2663 = vsel %vm853, %v2659, %v2661
    %v2666 = vadd.f32 %v2558, %v2662
    %v2667 = vadd.f32 %v2559, %v2663
    %s2668 = sld [smem:[#allocation2 + $0x35]]
    %v2669 = vstv %s2668
    %v2670 = vmul.f32 %v2669, %v1855
    %v2671 = vmul.f32 %v2669, %v1857
    %2674 = vrot.lane.b32.xlu0 %v2670, 94
    %v2675 = vpop.permute.xlu0 %2674
    %2676 = vrot.lane.b32.xlu0 %v2671, 94
    %v2677 = vpop.permute.xlu0 %2676
    %v2678 = vrot.slane %v2675, 1
    %v2679 = vrot.slane %v2677, 1
    %v2680 = vsel %vm853, %v2675, %v2678
    %v2681 = vsel %vm853, %v2677, %v2679
    %v2684 = vadd.f32 %v2576, %v2680
    %v2685 = vadd.f32 %v2577, %v2681
    %s2686 = sld [smem:[#allocation2 + $0x50]]
    %v2687 = vstv %s2686
    %v2688 = vmul.f32 %v2687, %v1855
    %v2689 = vmul.f32 %v2687, %v1857
    %2692 = vrot.lane.b32.xlu0 %v2688, 94
    %v2693 = vpop.permute.xlu0 %2692
    %2694 = vrot.lane.b32.xlu0 %v2689, 94
    %v2695 = vpop.permute.xlu0 %2694
    %v2696 = vrot.slane %v2693, 1
    %v2697 = vrot.slane %v2695, 1
    %v2698 = vsel %vm853, %v2693, %v2696
    %v2699 = vsel %vm853, %v2695, %v2697
    %v2702 = vadd.f32 %v2594, %v2698
    %v2703 = vadd.f32 %v2595, %v2699
    %s2704 = sld [smem:[#allocation2 + $0x6b]]
    %v2705 = vstv %s2704
    %v2706 = vmul.f32 %v2705, %v1855
    %v2707 = vmul.f32 %v2705, %v1857
    %2710 = vrot.lane.b32.xlu0 %v2706, 94
    %v2711 = vpop.permute.xlu0 %2710
    %2712 = vrot.lane.b32.xlu0 %v2707, 94
    %v2713 = vpop.permute.xlu0 %2712
    %v2714 = vrot.slane %v2711, 1
    %v2715 = vrot.slane %v2713, 1
    %v2716 = vsel %vm853, %v2711, %v2714
    %v2717 = vsel %vm853, %v2713, %v2715
    %v2720 = vadd.f32 %v2612, %v2716
    %v2721 = vadd.f32 %v2613, %v2717
    %s2722 = sld [smem:[#allocation2 + $0x86]]
    %v2723 = vstv %s2722
    %v2724 = vmul.f32 %v2723, %v1855
    %v2725 = vmul.f32 %v2723, %v1857
    %2728 = vrot.lane.b32.xlu0 %v2724, 94
    %v2729 = vpop.permute.xlu0 %2728
    %2730 = vrot.lane.b32.xlu0 %v2725, 94
    %v2731 = vpop.permute.xlu0 %2730
    %v2732 = vrot.slane %v2729, 1
    %v2733 = vrot.slane %v2731, 1
    %v2734 = vsel %vm853, %v2729, %v2732
    %v2735 = vsel %vm853, %v2731, %v2733
    %v2738 = vadd.f32 %v2630, %v2734
    %v2739 = vadd.f32 %v2631, %v2735
    %s2740 = sld [smem:[#allocation2 + $0xa1]]
    %v2741 = vstv %s2740
    %v2742 = vmul.f32 %v2741, %v1855
    %v2743 = vmul.f32 %v2741, %v1857
    %2746 = vrot.lane.b32.xlu0 %v2742, 94
    %v2747 = vpop.permute.xlu0 %2746
    %2748 = vrot.lane.b32.xlu0 %v2743, 94
    %v2749 = vpop.permute.xlu0 %2748
    %v2750 = vrot.slane %v2747, 1
    %v2751 = vrot.slane %v2749, 1
    %v2752 = vsel %vm853, %v2747, %v2750
    %v2753 = vsel %vm853, %v2749, %v2751
    %v2756 = vadd.f32 %v2648, %v2752
    %v2757 = vadd.f32 %v2649, %v2753
    %s2758 = sld [smem:[#allocation4]]
    %v2759 = vstv %s2758
    %v2760 = vadd.f32 %v2666, %v2759
    %v2761 = vadd.f32 %v2667, %v2759
    %v2762 = vlaneseq
    %vm2763 = vcmp.ge.s32.totalorder %v2762, 0
    %vm2764 = vcmp.lt.s32.totalorder %v2762, 256
    %vm2765 = vmand %vm2763, %vm2764
    %2766 = vst.msk [vmem:[%s3] ss:$8 sm:$0x3] %vm2765, %v2760
    %2767 = vst.msk [vmem:[%s3] ss:$8 sm:$0x0] %vm2765, %v2760
    %s2768 = scalar_lea.vmem %s3, 16
    %2769 = vst.msk [vmem:[%s2768] ss:$8 sm:$0x3] %vm2765, %v2761
    %2770 = vst.msk [vmem:[%s2768] ss:$8 sm:$0x0] %vm2765, %v2761
    %s2771 = sld [smem:[#allocation4 + $0x1]]
    %v2772 = vstv %s2771
    %v2773 = vadd.f32 %v2684, %v2772
    %v2774 = vadd.f32 %v2685, %v2772
    %s2775 = scalar_lea.vmem %s3, 1
    %2776 = vst.msk [vmem:[%s2775] ss:$8 sm:$0x3] %vm2765, %v2773
    %2777 = vst.msk [vmem:[%s2775] ss:$8 sm:$0x0] %vm2765, %v2773
    %s2778 = scalar_lea.vmem %s3, 17
    %2779 = vst.msk [vmem:[%s2778] ss:$8 sm:$0x3] %vm2765, %v2774
    %2780 = vst.msk [vmem:[%s2778] ss:$8 sm:$0x0] %vm2765, %v2774
    %s2781 = sld [smem:[#allocation4 + $0x2]]
    %v2782 = vstv %s2781
    %v2783 = vadd.f32 %v2702, %v2782
    %v2784 = vadd.f32 %v2703, %v2782
    %s2785 = scalar_lea.vmem %s3, 2
    %2786 = vst.msk [vmem:[%s2785] ss:$8 sm:$0x3] %vm2765, %v2783
    %2787 = vst.msk [vmem:[%s2785] ss:$8 sm:$0x0] %vm2765, %v2783
    %s2788 = scalar_lea.vmem %s3, 18
    %2789 = vst.msk [vmem:[%s2788] ss:$8 sm:$0x3] %vm2765, %v2784
    %2790 = vst.msk [vmem:[%s2788] ss:$8 sm:$0x0] %vm2765, %v2784
    %s2791 = sld [smem:[#allocation4 + $0x3]]
    %v2792 = vstv %s2791
    %v2793 = vadd.f32 %v2720, %v2792
    %v2794 = vadd.f32 %v2721, %v2792
    %s2795 = scalar_lea.vmem %s3, 3
    %2796 = vst.msk [vmem:[%s2795] ss:$8 sm:$0x3] %vm2765, %v2793
    %2797 = vst.msk [vmem:[%s2795] ss:$8 sm:$0x0] %vm2765, %v2793
    %s2798 = scalar_lea.vmem %s3, 19
    %2799 = vst.msk [vmem:[%s2798] ss:$8 sm:$0x3] %vm2765, %v2794
    %2800 = vst.msk [vmem:[%s2798] ss:$8 sm:$0x0] %vm2765, %v2794
    %s2801 = sld [smem:[#allocation4 + $0x4]]
    %v2802 = vstv %s2801
    %v2803 = vadd.f32 %v2738, %v2802
    %v2804 = vadd.f32 %v2739, %v2802
    %s2805 = scalar_lea.vmem %s3, 4
    %2806 = vst.msk [vmem:[%s2805] ss:$8 sm:$0x3] %vm2765, %v2803
    %2807 = vst.msk [vmem:[%s2805] ss:$8 sm:$0x0] %vm2765, %v2803
    %s2808 = scalar_lea.vmem %s3, 20
    %2809 = vst.msk [vmem:[%s2808] ss:$8 sm:$0x3] %vm2765, %v2804
    %2810 = vst.msk [vmem:[%s2808] ss:$8 sm:$0x0] %vm2765, %v2804
    %s2811 = sld [smem:[#allocation4 + $0x5]]
    %v2812 = vstv %s2811
    %v2813 = vadd.f32 %v2756, %v2812
    %v2814 = vadd.f32 %v2757, %v2812
    %s2815 = scalar_lea.vmem %s3, 5
    %2816 = vst.msk [vmem:[%s2815] ss:$8 sm:$0x3] %vm2765, %v2813
    %2817 = vst.msk [vmem:[%s2815] ss:$8 sm:$0x0] %vm2765, %v2813
    %s2818 = scalar_lea.vmem %s3, 21
    %2819 = vst.msk [vmem:[%s2818] ss:$8 sm:$0x3] %vm2765, %v2814
    %2820 = vst.msk [vmem:[%s2818] ss:$8 sm:$0x0] %vm2765, %v2814
    // Predicated region
    $region22: #{conv2d_pallas.1} parent=1 // pred_check
      _
    $region23: #{conv2d_pallas.1} parent=1 // pred_check_branch
      %2822 = sbr.rel (0) target = $region25
    $region24: #{conv2d_pallas.1} parent=1 // pred_region
      _
    $region25: #{conv2d_pallas.1} parent=1 // pred_fallthru
      _
    // Predicated region
    $region26: #{conv2d_pallas.1} parent=1 // pred_check
      _
    $region27: #{conv2d_pallas.1} parent=1 // pred_check_branch
      %2824 = sbr.rel (0) target = $region29
    $region28: #{conv2d_pallas.1} parent=1 // pred_region
      _
    $region29: #{conv2d_pallas.1} parent=1 // pred_fallthru
      _
    %2825 = vsyncpa [#allocation3], 1
    %2826 = vsyncpa [#allocation5], 1

</llo_original>
